<compile_context>
chip_gen: v5e
topology: v5e:2x2
jax: 0.10.0
libtpu: 0.0.40
codegen_flags: <defaults>
</compile_context>

<pallas_src>
import functools

import jax
import jax.numpy as jnp
from jax.experimental import pallas as pl
from jax.experimental.pallas import tpu as pltpu


# ----------------------------------------------------------------------------
# Fused Pallas kernel
# ----------------------------------------------------------------------------

def _vmem_spec():
    return pl.BlockSpec(memory_space=pltpu.MemorySpace.VMEM)


def fused_kernel(*refs, num_layers, T, N, P, H):
    """Fused masked-proj + multi-layer bidirectional GRU + head + loss-sum.

    Inputs (all VMEM, time-major):
      patches (T*N, P), mask (T*N, 1) [1.0 = masked],
      proj_wT (P, H), proj_b (1, H),
      per layer: wih_{r,z,n} (Din, 2H), whh_{r,z,n} (2H, 2H block-diag),
                 bih_{r,z,n} (1, 2H),  bhh_{r,z,n} (1, 2H),
      head_wT (2H, P), head_b (1, P).
    Output: (1, 1) sum of (recons - patches)^2 * mask.
    Scratch: gi_r, gi_z, gi_n, buf_a, buf_b  -- each (T*N, 2H) f32.
    """
    n_in = 4 + 12 * num_layers + 2
    patches_ref, mask_ref, proj_wT_ref, proj_b_ref = refs[:4]
    layer_refs = [refs[4 + 12 * l: 4 + 12 * (l + 1)] for l in range(num_layers)]
    head_wT_ref = refs[n_in - 2]
    head_b_ref = refs[n_in - 1]
    out_ref = refs[n_in]
    gi_r_ref, gi_z_ref, gi_n_ref, buf_a_ref, buf_b_ref = refs[n_in + 1:]

    f32 = jnp.float32
    H2 = 2 * H

    patches = patches_ref[...]                 # (T*N, P)
    mask = mask_ref[...]                       # (T*N, 1), 1.0 = masked
    keep = 1.0 - mask

    # --- masked projection: Linear(P -> H) on zero-filled masked patches ----
    x = jnp.dot(patches * keep, proj_wT_ref[...],
                preferred_element_type=f32) + proj_b_ref[...]      # (T*N, H)

    # Lane mask: lanes [0, H) carry the forward direction, [H, 2H) backward.
    lane_fwd_step = jax.lax.broadcasted_iota(jnp.int32, (N, H2), 1) < H

    for layer in range(num_layers):
        (wih_r, wih_z, wih_n, whh_r, whh_z, whh_n,
         bih_r, bih_z, bih_n, bhh_r, bhh_z, bhh_n) = layer_refs[layer]

        # Hoisted input-gate matmuls: one batched matmul per gate covering all
        # timesteps and both directions.  Lane-aligned per-gate buffers.
        gi_r_ref[...] = jnp.dot(x, wih_r[...], preferred_element_type=f32) + bih_r[...]
        gi_z_ref[...] = jnp.dot(x, wih_z[...], preferred_element_type=f32) + bih_z[...]
        gi_n_ref[...] = jnp.dot(x, wih_n[...], preferred_element_type=f32) + bih_n[...]

        # Lane-stacked hidden state [h_fwd | h_bwd], carried in registers.
        h = jnp.zeros((N, H2), f32)

        # Fully unrolled recurrence (T is small & static).  Step i advances the
        # forward direction at time i and the backward direction at time T-1-i;
        # block-diagonal whh keeps the two lane halves independent.
        for i in range(T):
            rf = i * N                 # row block for forward time i
            rb = (T - 1 - i) * N       # row block for backward time T-1-i

            def gate_in(g_ref, rf=rf, rb=rb):
                return jnp.where(lane_fwd_step,
                                 g_ref[rf:rf + N, :], g_ref[rb:rb + N, :])

            gir = gate_in(gi_r_ref)
            giz = gate_in(gi_z_ref)
            gin = gate_in(gi_n_ref)

            ghr = jnp.dot(h, whh_r[...], preferred_element_type=f32) + bhh_r[...]
            ghz = jnp.dot(h, whh_z[...], preferred_element_type=f32) + bhh_z[...]
            ghn = jnp.dot(h, whh_n[...], preferred_element_type=f32) + bhh_n[...]

            r = jax.nn.sigmoid(gir + ghr)
            z = jax.nn.sigmoid(giz + ghz)
            n = jnp.tanh(gin + r * ghn)
            h = (1.0 - z) * n + z * h                      # PyTorch GRU update

            buf_a_ref[rf:rf + N, :] = h    # fwd(t=i)     valid in lanes [0, H)
            buf_b_ref[rb:rb + N, :] = h    # bwd(t=T-1-i) valid in lanes [H,2H)

        # Re-assemble PyTorch bidirectional output [fwd(t) | bwd(t)] per time t.
        lane_fwd_full = jax.lax.broadcasted_iota(jnp.int32, (T * N, H2), 1) < H
        x = jnp.where(lane_fwd_full, buf_a_ref[...], buf_b_ref[...])  # (T*N, 2H)

    # --- head Linear(2H -> P) + masked squared-error reduction (sum) --------
    recons = jnp.dot(x, head_wT_ref[...],
                     preferred_element_type=f32) + head_b_ref[...]    # (T*N, P)
    diff = recons - patches
    out_ref[...] = jnp.sum(diff * diff * mask, keepdims=True)


# ----------------------------------------------------------------------------
# Parameter init (deterministic, PyTorch-compatible shapes, fused layout)
# ----------------------------------------------------------------------------

def init_params(key, patch_size, expansion_ratio, num_layers):
    hidden = expansion_ratio * patch_size
    keys = iter(jax.random.split(key, 4 + num_layers * 24))

    def uni(shape, fan_in):
        bound = 1.0 / jnp.sqrt(jnp.float32(fan_in))
        return jax.random.uniform(next(keys), shape, jnp.float32, -bound, bound)

    def block_diag(a, b):
        h = a.shape[0]
        z = jnp.zeros((h, h), jnp.float32)
        return jnp.concatenate(
            [jnp.concatenate([a, z], axis=1),
             jnp.concatenate([z, b], axis=1)], axis=0)

    params = {
        # proj: Linear(P -> H), stored transposed (P, H)
        "proj_wT": uni((patch_size, hidden), patch_size),
        "proj_b": uni((1, hidden), patch_size),
        # head: Linear(2H -> P), stored transposed (2H, P)
        "head_wT": uni((2 * hidden, patch_size), 2 * hidden),
        "head_b": uni((1, patch_size), 2 * hidden),
        "gru": [],
    }

    for layer in range(num_layers):
        d_in = hidden if layer == 0 else 2 * hidden
        dirs = []
        for _ in range(2):  # forward, backward
            dirs.append({
                "wih": [uni((d_in, hidden), hidden) for _ in range(3)],   # r,z,n
                "whh": [uni((hidden, hidden), hidden) for _ in range(3)],
                "bih": [uni((1, hidden), hidden) for _ in range(3)],
                "bhh": [uni((1, hidden), hidden) for _ in range(3)],
            })
        fwd, bwd = dirs
        lp = {}
        for gi, g in enumerate(("r", "z", "n")):
            lp[f"wih_{g}"] = jnp.concatenate([fwd["wih"][gi], bwd["wih"][gi]], axis=1)
            lp[f"whh_{g}"] = block_diag(fwd["whh"][gi], bwd["whh"][gi])
            lp[f"bih_{g}"] = jnp.concatenate([fwd["bih"][gi], bwd["bih"][gi]], axis=1)
            lp[f"bhh_{g}"] = jnp.concatenate([fwd["bhh"][gi], bwd["bhh"][gi]], axis=1)
        params["gru"].append(lp)
    return params


# ----------------------------------------------------------------------------
# Forward pass (matches PatchDetectorGru.forward, eval mode)
# ----------------------------------------------------------------------------

def patch_detector_gru_forward(x, params, key, *, patch_size):
    b, s, c = x.shape
    p = patch_size
    t = s // p
    n = b * c
    hidden = params["proj_wT"].shape[1]
    num_layers = len(params["gru"])

    # Patchify: (B, S, C) -> (B, C, S) -> (N, T, P)  [unfold, step == size]
    patches_ntp = jnp.transpose(x, (0, 2, 1)).reshape(n, t, p)

    # Random 50% patch masking (matches the PyTorch argsort/gather trick).
    noise = jax.random.uniform(key, (n, t), jnp.float32)
    len_keep = int(t * 0.5)
    base = jnp.ones((n, t), jnp.float32).at[:, :len_keep].set(0.0)
    ids_shuffle = jnp.argsort(noise, axis=-1)
    ids_restore = jnp.argsort(ids_shuffle, axis=-1)
    mask_nt = jnp.take_along_axis(base, ids_restore, axis=-1)   # 1.0 = masked

    # Time-major flatten for the fused kernel (row = t*N + n).
    patches_tm = jnp.transpose(patches_ntp, (1, 0, 2)).reshape(t * n, p)
    patches_tm = patches_tm.astype(jnp.float32)
    mask_tm = jnp.transpose(mask_nt, (1, 0)).reshape(t * n, 1)

    flat_inputs = [patches_tm, mask_tm, params["proj_wT"], params["proj_b"]]
    for lp in params["gru"]:
        flat_inputs += [lp["wih_r"], lp["wih_z"], lp["wih_n"],
                        lp["whh_r"], lp["whh_z"], lp["whh_n"],
                        lp["bih_r"], lp["bih_z"], lp["bih_n"],
                        lp["bhh_r"], lp["bhh_z"], lp["bhh_n"]]
    flat_inputs += [params["head_wT"], params["head_b"]]

    kernel = functools.partial(fused_kernel, num_layers=num_layers,
                               T=t, N=n, P=p, H=hidden)

    loss_sum = pl.pallas_call(
        kernel,
        out_shape=jax.ShapeDtypeStruct((1, 1), jnp.float32),
        in_specs=[_vmem_spec() for _ in range(len(flat_inputs))],
        out_specs=_vmem_spec(),
        scratch_shapes=[
            pltpu.VMEM((t * n, 2 * hidden), jnp.float32),   # gi_r
            pltpu.VMEM((t * n, 2 * hidden), jnp.float32),   # gi_z
            pltpu.VMEM((t * n, 2 * hidden), jnp.float32),   # gi_n
            pltpu.VMEM((t * n, 2 * hidden), jnp.float32),   # buf_a (fwd-ordered)
            pltpu.VMEM((t * n, 2 * hidden), jnp.float32),   # buf_b (bwd-ordered)
        ],
    )(*flat_inputs)

    # torch: (recon_loss * mask).mean() -> divide by total element count.
    return loss_sum[0, 0] / jnp.float32(n * t * p)


# ----------------------------------------------------------------------------
# Main
# ----------------------------------------------------------------------------

if __name__ == "__main__":
    patch_size = 8
    expansion_ratio = 4      # hidden = 32
    num_layers = 2
    batch = 2
    channels = 4
    seq_len = 64             # multiple of patch_size -> patch_num = 8

    root = jax.random.PRNGKey(0)
    k_param, k_data, k_mask = jax.random.split(root, 3)

    params = init_params(k_param, patch_size, expansion_ratio, num_layers)
    x = jax.random.normal(k_data, (batch, seq_len, channels), jnp.float32)

    fwd = jax.jit(functools.partial(patch_detector_gru_forward,
                                    patch_size=patch_size))
    loss = fwd(x, params, k_mask)
    loss = jax.block_until_ready(loss)
    assert jnp.isfinite(loss)
    print("KERNEL_OK")
</pallas_src>

<mosaic_0001>
module attributes {stable_mosaic.version = 11 : i64} {
  func.func @fused_kernel(%arg0: memref<64x8xf32, #tpu.memory_space<vmem>>, %arg1: memref<64x1xf32, #tpu.memory_space<vmem>>, %arg2: memref<8x32xf32, #tpu.memory_space<vmem>>, %arg3: memref<1x32xf32, #tpu.memory_space<vmem>>, %arg4: memref<32x64xf32, #tpu.memory_space<vmem>>, %arg5: memref<32x64xf32, #tpu.memory_space<vmem>>, %arg6: memref<32x64xf32, #tpu.memory_space<vmem>>, %arg7: memref<64x64xf32, #tpu.memory_space<vmem>>, %arg8: memref<64x64xf32, #tpu.memory_space<vmem>>, %arg9: memref<64x64xf32, #tpu.memory_space<vmem>>, %arg10: memref<1x64xf32, #tpu.memory_space<vmem>>, %arg11: memref<1x64xf32, #tpu.memory_space<vmem>>, %arg12: memref<1x64xf32, #tpu.memory_space<vmem>>, %arg13: memref<1x64xf32, #tpu.memory_space<vmem>>, %arg14: memref<1x64xf32, #tpu.memory_space<vmem>>, %arg15: memref<1x64xf32, #tpu.memory_space<vmem>>, %arg16: memref<64x64xf32, #tpu.memory_space<vmem>>, %arg17: memref<64x64xf32, #tpu.memory_space<vmem>>, %arg18: memref<64x64xf32, #tpu.memory_space<vmem>>, %arg19: memref<64x64xf32, #tpu.memory_space<vmem>>, %arg20: memref<64x64xf32, #tpu.memory_space<vmem>>, %arg21: memref<64x64xf32, #tpu.memory_space<vmem>>, %arg22: memref<1x64xf32, #tpu.memory_space<vmem>>, %arg23: memref<1x64xf32, #tpu.memory_space<vmem>>, %arg24: memref<1x64xf32, #tpu.memory_space<vmem>>, %arg25: memref<1x64xf32, #tpu.memory_space<vmem>>, %arg26: memref<1x64xf32, #tpu.memory_space<vmem>>, %arg27: memref<1x64xf32, #tpu.memory_space<vmem>>, %arg28: memref<64x8xf32, #tpu.memory_space<vmem>>, %arg29: memref<1x8xf32, #tpu.memory_space<vmem>>, %arg30: memref<1x1xf32, #tpu.memory_space<vmem>>, %arg31: memref<64x64xf32, #tpu.memory_space<vmem>>, %arg32: memref<64x64xf32, #tpu.memory_space<vmem>>, %arg33: memref<64x64xf32, #tpu.memory_space<vmem>>, %arg34: memref<64x64xf32, #tpu.memory_space<vmem>>, %arg35: memref<64x64xf32, #tpu.memory_space<vmem>>) attributes {dimension_semantics = [], scalar_prefetch = 0 : i64, scratch_operands = 5 : i64, tpu.core_type = #tpu.core_type<tc>} {
    %c0 = arith.constant 0 : index
    %c0_0 = arith.constant 0 : index
    %0 = vector.load %arg0[%c0, %c0_0] : memref<64x8xf32, #tpu.memory_space<vmem>>, vector<64x8xf32>
    %c0_1 = arith.constant 0 : index
    %c0_2 = arith.constant 0 : index
    %1 = vector.load %arg1[%c0_1, %c0_2] : memref<64x1xf32, #tpu.memory_space<vmem>>, vector<64x1xf32>
    %cst = arith.constant 1.000000e+00 : f32
    %2 = vector.broadcast %cst : f32 to vector<64x1xf32>
    %3 = arith.subf %2, %1 : vector<64x1xf32>
    %4 = vector.broadcast %3 : vector<64x1xf32> to vector<64x8xf32>
    %5 = arith.mulf %0, %4 : vector<64x8xf32>
    %c0_3 = arith.constant 0 : index
    %c0_4 = arith.constant 0 : index
    %6 = vector.load %arg2[%c0_3, %c0_4] : memref<8x32xf32, #tpu.memory_space<vmem>>, vector<8x32xf32>
    %cst_5 = arith.constant dense<0.000000e+00> : vector<64x32xf32>
    %7 = tpu.matmul %5, %6, %cst_5 {dimension_numbers = #tpu.dot_dimension_numbers<[1], [0], [0], [1], [0, 0, 1, 1], [], []>} : vector<64x8xf32>, vector<8x32xf32>, vector<64x32xf32> -> vector<64x32xf32>
    %c0_6 = arith.constant 0 : index
    %c0_7 = arith.constant 0 : index
    %8 = vector.load %arg3[%c0_6, %c0_7] : memref<1x32xf32, #tpu.memory_space<vmem>>, vector<1x32xf32>
    %9 = vector.broadcast %8 : vector<1x32xf32> to vector<64x32xf32>
    %10 = arith.addf %7, %9 : vector<64x32xf32>
    %11 = tpu.iota {dimensions = array<i32: 1>} : vector<8x64xi32>
    %c32_i32 = arith.constant 32 : i32
    %12 = vector.broadcast %c32_i32 : i32 to vector<8x64xi32>
    %13 = arith.cmpi slt, %11, %12 : vector<8x64xi32>
    %c0_8 = arith.constant 0 : index
    %c0_9 = arith.constant 0 : index
    %14 = vector.load %arg4[%c0_8, %c0_9] : memref<32x64xf32, #tpu.memory_space<vmem>>, vector<32x64xf32>
    %cst_10 = arith.constant dense<0.000000e+00> : vector<64x64xf32>
    %15 = tpu.matmul %10, %14, %cst_10 {dimension_numbers = #tpu.dot_dimension_numbers<[1], [0], [0], [1], [0, 0, 1, 1], [], []>} : vector<64x32xf32>, vector<32x64xf32>, vector<64x64xf32> -> vector<64x64xf32>
    %c0_11 = arith.constant 0 : index
    %c0_12 = arith.constant 0 : index
    %16 = vector.load %arg10[%c0_11, %c0_12] : memref<1x64xf32, #tpu.memory_space<vmem>>, vector<1x64xf32>
    %17 = vector.broadcast %16 : vector<1x64xf32> to vector<64x64xf32>
    %18 = arith.addf %15, %17 : vector<64x64xf32>
    %c0_13 = arith.constant 0 : index
    %c0_14 = arith.constant 0 : index
    %19 = vector.load %arg31[%c0_13, %c0_14] : memref<64x64xf32, #tpu.memory_space<vmem>>, vector<64x64xf32>
    tpu.vector_store %arg31[%c0_13, %c0_14], %18 {strides = array<i32>} : memref<64x64xf32, #tpu.memory_space<vmem>>, vector<64x64xf32>,
    %c0_15 = arith.constant 0 : index
    %c0_16 = arith.constant 0 : index
    %20 = vector.load %arg5[%c0_15, %c0_16] : memref<32x64xf32, #tpu.memory_space<vmem>>, vector<32x64xf32>
    %cst_17 = arith.constant dense<0.000000e+00> : vector<64x64xf32>
    %21 = tpu.matmul %10, %20, %cst_17 {dimension_numbers = #tpu.dot_dimension_numbers<[1], [0], [0], [1], [0, 0, 1, 1], [], []>} : vector<64x32xf32>, vector<32x64xf32>, vector<64x64xf32> -> vector<64x64xf32>
    %c0_18 = arith.constant 0 : index
    %c0_19 = arith.constant 0 : index
    %22 = vector.load %arg11[%c0_18, %c0_19] : memref<1x64xf32, #tpu.memory_space<vmem>>, vector<1x64xf32>
    %23 = vector.broadcast %22 : vector<1x64xf32> to vector<64x64xf32>
    %24 = arith.addf %21, %23 : vector<64x64xf32>
    %c0_20 = arith.constant 0 : index
    %c0_21 = arith.constant 0 : index
    %25 = vector.load %arg32[%c0_20, %c0_21] : memref<64x64xf32, #tpu.memory_space<vmem>>, vector<64x64xf32>
    tpu.vector_store %arg32[%c0_20, %c0_21], %24 {strides = array<i32>} : memref<64x64xf32, #tpu.memory_space<vmem>>, vector<64x64xf32>,
    %c0_22 = arith.constant 0 : index
    %c0_23 = arith.constant 0 : index
    %26 = vector.load %arg6[%c0_22, %c0_23] : memref<32x64xf32, #tpu.memory_space<vmem>>, vector<32x64xf32>
    %cst_24 = arith.constant dense<0.000000e+00> : vector<64x64xf32>
    %27 = tpu.matmul %10, %26, %cst_24 {dimension_numbers = #tpu.dot_dimension_numbers<[1], [0], [0], [1], [0, 0, 1, 1], [], []>} : vector<64x32xf32>, vector<32x64xf32>, vector<64x64xf32> -> vector<64x64xf32>
    %c0_25 = arith.constant 0 : index
    %c0_26 = arith.constant 0 : index
    %28 = vector.load %arg12[%c0_25, %c0_26] : memref<1x64xf32, #tpu.memory_space<vmem>>, vector<1x64xf32>
    %29 = vector.broadcast %28 : vector<1x64xf32> to vector<64x64xf32>
    %30 = arith.addf %27, %29 : vector<64x64xf32>
    %c0_27 = arith.constant 0 : index
    %c0_28 = arith.constant 0 : index
    %31 = vector.load %arg33[%c0_27, %c0_28] : memref<64x64xf32, #tpu.memory_space<vmem>>, vector<64x64xf32>
    tpu.vector_store %arg33[%c0_27, %c0_28], %30 {strides = array<i32>} : memref<64x64xf32, #tpu.memory_space<vmem>>, vector<64x64xf32>,
    %cst_29 = arith.constant 0.000000e+00 : f32
    %32 = vector.broadcast %cst_29 : f32 to vector<8x64xf32>
    %c0_30 = arith.constant 0 : index
    %c0_31 = arith.constant 0 : index
    %33 = vector.load %arg31[%c0_30, %c0_31] : memref<64x64xf32, #tpu.memory_space<vmem>>, vector<8x64xf32>
    %c56 = arith.constant 56 : index
    %c0_32 = arith.constant 0 : index
    %34 = vector.load %arg31[%c56, %c0_32] : memref<64x64xf32, #tpu.memory_space<vmem>>, vector<8x64xf32>
    %35 = arith.select %13, %33, %34 : vector<8x64xi1>, vector<8x64xf32>
    %c0_33 = arith.constant 0 : index
    %c0_34 = arith.constant 0 : index
    %36 = vector.load %arg32[%c0_33, %c0_34] : memref<64x64xf32, #tpu.memory_space<vmem>>, vector<8x64xf32>
    %c56_35 = arith.constant 56 : index
    %c0_36 = arith.constant 0 : index
    %37 = vector.load %arg32[%c56_35, %c0_36] : memref<64x64xf32, #tpu.memory_space<vmem>>, vector<8x64xf32>
    %38 = arith.select %13, %36, %37 : vector<8x64xi1>, vector<8x64xf32>
    %c0_37 = arith.constant 0 : index
    %c0_38 = arith.constant 0 : index
    %39 = vector.load %arg33[%c0_37, %c0_38] : memref<64x64xf32, #tpu.memory_space<vmem>>, vector<8x64xf32>
    %c56_39 = arith.constant 56 : index
    %c0_40 = arith.constant 0 : index
    %40 = vector.load %arg33[%c56_39, %c0_40] : memref<64x64xf32, #tpu.memory_space<vmem>>, vector<8x64xf32>
    %41 = arith.select %13, %39, %40 : vector<8x64xi1>, vector<8x64xf32>
    %c0_41 = arith.constant 0 : index
    %c0_42 = arith.constant 0 : index
    %42 = vector.load %arg7[%c0_41, %c0_42] : memref<64x64xf32, #tpu.memory_space<vmem>>, vector<64x64xf32>
    %cst_43 = arith.constant dense<0.000000e+00> : vector<8x64xf32>
    %43 = tpu.matmul %32, %42, %cst_43 {dimension_numbers = #tpu.dot_dimension_numbers<[1], [0], [0], [1], [0, 0, 1, 1], [], []>} : vector<8x64xf32>, vector<64x64xf32>, vector<8x64xf32> -> vector<8x64xf32>
    %c0_44 = arith.constant 0 : index
    %c0_45 = arith.constant 0 : index
    %44 = vector.load %arg13[%c0_44, %c0_45] : memref<1x64xf32, #tpu.memory_space<vmem>>, vector<1x64xf32>
    %45 = vector.broadcast %44 : vector<1x64xf32> to vector<8x64xf32>
    %46 = arith.addf %43, %45 : vector<8x64xf32>
    %c0_46 = arith.constant 0 : index
    %c0_47 = arith.constant 0 : index
    %47 = vector.load %arg8[%c0_46, %c0_47] : memref<64x64xf32, #tpu.memory_space<vmem>>, vector<64x64xf32>
    %cst_48 = arith.constant dense<0.000000e+00> : vector<8x64xf32>
    %48 = tpu.matmul %32, %47, %cst_48 {dimension_numbers = #tpu.dot_dimension_numbers<[1], [0], [0], [1], [0, 0, 1, 1], [], []>} : vector<8x64xf32>, vector<64x64xf32>, vector<8x64xf32> -> vector<8x64xf32>
    %c0_49 = arith.constant 0 : index
    %c0_50 = arith.constant 0 : index
    %49 = vector.load %arg14[%c0_49, %c0_50] : memref<1x64xf32, #tpu.memory_space<vmem>>, vector<1x64xf32>
    %50 = vector.broadcast %49 : vector<1x64xf32> to vector<8x64xf32>
    %51 = arith.addf %48, %50 : vector<8x64xf32>
    %c0_51 = arith.constant 0 : index
    %c0_52 = arith.constant 0 : index
    %52 = vector.load %arg9[%c0_51, %c0_52] : memref<64x64xf32, #tpu.memory_space<vmem>>, vector<64x64xf32>
    %cst_53 = arith.constant dense<0.000000e+00> : vector<8x64xf32>
    %53 = tpu.matmul %32, %52, %cst_53 {dimension_numbers = #tpu.dot_dimension_numbers<[1], [0], [0], [1], [0, 0, 1, 1], [], []>} : vector<8x64xf32>, vector<64x64xf32>, vector<8x64xf32> -> vector<8x64xf32>
    %c0_54 = arith.constant 0 : index
    %c0_55 = arith.constant 0 : index
    %54 = vector.load %arg15[%c0_54, %c0_55] : memref<1x64xf32, #tpu.memory_space<vmem>>, vector<1x64xf32>
    %55 = vector.broadcast %54 : vector<1x64xf32> to vector<8x64xf32>
    %56 = arith.addf %53, %55 : vector<8x64xf32>
    %57 = arith.addf %35, %46 : vector<8x64xf32>
    %58 = arith.negf %57 : vector<8x64xf32>
    %59 = math.exp %58 : vector<8x64xf32>
    %cst_56 = arith.constant 1.000000e+00 : f32
    %60 = vector.broadcast %cst_56 : f32 to vector<8x64xf32>
    %61 = arith.addf %60, %59 : vector<8x64xf32>
    %62 = arith.divf %60, %61 : vector<8x64xf32>
    %63 = arith.addf %38, %51 : vector<8x64xf32>
    %64 = arith.negf %63 : vector<8x64xf32>
    %65 = math.exp %64 : vector<8x64xf32>
    %cst_57 = arith.constant 1.000000e+00 : f32
    %66 = vector.broadcast %cst_57 : f32 to vector<8x64xf32>
    %67 = arith.addf %66, %65 : vector<8x64xf32>
    %68 = arith.divf %66, %67 : vector<8x64xf32>
    %69 = arith.mulf %62, %56 : vector<8x64xf32>
    %70 = arith.addf %41, %69 : vector<8x64xf32>
    %71 = math.tanh %70 : vector<8x64xf32>
    %cst_58 = arith.constant 1.000000e+00 : f32
    %72 = vector.broadcast %cst_58 : f32 to vector<8x64xf32>
    %73 = arith.subf %72, %68 : vector<8x64xf32>
    %74 = arith.mulf %73, %71 : vector<8x64xf32>
    %75 = arith.mulf %68, %32 : vector<8x64xf32>
    %76 = arith.addf %74, %75 : vector<8x64xf32>
    %c0_59 = arith.constant 0 : index
    %c0_60 = arith.constant 0 : index
    %77 = vector.load %arg34[%c0_59, %c0_60] : memref<64x64xf32, #tpu.memory_space<vmem>>, vector<8x64xf32>
    tpu.vector_store %arg34[%c0_59, %c0_60], %76 {strides = array<i32>} : memref<64x64xf32, #tpu.memory_space<vmem>>, vector<8x64xf32>,
    %c56_61 = arith.constant 56 : index
    %c0_62 = arith.constant 0 : index
    %78 = vector.load %arg35[%c56_61, %c0_62] : memref<64x64xf32, #tpu.memory_space<vmem>>, vector<8x64xf32>
    tpu.vector_store %arg35[%c56_61, %c0_62], %76 {strides = array<i32>} : memref<64x64xf32, #tpu.memory_space<vmem>>, vector<8x64xf32>,
    %c8 = arith.constant 8 : index
    %c0_63 = arith.constant 0 : index
    %79 = vector.load %arg31[%c8, %c0_63] : memref<64x64xf32, #tpu.memory_space<vmem>>, vector<8x64xf32>
    %c48 = arith.constant 48 : index
    %c0_64 = arith.constant 0 : index
    %80 = vector.load %arg31[%c48, %c0_64] : memref<64x64xf32, #tpu.memory_space<vmem>>, vector<8x64xf32>
    %81 = arith.select %13, %79, %80 : vector<8x64xi1>, vector<8x64xf32>
    %c8_65 = arith.constant 8 : index
    %c0_66 = arith.constant 0 : index
    %82 = vector.load %arg32[%c8_65, %c0_66] : memref<64x64xf32, #tpu.memory_space<vmem>>, vector<8x64xf32>
    %c48_67 = arith.constant 48 : index
    %c0_68 = arith.constant 0 : index
    %83 = vector.load %arg32[%c48_67, %c0_68] : memref<64x64xf32, #tpu.memory_space<vmem>>, vector<8x64xf32>
    %84 = arith.select %13, %82, %83 : vector<8x64xi1>, vector<8x64xf32>
    %c8_69 = arith.constant 8 : index
    %c0_70 = arith.constant 0 : index
    %85 = vector.load %arg33[%c8_69, %c0_70] : memref<64x64xf32, #tpu.memory_space<vmem>>, vector<8x64xf32>
    %c48_71 = arith.constant 48 : index
    %c0_72 = arith.constant 0 : index
    %86 = vector.load %arg33[%c48_71, %c0_72] : memref<64x64xf32, #tpu.memory_space<vmem>>, vector<8x64xf32>
    %87 = arith.select %13, %85, %86 : vector<8x64xi1>, vector<8x64xf32>
    %c0_73 = arith.constant 0 : index
    %c0_74 = arith.constant 0 : index
    %88 = vector.load %arg7[%c0_73, %c0_74] : memref<64x64xf32, #tpu.memory_space<vmem>>, vector<64x64xf32>
    %cst_75 = arith.constant dense<0.000000e+00> : vector<8x64xf32>
    %89 = tpu.matmul %76, %88, %cst_75 {dimension_numbers = #tpu.dot_dimension_numbers<[1], [0], [0], [1], [0, 0, 1, 1], [], []>} : vector<8x64xf32>, vector<64x64xf32>, vector<8x64xf32> -> vector<8x64xf32>
    %c0_76 = arith.constant 0 : index
    %c0_77 = arith.constant 0 : index
    %90 = vector.load %arg13[%c0_76, %c0_77] : memref<1x64xf32, #tpu.memory_space<vmem>>, vector<1x64xf32>
    %91 = vector.broadcast %90 : vector<1x64xf32> to vector<8x64xf32>
    %92 = arith.addf %89, %91 : vector<8x64xf32>
    %c0_78 = arith.constant 0 : index
    %c0_79 = arith.constant 0 : index
    %93 = vector.load %arg8[%c0_78, %c0_79] : memref<64x64xf32, #tpu.memory_space<vmem>>, vector<64x64xf32>
    %cst_80 = arith.constant dense<0.000000e+00> : vector<8x64xf32>
    %94 = tpu.matmul %76, %93, %cst_80 {dimension_numbers = #tpu.dot_dimension_numbers<[1], [0], [0], [1], [0, 0, 1, 1], [], []>} : vector<8x64xf32>, vector<64x64xf32>, vector<8x64xf32> -> vector<8x64xf32>
    %c0_81 = arith.constant 0 : index
    %c0_82 = arith.constant 0 : index
    %95 = vector.load %arg14[%c0_81, %c0_82] : memref<1x64xf32, #tpu.memory_space<vmem>>, vector<1x64xf32>
    %96 = vector.broadcast %95 : vector<1x64xf32> to vector<8x64xf32>
    %97 = arith.addf %94, %96 : vector<8x64xf32>
    %c0_83 = arith.constant 0 : index
    %c0_84 = arith.constant 0 : index
    %98 = vector.load %arg9[%c0_83, %c0_84] : memref<64x64xf32, #tpu.memory_space<vmem>>, vector<64x64xf32>
    %cst_85 = arith.constant dense<0.000000e+00> : vector<8x64xf32>
    %99 = tpu.matmul %76, %98, %cst_85 {dimension_numbers = #tpu.dot_dimension_numbers<[1], [0], [0], [1], [0, 0, 1, 1], [], []>} : vector<8x64xf32>, vector<64x64xf32>, vector<8x64xf32> -> vector<8x64xf32>
    %c0_86 = arith.constant 0 : index
    %c0_87 = arith.constant 0 : index
    %100 = vector.load %arg15[%c0_86, %c0_87] : memref<1x64xf32, #tpu.memory_space<vmem>>, vector<1x64xf32>
    %101 = vector.broadcast %100 : vector<1x64xf32> to vector<8x64xf32>
    %102 = arith.addf %99, %101 : vector<8x64xf32>
    %103 = arith.addf %81, %92 : vector<8x64xf32>
    %104 = arith.negf %103 : vector<8x64xf32>
    %105 = math.exp %104 : vector<8x64xf32>
    %cst_88 = arith.constant 1.000000e+00 : f32
    %106 = vector.broadcast %cst_88 : f32 to vector<8x64xf32>
    %107 = arith.addf %106, %105 : vector<8x64xf32>
    %108 = arith.divf %106, %107 : vector<8x64xf32>
    %109 = arith.addf %84, %97 : vector<8x64xf32>
    %110 = arith.negf %109 : vector<8x64xf32>
    %111 = math.exp %110 : vector<8x64xf32>
    %cst_89 = arith.constant 1.000000e+00 : f32
    %112 = vector.broadcast %cst_89 : f32 to vector<8x64xf32>
    %113 = arith.addf %112, %111 : vector<8x64xf32>
    %114 = arith.divf %112, %113 : vector<8x64xf32>
    %115 = arith.mulf %108, %102 : vector<8x64xf32>
    %116 = arith.addf %87, %115 : vector<8x64xf32>
    %117 = math.tanh %116 : vector<8x64xf32>
    %cst_90 = arith.constant 1.000000e+00 : f32
    %118 = vector.broadcast %cst_90 : f32 to vector<8x64xf32>
    %119 = arith.subf %118, %114 : vector<8x64xf32>
    %120 = arith.mulf %119, %117 : vector<8x64xf32>
    %121 = arith.mulf %114, %76 : vector<8x64xf32>
    %122 = arith.addf %120, %121 : vector<8x64xf32>
    %c8_91 = arith.constant 8 : index
    %c0_92 = arith.constant 0 : index
    %123 = vector.load %arg34[%c8_91, %c0_92] : memref<64x64xf32, #tpu.memory_space<vmem>>, vector<8x64xf32>
    tpu.vector_store %arg34[%c8_91, %c0_92], %122 {strides = array<i32>} : memref<64x64xf32, #tpu.memory_space<vmem>>, vector<8x64xf32>,
    %c48_93 = arith.constant 48 : index
    %c0_94 = arith.constant 0 : index
    %124 = vector.load %arg35[%c48_93, %c0_94] : memref<64x64xf32, #tpu.memory_space<vmem>>, vector<8x64xf32>
    tpu.vector_store %arg35[%c48_93, %c0_94], %122 {strides = array<i32>} : memref<64x64xf32, #tpu.memory_space<vmem>>, vector<8x64xf32>,
    %c16 = arith.constant 16 : index
    %c0_95 = arith.constant 0 : index
    %125 = vector.load %arg31[%c16, %c0_95] : memref<64x64xf32, #tpu.memory_space<vmem>>, vector<8x64xf32>
    %c40 = arith.constant 40 : index
    %c0_96 = arith.constant 0 : index
    %126 = vector.load %arg31[%c40, %c0_96] : memref<64x64xf32, #tpu.memory_space<vmem>>, vector<8x64xf32>
    %127 = arith.select %13, %125, %126 : vector<8x64xi1>, vector<8x64xf32>
    %c16_97 = arith.constant 16 : index
    %c0_98 = arith.constant 0 : index
    %128 = vector.load %arg32[%c16_97, %c0_98] : memref<64x64xf32, #tpu.memory_space<vmem>>, vector<8x64xf32>
    %c40_99 = arith.constant 40 : index
    %c0_100 = arith.constant 0 : index
    %129 = vector.load %arg32[%c40_99, %c0_100] : memref<64x64xf32, #tpu.memory_space<vmem>>, vector<8x64xf32>
    %130 = arith.select %13, %128, %129 : vector<8x64xi1>, vector<8x64xf32>
    %c16_101 = arith.constant 16 : index
    %c0_102 = arith.constant 0 : index
    %131 = vector.load %arg33[%c16_101, %c0_102] : memref<64x64xf32, #tpu.memory_space<vmem>>, vector<8x64xf32>
    %c40_103 = arith.constant 40 : index
    %c0_104 = arith.constant 0 : index
    %132 = vector.load %arg33[%c40_103, %c0_104] : memref<64x64xf32, #tpu.memory_space<vmem>>, vector<8x64xf32>
    %133 = arith.select %13, %131, %132 : vector<8x64xi1>, vector<8x64xf32>
    %c0_105 = arith.constant 0 : index
    %c0_106 = arith.constant 0 : index
    %134 = vector.load %arg7[%c0_105, %c0_106] : memref<64x64xf32, #tpu.memory_space<vmem>>, vector<64x64xf32>
    %cst_107 = arith.constant dense<0.000000e+00> : vector<8x64xf32>
    %135 = tpu.matmul %122, %134, %cst_107 {dimension_numbers = #tpu.dot_dimension_numbers<[1], [0], [0], [1], [0, 0, 1, 1], [], []>} : vector<8x64xf32>, vector<64x64xf32>, vector<8x64xf32> -> vector<8x64xf32>
    %c0_108 = arith.constant 0 : index
    %c0_109 = arith.constant 0 : index
    %136 = vector.load %arg13[%c0_108, %c0_109] : memref<1x64xf32, #tpu.memory_space<vmem>>, vector<1x64xf32>
    %137 = vector.broadcast %136 : vector<1x64xf32> to vector<8x64xf32>
    %138 = arith.addf %135, %137 : vector<8x64xf32>
    %c0_110 = arith.constant 0 : index
    %c0_111 = arith.constant 0 : index
    %139 = vector.load %arg8[%c0_110, %c0_111] : memref<64x64xf32, #tpu.memory_space<vmem>>, vector<64x64xf32>
    %cst_112 = arith.constant dense<0.000000e+00> : vector<8x64xf32>
    %140 = tpu.matmul %122, %139, %cst_112 {dimension_numbers = #tpu.dot_dimension_numbers<[1], [0], [0], [1], [0, 0, 1, 1], [], []>} : vector<8x64xf32>, vector<64x64xf32>, vector<8x64xf32> -> vector<8x64xf32>
    %c0_113 = arith.constant 0 : index
    %c0_114 = arith.constant 0 : index
    %141 = vector.load %arg14[%c0_113, %c0_114] : memref<1x64xf32, #tpu.memory_space<vmem>>, vector<1x64xf32>
    %142 = vector.broadcast %141 : vector<1x64xf32> to vector<8x64xf32>
    %143 = arith.addf %140, %142 : vector<8x64xf32>
    %c0_115 = arith.constant 0 : index
    %c0_116 = arith.constant 0 : index
    %144 = vector.load %arg9[%c0_115, %c0_116] : memref<64x64xf32, #tpu.memory_space<vmem>>, vector<64x64xf32>
    %cst_117 = arith.constant dense<0.000000e+00> : vector<8x64xf32>
    %145 = tpu.matmul %122, %144, %cst_117 {dimension_numbers = #tpu.dot_dimension_numbers<[1], [0], [0], [1], [0, 0, 1, 1], [], []>} : vector<8x64xf32>, vector<64x64xf32>, vector<8x64xf32> -> vector<8x64xf32>
    %c0_118 = arith.constant 0 : index
    %c0_119 = arith.constant 0 : index
    %146 = vector.load %arg15[%c0_118, %c0_119] : memref<1x64xf32, #tpu.memory_space<vmem>>, vector<1x64xf32>
    %147 = vector.broadcast %146 : vector<1x64xf32> to vector<8x64xf32>
    %148 = arith.addf %145, %147 : vector<8x64xf32>
    %149 = arith.addf %127, %138 : vector<8x64xf32>
    %150 = arith.negf %149 : vector<8x64xf32>
    %151 = math.exp %150 : vector<8x64xf32>
    %cst_120 = arith.constant 1.000000e+00 : f32
    %152 = vector.broadcast %cst_120 : f32 to vector<8x64xf32>
    %153 = arith.addf %152, %151 : vector<8x64xf32>
    %154 = arith.divf %152, %153 : vector<8x64xf32>
    %155 = arith.addf %130, %143 : vector<8x64xf32>
    %156 = arith.negf %155 : vector<8x64xf32>
    %157 = math.exp %156 : vector<8x64xf32>
    %cst_121 = arith.constant 1.000000e+00 : f32
    %158 = vector.broadcast %cst_121 : f32 to vector<8x64xf32>
    %159 = arith.addf %158, %157 : vector<8x64xf32>
    %160 = arith.divf %158, %159 : vector<8x64xf32>
    %161 = arith.mulf %154, %148 : vector<8x64xf32>
    %162 = arith.addf %133, %161 : vector<8x64xf32>
    %163 = math.tanh %162 : vector<8x64xf32>
    %cst_122 = arith.constant 1.000000e+00 : f32
    %164 = vector.broadcast %cst_122 : f32 to vector<8x64xf32>
    %165 = arith.subf %164, %160 : vector<8x64xf32>
    %166 = arith.mulf %165, %163 : vector<8x64xf32>
    %167 = arith.mulf %160, %122 : vector<8x64xf32>
    %168 = arith.addf %166, %167 : vector<8x64xf32>
    %c16_123 = arith.constant 16 : index
    %c0_124 = arith.constant 0 : index
    %169 = vector.load %arg34[%c16_123, %c0_124] : memref<64x64xf32, #tpu.memory_space<vmem>>, vector<8x64xf32>
    tpu.vector_store %arg34[%c16_123, %c0_124], %168 {strides = array<i32>} : memref<64x64xf32, #tpu.memory_space<vmem>>, vector<8x64xf32>,
    %c40_125 = arith.constant 40 : index
    %c0_126 = arith.constant 0 : index
    %170 = vector.load %arg35[%c40_125, %c0_126] : memref<64x64xf32, #tpu.memory_space<vmem>>, vector<8x64xf32>
    tpu.vector_store %arg35[%c40_125, %c0_126], %168 {strides = array<i32>} : memref<64x64xf32, #tpu.memory_space<vmem>>, vector<8x64xf32>,
    %c24 = arith.constant 24 : index
    %c0_127 = arith.constant 0 : index
    %171 = vector.load %arg31[%c24, %c0_127] : memref<64x64xf32, #tpu.memory_space<vmem>>, vector<8x64xf32>
    %c32 = arith.constant 32 : index
    %c0_128 = arith.constant 0 : index
    %172 = vector.load %arg31[%c32, %c0_128] : memref<64x64xf32, #tpu.memory_space<vmem>>, vector<8x64xf32>
    %173 = arith.select %13, %171, %172 : vector<8x64xi1>, vector<8x64xf32>
    %c24_129 = arith.constant 24 : index
    %c0_130 = arith.constant 0 : index
    %174 = vector.load %arg32[%c24_129, %c0_130] : memref<64x64xf32, #tpu.memory_space<vmem>>, vector<8x64xf32>
    %c32_131 = arith.constant 32 : index
    %c0_132 = arith.constant 0 : index
    %175 = vector.load %arg32[%c32_131, %c0_132] : memref<64x64xf32, #tpu.memory_space<vmem>>, vector<8x64xf32>
    %176 = arith.select %13, %174, %175 : vector<8x64xi1>, vector<8x64xf32>
    %c24_133 = arith.constant 24 : index
    %c0_134 = arith.constant 0 : index
    %177 = vector.load %arg33[%c24_133, %c0_134] : memref<64x64xf32, #tpu.memory_space<vmem>>, vector<8x64xf32>
    %c32_135 = arith.constant 32 : index
    %c0_136 = arith.constant 0 : index
    %178 = vector.load %arg33[%c32_135, %c0_136] : memref<64x64xf32, #tpu.memory_space<vmem>>, vector<8x64xf32>
    %179 = arith.select %13, %177, %178 : vector<8x64xi1>, vector<8x64xf32>
    %c0_137 = arith.constant 0 : index
    %c0_138 = arith.constant 0 : index
    %180 = vector.load %arg7[%c0_137, %c0_138] : memref<64x64xf32, #tpu.memory_space<vmem>>, vector<64x64xf32>
    %cst_139 = arith.constant dense<0.000000e+00> : vector<8x64xf32>
    %181 = tpu.matmul %168, %180, %cst_139 {dimension_numbers = #tpu.dot_dimension_numbers<[1], [0], [0], [1], [0, 0, 1, 1], [], []>} : vector<8x64xf32>, vector<64x64xf32>, vector<8x64xf32> -> vector<8x64xf32>
    %c0_140 = arith.constant 0 : index
    %c0_141 = arith.constant 0 : index
    %182 = vector.load %arg13[%c0_140, %c0_141] : memref<1x64xf32, #tpu.memory_space<vmem>>, vector<1x64xf32>
    %183 = vector.broadcast %182 : vector<1x64xf32> to vector<8x64xf32>
    %184 = arith.addf %181, %183 : vector<8x64xf32>
    %c0_142 = arith.constant 0 : index
    %c0_143 = arith.constant 0 : index
    %185 = vector.load %arg8[%c0_142, %c0_143] : memref<64x64xf32, #tpu.memory_space<vmem>>, vector<64x64xf32>
    %cst_144 = arith.constant dense<0.000000e+00> : vector<8x64xf32>
    %186 = tpu.matmul %168, %185, %cst_144 {dimension_numbers = #tpu.dot_dimension_numbers<[1], [0], [0], [1], [0, 0, 1, 1], [], []>} : vector<8x64xf32>, vector<64x64xf32>, vector<8x64xf32> -> vector<8x64xf32>
    %c0_145 = arith.constant 0 : index
    %c0_146 = arith.constant 0 : index
    %187 = vector.load %arg14[%c0_145, %c0_146] : memref<1x64xf32, #tpu.memory_space<vmem>>, vector<1x64xf32>
    %188 = vector.broadcast %187 : vector<1x64xf32> to vector<8x64xf32>
    %189 = arith.addf %186, %188 : vector<8x64xf32>
    %c0_147 = arith.constant 0 : index
    %c0_148 = arith.constant 0 : index
    %190 = vector.load %arg9[%c0_147, %c0_148] : memref<64x64xf32, #tpu.memory_space<vmem>>, vector<64x64xf32>
    %cst_149 = arith.constant dense<0.000000e+00> : vector<8x64xf32>
    %191 = tpu.matmul %168, %190, %cst_149 {dimension_numbers = #tpu.dot_dimension_numbers<[1], [0], [0], [1], [0, 0, 1, 1], [], []>} : vector<8x64xf32>, vector<64x64xf32>, vector<8x64xf32> -> vector<8x64xf32>
    %c0_150 = arith.constant 0 : index
    %c0_151 = arith.constant 0 : index
    %192 = vector.load %arg15[%c0_150, %c0_151] : memref<1x64xf32, #tpu.memory_space<vmem>>, vector<1x64xf32>
    %193 = vector.broadcast %192 : vector<1x64xf32> to vector<8x64xf32>
    %194 = arith.addf %191, %193 : vector<8x64xf32>
    %195 = arith.addf %173, %184 : vector<8x64xf32>
    %196 = arith.negf %195 : vector<8x64xf32>
    %197 = math.exp %196 : vector<8x64xf32>
    %cst_152 = arith.constant 1.000000e+00 : f32
    %198 = vector.broadcast %cst_152 : f32 to vector<8x64xf32>
    %199 = arith.addf %198, %197 : vector<8x64xf32>
    %200 = arith.divf %198, %199 : vector<8x64xf32>
    %201 = arith.addf %176, %189 : vector<8x64xf32>
    %202 = arith.negf %201 : vector<8x64xf32>
    %203 = math.exp %202 : vector<8x64xf32>
    %cst_153 = arith.constant 1.000000e+00 : f32
    %204 = vector.broadcast %cst_153 : f32 to vector<8x64xf32>
    %205 = arith.addf %204, %203 : vector<8x64xf32>
    %206 = arith.divf %204, %205 : vector<8x64xf32>
    %207 = arith.mulf %200, %194 : vector<8x64xf32>
    %208 = arith.addf %179, %207 : vector<8x64xf32>
    %209 = math.tanh %208 : vector<8x64xf32>
    %cst_154 = arith.constant 1.000000e+00 : f32
    %210 = vector.broadcast %cst_154 : f32 to vector<8x64xf32>
    %211 = arith.subf %210, %206 : vector<8x64xf32>
    %212 = arith.mulf %211, %209 : vector<8x64xf32>
    %213 = arith.mulf %206, %168 : vector<8x64xf32>
    %214 = arith.addf %212, %213 : vector<8x64xf32>
    %c24_155 = arith.constant 24 : index
    %c0_156 = arith.constant 0 : index
    %215 = vector.load %arg34[%c24_155, %c0_156] : memref<64x64xf32, #tpu.memory_space<vmem>>, vector<8x64xf32>
    tpu.vector_store %arg34[%c24_155, %c0_156], %214 {strides = array<i32>} : memref<64x64xf32, #tpu.memory_space<vmem>>, vector<8x64xf32>,
    %c32_157 = arith.constant 32 : index
    %c0_158 = arith.constant 0 : index
    %216 = vector.load %arg35[%c32_157, %c0_158] : memref<64x64xf32, #tpu.memory_space<vmem>>, vector<8x64xf32>
    tpu.vector_store %arg35[%c32_157, %c0_158], %214 {strides = array<i32>} : memref<64x64xf32, #tpu.memory_space<vmem>>, vector<8x64xf32>,
    %c32_159 = arith.constant 32 : index
    %c0_160 = arith.constant 0 : index
    %217 = vector.load %arg31[%c32_159, %c0_160] : memref<64x64xf32, #tpu.memory_space<vmem>>, vector<8x64xf32>
    %c24_161 = arith.constant 24 : index
    %c0_162 = arith.constant 0 : index
    %218 = vector.load %arg31[%c24_161, %c0_162] : memref<64x64xf32, #tpu.memory_space<vmem>>, vector<8x64xf32>
    %219 = arith.select %13, %217, %218 : vector<8x64xi1>, vector<8x64xf32>
    %c32_163 = arith.constant 32 : index
    %c0_164 = arith.constant 0 : index
    %220 = vector.load %arg32[%c32_163, %c0_164] : memref<64x64xf32, #tpu.memory_space<vmem>>, vector<8x64xf32>
    %c24_165 = arith.constant 24 : index
    %c0_166 = arith.constant 0 : index
    %221 = vector.load %arg32[%c24_165, %c0_166] : memref<64x64xf32, #tpu.memory_space<vmem>>, vector<8x64xf32>
    %222 = arith.select %13, %220, %221 : vector<8x64xi1>, vector<8x64xf32>
    %c32_167 = arith.constant 32 : index
    %c0_168 = arith.constant 0 : index
    %223 = vector.load %arg33[%c32_167, %c0_168] : memref<64x64xf32, #tpu.memory_space<vmem>>, vector<8x64xf32>
    %c24_169 = arith.constant 24 : index
    %c0_170 = arith.constant 0 : index
    %224 = vector.load %arg33[%c24_169, %c0_170] : memref<64x64xf32, #tpu.memory_space<vmem>>, vector<8x64xf32>
    %225 = arith.select %13, %223, %224 : vector<8x64xi1>, vector<8x64xf32>
    %c0_171 = arith.constant 0 : index
    %c0_172 = arith.constant 0 : index
    %226 = vector.load %arg7[%c0_171, %c0_172] : memref<64x64xf32, #tpu.memory_space<vmem>>, vector<64x64xf32>
    %cst_173 = arith.constant dense<0.000000e+00> : vector<8x64xf32>
    %227 = tpu.matmul %214, %226, %cst_173 {dimension_numbers = #tpu.dot_dimension_numbers<[1], [0], [0], [1], [0, 0, 1, 1], [], []>} : vector<8x64xf32>, vector<64x64xf32>, vector<8x64xf32> -> vector<8x64xf32>
    %c0_174 = arith.constant 0 : index
    %c0_175 = arith.constant 0 : index
    %228 = vector.load %arg13[%c0_174, %c0_175] : memref<1x64xf32, #tpu.memory_space<vmem>>, vector<1x64xf32>
    %229 = vector.broadcast %228 : vector<1x64xf32> to vector<8x64xf32>
    %230 = arith.addf %227, %229 : vector<8x64xf32>
    %c0_176 = arith.constant 0 : index
    %c0_177 = arith.constant 0 : index
    %231 = vector.load %arg8[%c0_176, %c0_177] : memref<64x64xf32, #tpu.memory_space<vmem>>, vector<64x64xf32>
    %cst_178 = arith.constant dense<0.000000e+00> : vector<8x64xf32>
    %232 = tpu.matmul %214, %231, %cst_178 {dimension_numbers = #tpu.dot_dimension_numbers<[1], [0], [0], [1], [0, 0, 1, 1], [], []>} : vector<8x64xf32>, vector<64x64xf32>, vector<8x64xf32> -> vector<8x64xf32>
    %c0_179 = arith.constant 0 : index
    %c0_180 = arith.constant 0 : index
    %233 = vector.load %arg14[%c0_179, %c0_180] : memref<1x64xf32, #tpu.memory_space<vmem>>, vector<1x64xf32>
    %234 = vector.broadcast %233 : vector<1x64xf32> to vector<8x64xf32>
    %235 = arith.addf %232, %234 : vector<8x64xf32>
    %c0_181 = arith.constant 0 : index
    %c0_182 = arith.constant 0 : index
    %236 = vector.load %arg9[%c0_181, %c0_182] : memref<64x64xf32, #tpu.memory_space<vmem>>, vector<64x64xf32>
    %cst_183 = arith.constant dense<0.000000e+00> : vector<8x64xf32>
    %237 = tpu.matmul %214, %236, %cst_183 {dimension_numbers = #tpu.dot_dimension_numbers<[1], [0], [0], [1], [0, 0, 1, 1], [], []>} : vector<8x64xf32>, vector<64x64xf32>, vector<8x64xf32> -> vector<8x64xf32>
    %c0_184 = arith.constant 0 : index
    %c0_185 = arith.constant 0 : index
    %238 = vector.load %arg15[%c0_184, %c0_185] : memref<1x64xf32, #tpu.memory_space<vmem>>, vector<1x64xf32>
    %239 = vector.broadcast %238 : vector<1x64xf32> to vector<8x64xf32>
    %240 = arith.addf %237, %239 : vector<8x64xf32>
    %241 = arith.addf %219, %230 : vector<8x64xf32>
    %242 = arith.negf %241 : vector<8x64xf32>
    %243 = math.exp %242 : vector<8x64xf32>
    %cst_186 = arith.constant 1.000000e+00 : f32
    %244 = vector.broadcast %cst_186 : f32 to vector<8x64xf32>
    %245 = arith.addf %244, %243 : vector<8x64xf32>
    %246 = arith.divf %244, %245 : vector<8x64xf32>
    %247 = arith.addf %222, %235 : vector<8x64xf32>
    %248 = arith.negf %247 : vector<8x64xf32>
    %249 = math.exp %248 : vector<8x64xf32>
    %cst_187 = arith.constant 1.000000e+00 : f32
    %250 = vector.broadcast %cst_187 : f32 to vector<8x64xf32>
    %251 = arith.addf %250, %249 : vector<8x64xf32>
    %252 = arith.divf %250, %251 : vector<8x64xf32>
    %253 = arith.mulf %246, %240 : vector<8x64xf32>
    %254 = arith.addf %225, %253 : vector<8x64xf32>
    %255 = math.tanh %254 : vector<8x64xf32>
    %cst_188 = arith.constant 1.000000e+00 : f32
    %256 = vector.broadcast %cst_188 : f32 to vector<8x64xf32>
    %257 = arith.subf %256, %252 : vector<8x64xf32>
    %258 = arith.mulf %257, %255 : vector<8x64xf32>
    %259 = arith.mulf %252, %214 : vector<8x64xf32>
    %260 = arith.addf %258, %259 : vector<8x64xf32>
    %c32_189 = arith.constant 32 : index
    %c0_190 = arith.constant 0 : index
    %261 = vector.load %arg34[%c32_189, %c0_190] : memref<64x64xf32, #tpu.memory_space<vmem>>, vector<8x64xf32>
    tpu.vector_store %arg34[%c32_189, %c0_190], %260 {strides = array<i32>} : memref<64x64xf32, #tpu.memory_space<vmem>>, vector<8x64xf32>,
    %c24_191 = arith.constant 24 : index
    %c0_192 = arith.constant 0 : index
    %262 = vector.load %arg35[%c24_191, %c0_192] : memref<64x64xf32, #tpu.memory_space<vmem>>, vector<8x64xf32>
    tpu.vector_store %arg35[%c24_191, %c0_192], %260 {strides = array<i32>} : memref<64x64xf32, #tpu.memory_space<vmem>>, vector<8x64xf32>,
    %c40_193 = arith.constant 40 : index
    %c0_194 = arith.constant 0 : index
    %263 = vector.load %arg31[%c40_193, %c0_194] : memref<64x64xf32, #tpu.memory_space<vmem>>, vector<8x64xf32>
    %c16_195 = arith.constant 16 : index
    %c0_196 = arith.constant 0 : index
    %264 = vector.load %arg31[%c16_195, %c0_196] : memref<64x64xf32, #tpu.memory_space<vmem>>, vector<8x64xf32>
    %265 = arith.select %13, %263, %264 : vector<8x64xi1>, vector<8x64xf32>
    %c40_197 = arith.constant 40 : index
    %c0_198 = arith.constant 0 : index
    %266 = vector.load %arg32[%c40_197, %c0_198] : memref<64x64xf32, #tpu.memory_space<vmem>>, vector<8x64xf32>
    %c16_199 = arith.constant 16 : index
    %c0_200 = arith.constant 0 : index
    %267 = vector.load %arg32[%c16_199, %c0_200] : memref<64x64xf32, #tpu.memory_space<vmem>>, vector<8x64xf32>
    %268 = arith.select %13, %266, %267 : vector<8x64xi1>, vector<8x64xf32>
    %c40_201 = arith.constant 40 : index
    %c0_202 = arith.constant 0 : index
    %269 = vector.load %arg33[%c40_201, %c0_202] : memref<64x64xf32, #tpu.memory_space<vmem>>, vector<8x64xf32>
    %c16_203 = arith.constant 16 : index
    %c0_204 = arith.constant 0 : index
    %270 = vector.load %arg33[%c16_203, %c0_204] : memref<64x64xf32, #tpu.memory_space<vmem>>, vector<8x64xf32>
    %271 = arith.select %13, %269, %270 : vector<8x64xi1>, vector<8x64xf32>
    %c0_205 = arith.constant 0 : index
    %c0_206 = arith.constant 0 : index
    %272 = vector.load %arg7[%c0_205, %c0_206] : memref<64x64xf32, #tpu.memory_space<vmem>>, vector<64x64xf32>
    %cst_207 = arith.constant dense<0.000000e+00> : vector<8x64xf32>
    %273 = tpu.matmul %260, %272, %cst_207 {dimension_numbers = #tpu.dot_dimension_numbers<[1], [0], [0], [1], [0, 0, 1, 1], [], []>} : vector<8x64xf32>, vector<64x64xf32>, vector<8x64xf32> -> vector<8x64xf32>
    %c0_208 = arith.constant 0 : index
    %c0_209 = arith.constant 0 : index
    %274 = vector.load %arg13[%c0_208, %c0_209] : memref<1x64xf32, #tpu.memory_space<vmem>>, vector<1x64xf32>
    %275 = vector.broadcast %274 : vector<1x64xf32> to vector<8x64xf32>
    %276 = arith.addf %273, %275 : vector<8x64xf32>
    %c0_210 = arith.constant 0 : index
    %c0_211 = arith.constant 0 : index
    %277 = vector.load %arg8[%c0_210, %c0_211] : memref<64x64xf32, #tpu.memory_space<vmem>>, vector<64x64xf32>
    %cst_212 = arith.constant dense<0.000000e+00> : vector<8x64xf32>
    %278 = tpu.matmul %260, %277, %cst_212 {dimension_numbers = #tpu.dot_dimension_numbers<[1], [0], [0], [1], [0, 0, 1, 1], [], []>} : vector<8x64xf32>, vector<64x64xf32>, vector<8x64xf32> -> vector<8x64xf32>
    %c0_213 = arith.constant 0 : index
    %c0_214 = arith.constant 0 : index
    %279 = vector.load %arg14[%c0_213, %c0_214] : memref<1x64xf32, #tpu.memory_space<vmem>>, vector<1x64xf32>
    %280 = vector.broadcast %279 : vector<1x64xf32> to vector<8x64xf32>
    %281 = arith.addf %278, %280 : vector<8x64xf32>
    %c0_215 = arith.constant 0 : index
    %c0_216 = arith.constant 0 : index
    %282 = vector.load %arg9[%c0_215, %c0_216] : memref<64x64xf32, #tpu.memory_space<vmem>>, vector<64x64xf32>
    %cst_217 = arith.constant dense<0.000000e+00> : vector<8x64xf32>
    %283 = tpu.matmul %260, %282, %cst_217 {dimension_numbers = #tpu.dot_dimension_numbers<[1], [0], [0], [1], [0, 0, 1, 1], [], []>} : vector<8x64xf32>, vector<64x64xf32>, vector<8x64xf32> -> vector<8x64xf32>
    %c0_218 = arith.constant 0 : index
    %c0_219 = arith.constant 0 : index
    %284 = vector.load %arg15[%c0_218, %c0_219] : memref<1x64xf32, #tpu.memory_space<vmem>>, vector<1x64xf32>
    %285 = vector.broadcast %284 : vector<1x64xf32> to vector<8x64xf32>
    %286 = arith.addf %283, %285 : vector<8x64xf32>
    %287 = arith.addf %265, %276 : vector<8x64xf32>
    %288 = arith.negf %287 : vector<8x64xf32>
    %289 = math.exp %288 : vector<8x64xf32>
    %cst_220 = arith.constant 1.000000e+00 : f32
    %290 = vector.broadcast %cst_220 : f32 to vector<8x64xf32>
    %291 = arith.addf %290, %289 : vector<8x64xf32>
    %292 = arith.divf %290, %291 : vector<8x64xf32>
    %293 = arith.addf %268, %281 : vector<8x64xf32>
    %294 = arith.negf %293 : vector<8x64xf32>
    %295 = math.exp %294 : vector<8x64xf32>
    %cst_221 = arith.constant 1.000000e+00 : f32
    %296 = vector.broadcast %cst_221 : f32 to vector<8x64xf32>
    %297 = arith.addf %296, %295 : vector<8x64xf32>
    %298 = arith.divf %296, %297 : vector<8x64xf32>
    %299 = arith.mulf %292, %286 : vector<8x64xf32>
    %300 = arith.addf %271, %299 : vector<8x64xf32>
    %301 = math.tanh %300 : vector<8x64xf32>
    %cst_222 = arith.constant 1.000000e+00 : f32
    %302 = vector.broadcast %cst_222 : f32 to vector<8x64xf32>
    %303 = arith.subf %302, %298 : vector<8x64xf32>
    %304 = arith.mulf %303, %301 : vector<8x64xf32>
    %305 = arith.mulf %298, %260 : vector<8x64xf32>
    %306 = arith.addf %304, %305 : vector<8x64xf32>
    %c40_223 = arith.constant 40 : index
    %c0_224 = arith.constant 0 : index
    %307 = vector.load %arg34[%c40_223, %c0_224] : memref<64x64xf32, #tpu.memory_space<vmem>>, vector<8x64xf32>
    tpu.vector_store %arg34[%c40_223, %c0_224], %306 {strides = array<i32>} : memref<64x64xf32, #tpu.memory_space<vmem>>, vector<8x64xf32>,
    %c16_225 = arith.constant 16 : index
    %c0_226 = arith.constant 0 : index
    %308 = vector.load %arg35[%c16_225, %c0_226] : memref<64x64xf32, #tpu.memory_space<vmem>>, vector<8x64xf32>
    tpu.vector_store %arg35[%c16_225, %c0_226], %306 {strides = array<i32>} : memref<64x64xf32, #tpu.memory_space<vmem>>, vector<8x64xf32>,
    %c48_227 = arith.constant 48 : index
    %c0_228 = arith.constant 0 : index
    %309 = vector.load %arg31[%c48_227, %c0_228] : memref<64x64xf32, #tpu.memory_space<vmem>>, vector<8x64xf32>
    %c8_229 = arith.constant 8 : index
    %c0_230 = arith.constant 0 : index
    %310 = vector.load %arg31[%c8_229, %c0_230] : memref<64x64xf32, #tpu.memory_space<vmem>>, vector<8x64xf32>
    %311 = arith.select %13, %309, %310 : vector<8x64xi1>, vector<8x64xf32>
    %c48_231 = arith.constant 48 : index
    %c0_232 = arith.constant 0 : index
    %312 = vector.load %arg32[%c48_231, %c0_232] : memref<64x64xf32, #tpu.memory_space<vmem>>, vector<8x64xf32>
    %c8_233 = arith.constant 8 : index
    %c0_234 = arith.constant 0 : index
    %313 = vector.load %arg32[%c8_233, %c0_234] : memref<64x64xf32, #tpu.memory_space<vmem>>, vector<8x64xf32>
    %314 = arith.select %13, %312, %313 : vector<8x64xi1>, vector<8x64xf32>
    %c48_235 = arith.constant 48 : index
    %c0_236 = arith.constant 0 : index
    %315 = vector.load %arg33[%c48_235, %c0_236] : memref<64x64xf32, #tpu.memory_space<vmem>>, vector<8x64xf32>
    %c8_237 = arith.constant 8 : index
    %c0_238 = arith.constant 0 : index
    %316 = vector.load %arg33[%c8_237, %c0_238] : memref<64x64xf32, #tpu.memory_space<vmem>>, vector<8x64xf32>
    %317 = arith.select %13, %315, %316 : vector<8x64xi1>, vector<8x64xf32>
    %c0_239 = arith.constant 0 : index
    %c0_240 = arith.constant 0 : index
    %318 = vector.load %arg7[%c0_239, %c0_240] : memref<64x64xf32, #tpu.memory_space<vmem>>, vector<64x64xf32>
    %cst_241 = arith.constant dense<0.000000e+00> : vector<8x64xf32>
    %319 = tpu.matmul %306, %318, %cst_241 {dimension_numbers = #tpu.dot_dimension_numbers<[1], [0], [0], [1], [0, 0, 1, 1], [], []>} : vector<8x64xf32>, vector<64x64xf32>, vector<8x64xf32> -> vector<8x64xf32>
    %c0_242 = arith.constant 0 : index
    %c0_243 = arith.constant 0 : index
    %320 = vector.load %arg13[%c0_242, %c0_243] : memref<1x64xf32, #tpu.memory_space<vmem>>, vector<1x64xf32>
    %321 = vector.broadcast %320 : vector<1x64xf32> to vector<8x64xf32>
    %322 = arith.addf %319, %321 : vector<8x64xf32>
    %c0_244 = arith.constant 0 : index
    %c0_245 = arith.constant 0 : index
    %323 = vector.load %arg8[%c0_244, %c0_245] : memref<64x64xf32, #tpu.memory_space<vmem>>, vector<64x64xf32>
    %cst_246 = arith.constant dense<0.000000e+00> : vector<8x64xf32>
    %324 = tpu.matmul %306, %323, %cst_246 {dimension_numbers = #tpu.dot_dimension_numbers<[1], [0], [0], [1], [0, 0, 1, 1], [], []>} : vector<8x64xf32>, vector<64x64xf32>, vector<8x64xf32> -> vector<8x64xf32>
    %c0_247 = arith.constant 0 : index
    %c0_248 = arith.constant 0 : index
    %325 = vector.load %arg14[%c0_247, %c0_248] : memref<1x64xf32, #tpu.memory_space<vmem>>, vector<1x64xf32>
    %326 = vector.broadcast %325 : vector<1x64xf32> to vector<8x64xf32>
    %327 = arith.addf %324, %326 : vector<8x64xf32>
    %c0_249 = arith.constant 0 : index
    %c0_250 = arith.constant 0 : index
    %328 = vector.load %arg9[%c0_249, %c0_250] : memref<64x64xf32, #tpu.memory_space<vmem>>, vector<64x64xf32>
    %cst_251 = arith.constant dense<0.000000e+00> : vector<8x64xf32>
    %329 = tpu.matmul %306, %328, %cst_251 {dimension_numbers = #tpu.dot_dimension_numbers<[1], [0], [0], [1], [0, 0, 1, 1], [], []>} : vector<8x64xf32>, vector<64x64xf32>, vector<8x64xf32> -> vector<8x64xf32>
    %c0_252 = arith.constant 0 : index
    %c0_253 = arith.constant 0 : index
    %330 = vector.load %arg15[%c0_252, %c0_253] : memref<1x64xf32, #tpu.memory_space<vmem>>, vector<1x64xf32>
    %331 = vector.broadcast %330 : vector<1x64xf32> to vector<8x64xf32>
    %332 = arith.addf %329, %331 : vector<8x64xf32>
    %333 = arith.addf %311, %322 : vector<8x64xf32>
    %334 = arith.negf %333 : vector<8x64xf32>
    %335 = math.exp %334 : vector<8x64xf32>
    %cst_254 = arith.constant 1.000000e+00 : f32
    %336 = vector.broadcast %cst_254 : f32 to vector<8x64xf32>
    %337 = arith.addf %336, %335 : vector<8x64xf32>
    %338 = arith.divf %336, %337 : vector<8x64xf32>
    %339 = arith.addf %314, %327 : vector<8x64xf32>
    %340 = arith.negf %339 : vector<8x64xf32>
    %341 = math.exp %340 : vector<8x64xf32>
    %cst_255 = arith.constant 1.000000e+00 : f32
    %342 = vector.broadcast %cst_255 : f32 to vector<8x64xf32>
    %343 = arith.addf %342, %341 : vector<8x64xf32>
    %344 = arith.divf %342, %343 : vector<8x64xf32>
    %345 = arith.mulf %338, %332 : vector<8x64xf32>
    %346 = arith.addf %317, %345 : vector<8x64xf32>
    %347 = math.tanh %346 : vector<8x64xf32>
    %cst_256 = arith.constant 1.000000e+00 : f32
    %348 = vector.broadcast %cst_256 : f32 to vector<8x64xf32>
    %349 = arith.subf %348, %344 : vector<8x64xf32>
    %350 = arith.mulf %349, %347 : vector<8x64xf32>
    %351 = arith.mulf %344, %306 : vector<8x64xf32>
    %352 = arith.addf %350, %351 : vector<8x64xf32>
    %c48_257 = arith.constant 48 : index
    %c0_258 = arith.constant 0 : index
    %353 = vector.load %arg34[%c48_257, %c0_258] : memref<64x64xf32, #tpu.memory_space<vmem>>, vector<8x64xf32>
    tpu.vector_store %arg34[%c48_257, %c0_258], %352 {strides = array<i32>} : memref<64x64xf32, #tpu.memory_space<vmem>>, vector<8x64xf32>,
    %c8_259 = arith.constant 8 : index
    %c0_260 = arith.constant 0 : index
    %354 = vector.load %arg35[%c8_259, %c0_260] : memref<64x64xf32, #tpu.memory_space<vmem>>, vector<8x64xf32>
    tpu.vector_store %arg35[%c8_259, %c0_260], %352 {strides = array<i32>} : memref<64x64xf32, #tpu.memory_space<vmem>>, vector<8x64xf32>,
    %c56_261 = arith.constant 56 : index
    %c0_262 = arith.constant 0 : index
    %355 = vector.load %arg31[%c56_261, %c0_262] : memref<64x64xf32, #tpu.memory_space<vmem>>, vector<8x64xf32>
    %c0_263 = arith.constant 0 : index
    %c0_264 = arith.constant 0 : index
    %356 = vector.load %arg31[%c0_263, %c0_264] : memref<64x64xf32, #tpu.memory_space<vmem>>, vector<8x64xf32>
    %357 = arith.select %13, %355, %356 : vector<8x64xi1>, vector<8x64xf32>
    %c56_265 = arith.constant 56 : index
    %c0_266 = arith.constant 0 : index
    %358 = vector.load %arg32[%c56_265, %c0_266] : memref<64x64xf32, #tpu.memory_space<vmem>>, vector<8x64xf32>
    %c0_267 = arith.constant 0 : index
    %c0_268 = arith.constant 0 : index
    %359 = vector.load %arg32[%c0_267, %c0_268] : memref<64x64xf32, #tpu.memory_space<vmem>>, vector<8x64xf32>
    %360 = arith.select %13, %358, %359 : vector<8x64xi1>, vector<8x64xf32>
    %c56_269 = arith.constant 56 : index
    %c0_270 = arith.constant 0 : index
    %361 = vector.load %arg33[%c56_269, %c0_270] : memref<64x64xf32, #tpu.memory_space<vmem>>, vector<8x64xf32>
    %c0_271 = arith.constant 0 : index
    %c0_272 = arith.constant 0 : index
    %362 = vector.load %arg33[%c0_271, %c0_272] : memref<64x64xf32, #tpu.memory_space<vmem>>, vector<8x64xf32>
    %363 = arith.select %13, %361, %362 : vector<8x64xi1>, vector<8x64xf32>
    %c0_273 = arith.constant 0 : index
    %c0_274 = arith.constant 0 : index
    %364 = vector.load %arg7[%c0_273, %c0_274] : memref<64x64xf32, #tpu.memory_space<vmem>>, vector<64x64xf32>
    %cst_275 = arith.constant dense<0.000000e+00> : vector<8x64xf32>
    %365 = tpu.matmul %352, %364, %cst_275 {dimension_numbers = #tpu.dot_dimension_numbers<[1], [0], [0], [1], [0, 0, 1, 1], [], []>} : vector<8x64xf32>, vector<64x64xf32>, vector<8x64xf32> -> vector<8x64xf32>
    %c0_276 = arith.constant 0 : index
    %c0_277 = arith.constant 0 : index
    %366 = vector.load %arg13[%c0_276, %c0_277] : memref<1x64xf32, #tpu.memory_space<vmem>>, vector<1x64xf32>
    %367 = vector.broadcast %366 : vector<1x64xf32> to vector<8x64xf32>
    %368 = arith.addf %365, %367 : vector<8x64xf32>
    %c0_278 = arith.constant 0 : index
    %c0_279 = arith.constant 0 : index
    %369 = vector.load %arg8[%c0_278, %c0_279] : memref<64x64xf32, #tpu.memory_space<vmem>>, vector<64x64xf32>
    %cst_280 = arith.constant dense<0.000000e+00> : vector<8x64xf32>
    %370 = tpu.matmul %352, %369, %cst_280 {dimension_numbers = #tpu.dot_dimension_numbers<[1], [0], [0], [1], [0, 0, 1, 1], [], []>} : vector<8x64xf32>, vector<64x64xf32>, vector<8x64xf32> -> vector<8x64xf32>
    %c0_281 = arith.constant 0 : index
    %c0_282 = arith.constant 0 : index
    %371 = vector.load %arg14[%c0_281, %c0_282] : memref<1x64xf32, #tpu.memory_space<vmem>>, vector<1x64xf32>
    %372 = vector.broadcast %371 : vector<1x64xf32> to vector<8x64xf32>
    %373 = arith.addf %370, %372 : vector<8x64xf32>
    %c0_283 = arith.constant 0 : index
    %c0_284 = arith.constant 0 : index
    %374 = vector.load %arg9[%c0_283, %c0_284] : memref<64x64xf32, #tpu.memory_space<vmem>>, vector<64x64xf32>
    %cst_285 = arith.constant dense<0.000000e+00> : vector<8x64xf32>
    %375 = tpu.matmul %352, %374, %cst_285 {dimension_numbers = #tpu.dot_dimension_numbers<[1], [0], [0], [1], [0, 0, 1, 1], [], []>} : vector<8x64xf32>, vector<64x64xf32>, vector<8x64xf32> -> vector<8x64xf32>
    %c0_286 = arith.constant 0 : index
    %c0_287 = arith.constant 0 : index
    %376 = vector.load %arg15[%c0_286, %c0_287] : memref<1x64xf32, #tpu.memory_space<vmem>>, vector<1x64xf32>
    %377 = vector.broadcast %376 : vector<1x64xf32> to vector<8x64xf32>
    %378 = arith.addf %375, %377 : vector<8x64xf32>
    %379 = arith.addf %357, %368 : vector<8x64xf32>
    %380 = arith.negf %379 : vector<8x64xf32>
    %381 = math.exp %380 : vector<8x64xf32>
    %cst_288 = arith.constant 1.000000e+00 : f32
    %382 = vector.broadcast %cst_288 : f32 to vector<8x64xf32>
    %383 = arith.addf %382, %381 : vector<8x64xf32>
    %384 = arith.divf %382, %383 : vector<8x64xf32>
    %385 = arith.addf %360, %373 : vector<8x64xf32>
    %386 = arith.negf %385 : vector<8x64xf32>
    %387 = math.exp %386 : vector<8x64xf32>
    %cst_289 = arith.constant 1.000000e+00 : f32
    %388 = vector.broadcast %cst_289 : f32 to vector<8x64xf32>
    %389 = arith.addf %388, %387 : vector<8x64xf32>
    %390 = arith.divf %388, %389 : vector<8x64xf32>
    %391 = arith.mulf %384, %378 : vector<8x64xf32>
    %392 = arith.addf %363, %391 : vector<8x64xf32>
    %393 = math.tanh %392 : vector<8x64xf32>
    %cst_290 = arith.constant 1.000000e+00 : f32
    %394 = vector.broadcast %cst_290 : f32 to vector<8x64xf32>
    %395 = arith.subf %394, %390 : vector<8x64xf32>
    %396 = arith.mulf %395, %393 : vector<8x64xf32>
    %397 = arith.mulf %390, %352 : vector<8x64xf32>
    %398 = arith.addf %396, %397 : vector<8x64xf32>
    %c56_291 = arith.constant 56 : index
    %c0_292 = arith.constant 0 : index
    %399 = vector.load %arg34[%c56_291, %c0_292] : memref<64x64xf32, #tpu.memory_space<vmem>>, vector<8x64xf32>
    tpu.vector_store %arg34[%c56_291, %c0_292], %398 {strides = array<i32>} : memref<64x64xf32, #tpu.memory_space<vmem>>, vector<8x64xf32>,
    %c0_293 = arith.constant 0 : index
    %c0_294 = arith.constant 0 : index
    %400 = vector.load %arg35[%c0_293, %c0_294] : memref<64x64xf32, #tpu.memory_space<vmem>>, vector<8x64xf32>
    tpu.vector_store %arg35[%c0_293, %c0_294], %398 {strides = array<i32>} : memref<64x64xf32, #tpu.memory_space<vmem>>, vector<8x64xf32>,
    %401 = tpu.iota {dimensions = array<i32: 1>} : vector<64x64xi32>
    %c32_i32_295 = arith.constant 32 : i32
    %402 = vector.broadcast %c32_i32_295 : i32 to vector<64x64xi32>
    %403 = arith.cmpi slt, %401, %402 : vector<64x64xi32>
    %c0_296 = arith.constant 0 : index
    %c0_297 = arith.constant 0 : index
    %404 = vector.load %arg34[%c0_296, %c0_297] : memref<64x64xf32, #tpu.memory_space<vmem>>, vector<64x64xf32>
    %c0_298 = arith.constant 0 : index
    %c0_299 = arith.constant 0 : index
    %405 = vector.load %arg35[%c0_298, %c0_299] : memref<64x64xf32, #tpu.memory_space<vmem>>, vector<64x64xf32>
    %406 = arith.select %403, %404, %405 : vector<64x64xi1>, vector<64x64xf32>
    %c0_300 = arith.constant 0 : index
    %c0_301 = arith.constant 0 : index
    %407 = vector.load %arg16[%c0_300, %c0_301] : memref<64x64xf32, #tpu.memory_space<vmem>>, vector<64x64xf32>
    %cst_302 = arith.constant dense<0.000000e+00> : vector<64x64xf32>
    %408 = tpu.matmul %406, %407, %cst_302 {dimension_numbers = #tpu.dot_dimension_numbers<[1], [0], [0], [1], [0, 0, 1, 1], [], []>} : vector<64x64xf32>, vector<64x64xf32>, vector<64x64xf32> -> vector<64x64xf32>
    %c0_303 = arith.constant 0 : index
    %c0_304 = arith.constant 0 : index
    %409 = vector.load %arg22[%c0_303, %c0_304] : memref<1x64xf32, #tpu.memory_space<vmem>>, vector<1x64xf32>
    %410 = vector.broadcast %409 : vector<1x64xf32> to vector<64x64xf32>
    %411 = arith.addf %408, %410 : vector<64x64xf32>
    %c0_305 = arith.constant 0 : index
    %c0_306 = arith.constant 0 : index
    %412 = vector.load %arg31[%c0_305, %c0_306] : memref<64x64xf32, #tpu.memory_space<vmem>>, vector<64x64xf32>
    tpu.vector_store %arg31[%c0_305, %c0_306], %411 {strides = array<i32>} : memref<64x64xf32, #tpu.memory_space<vmem>>, vector<64x64xf32>,
    %c0_307 = arith.constant 0 : index
    %c0_308 = arith.constant 0 : index
    %413 = vector.load %arg17[%c0_307, %c0_308] : memref<64x64xf32, #tpu.memory_space<vmem>>, vector<64x64xf32>
    %cst_309 = arith.constant dense<0.000000e+00> : vector<64x64xf32>
    %414 = tpu.matmul %406, %413, %cst_309 {dimension_numbers = #tpu.dot_dimension_numbers<[1], [0], [0], [1], [0, 0, 1, 1], [], []>} : vector<64x64xf32>, vector<64x64xf32>, vector<64x64xf32> -> vector<64x64xf32>
    %c0_310 = arith.constant 0 : index
    %c0_311 = arith.constant 0 : index
    %415 = vector.load %arg23[%c0_310, %c0_311] : memref<1x64xf32, #tpu.memory_space<vmem>>, vector<1x64xf32>
    %416 = vector.broadcast %415 : vector<1x64xf32> to vector<64x64xf32>
    %417 = arith.addf %414, %416 : vector<64x64xf32>
    %c0_312 = arith.constant 0 : index
    %c0_313 = arith.constant 0 : index
    %418 = vector.load %arg32[%c0_312, %c0_313] : memref<64x64xf32, #tpu.memory_space<vmem>>, vector<64x64xf32>
    tpu.vector_store %arg32[%c0_312, %c0_313], %417 {strides = array<i32>} : memref<64x64xf32, #tpu.memory_space<vmem>>, vector<64x64xf32>,
    %c0_314 = arith.constant 0 : index
    %c0_315 = arith.constant 0 : index
    %419 = vector.load %arg18[%c0_314, %c0_315] : memref<64x64xf32, #tpu.memory_space<vmem>>, vector<64x64xf32>
    %cst_316 = arith.constant dense<0.000000e+00> : vector<64x64xf32>
    %420 = tpu.matmul %406, %419, %cst_316 {dimension_numbers = #tpu.dot_dimension_numbers<[1], [0], [0], [1], [0, 0, 1, 1], [], []>} : vector<64x64xf32>, vector<64x64xf32>, vector<64x64xf32> -> vector<64x64xf32>
    %c0_317 = arith.constant 0 : index
    %c0_318 = arith.constant 0 : index
    %421 = vector.load %arg24[%c0_317, %c0_318] : memref<1x64xf32, #tpu.memory_space<vmem>>, vector<1x64xf32>
    %422 = vector.broadcast %421 : vector<1x64xf32> to vector<64x64xf32>
    %423 = arith.addf %420, %422 : vector<64x64xf32>
    %c0_319 = arith.constant 0 : index
    %c0_320 = arith.constant 0 : index
    %424 = vector.load %arg33[%c0_319, %c0_320] : memref<64x64xf32, #tpu.memory_space<vmem>>, vector<64x64xf32>
    tpu.vector_store %arg33[%c0_319, %c0_320], %423 {strides = array<i32>} : memref<64x64xf32, #tpu.memory_space<vmem>>, vector<64x64xf32>,
    %cst_321 = arith.constant 0.000000e+00 : f32
    %425 = vector.broadcast %cst_321 : f32 to vector<8x64xf32>
    %c0_322 = arith.constant 0 : index
    %c0_323 = arith.constant 0 : index
    %426 = vector.load %arg31[%c0_322, %c0_323] : memref<64x64xf32, #tpu.memory_space<vmem>>, vector<8x64xf32>
    %c56_324 = arith.constant 56 : index
    %c0_325 = arith.constant 0 : index
    %427 = vector.load %arg31[%c56_324, %c0_325] : memref<64x64xf32, #tpu.memory_space<vmem>>, vector<8x64xf32>
    %428 = arith.select %13, %426, %427 : vector<8x64xi1>, vector<8x64xf32>
    %c0_326 = arith.constant 0 : index
    %c0_327 = arith.constant 0 : index
    %429 = vector.load %arg32[%c0_326, %c0_327] : memref<64x64xf32, #tpu.memory_space<vmem>>, vector<8x64xf32>
    %c56_328 = arith.constant 56 : index
    %c0_329 = arith.constant 0 : index
    %430 = vector.load %arg32[%c56_328, %c0_329] : memref<64x64xf32, #tpu.memory_space<vmem>>, vector<8x64xf32>
    %431 = arith.select %13, %429, %430 : vector<8x64xi1>, vector<8x64xf32>
    %c0_330 = arith.constant 0 : index
    %c0_331 = arith.constant 0 : index
    %432 = vector.load %arg33[%c0_330, %c0_331] : memref<64x64xf32, #tpu.memory_space<vmem>>, vector<8x64xf32>
    %c56_332 = arith.constant 56 : index
    %c0_333 = arith.constant 0 : index
    %433 = vector.load %arg33[%c56_332, %c0_333] : memref<64x64xf32, #tpu.memory_space<vmem>>, vector<8x64xf32>
    %434 = arith.select %13, %432, %433 : vector<8x64xi1>, vector<8x64xf32>
    %c0_334 = arith.constant 0 : index
    %c0_335 = arith.constant 0 : index
    %435 = vector.load %arg19[%c0_334, %c0_335] : memref<64x64xf32, #tpu.memory_space<vmem>>, vector<64x64xf32>
    %cst_336 = arith.constant dense<0.000000e+00> : vector<8x64xf32>
    %436 = tpu.matmul %425, %435, %cst_336 {dimension_numbers = #tpu.dot_dimension_numbers<[1], [0], [0], [1], [0, 0, 1, 1], [], []>} : vector<8x64xf32>, vector<64x64xf32>, vector<8x64xf32> -> vector<8x64xf32>
    %c0_337 = arith.constant 0 : index
    %c0_338 = arith.constant 0 : index
    %437 = vector.load %arg25[%c0_337, %c0_338] : memref<1x64xf32, #tpu.memory_space<vmem>>, vector<1x64xf32>
    %438 = vector.broadcast %437 : vector<1x64xf32> to vector<8x64xf32>
    %439 = arith.addf %436, %438 : vector<8x64xf32>
    %c0_339 = arith.constant 0 : index
    %c0_340 = arith.constant 0 : index
    %440 = vector.load %arg20[%c0_339, %c0_340] : memref<64x64xf32, #tpu.memory_space<vmem>>, vector<64x64xf32>
    %cst_341 = arith.constant dense<0.000000e+00> : vector<8x64xf32>
    %441 = tpu.matmul %425, %440, %cst_341 {dimension_numbers = #tpu.dot_dimension_numbers<[1], [0], [0], [1], [0, 0, 1, 1], [], []>} : vector<8x64xf32>, vector<64x64xf32>, vector<8x64xf32> -> vector<8x64xf32>
    %c0_342 = arith.constant 0 : index
    %c0_343 = arith.constant 0 : index
    %442 = vector.load %arg26[%c0_342, %c0_343] : memref<1x64xf32, #tpu.memory_space<vmem>>, vector<1x64xf32>
    %443 = vector.broadcast %442 : vector<1x64xf32> to vector<8x64xf32>
    %444 = arith.addf %441, %443 : vector<8x64xf32>
    %c0_344 = arith.constant 0 : index
    %c0_345 = arith.constant 0 : index
    %445 = vector.load %arg21[%c0_344, %c0_345] : memref<64x64xf32, #tpu.memory_space<vmem>>, vector<64x64xf32>
    %cst_346 = arith.constant dense<0.000000e+00> : vector<8x64xf32>
    %446 = tpu.matmul %425, %445, %cst_346 {dimension_numbers = #tpu.dot_dimension_numbers<[1], [0], [0], [1], [0, 0, 1, 1], [], []>} : vector<8x64xf32>, vector<64x64xf32>, vector<8x64xf32> -> vector<8x64xf32>
    %c0_347 = arith.constant 0 : index
    %c0_348 = arith.constant 0 : index
    %447 = vector.load %arg27[%c0_347, %c0_348] : memref<1x64xf32, #tpu.memory_space<vmem>>, vector<1x64xf32>
    %448 = vector.broadcast %447 : vector<1x64xf32> to vector<8x64xf32>
    %449 = arith.addf %446, %448 : vector<8x64xf32>
    %450 = arith.addf %428, %439 : vector<8x64xf32>
    %451 = arith.negf %450 : vector<8x64xf32>
    %452 = math.exp %451 : vector<8x64xf32>
    %cst_349 = arith.constant 1.000000e+00 : f32
    %453 = vector.broadcast %cst_349 : f32 to vector<8x64xf32>
    %454 = arith.addf %453, %452 : vector<8x64xf32>
    %455 = arith.divf %453, %454 : vector<8x64xf32>
    %456 = arith.addf %431, %444 : vector<8x64xf32>
    %457 = arith.negf %456 : vector<8x64xf32>
    %458 = math.exp %457 : vector<8x64xf32>
    %cst_350 = arith.constant 1.000000e+00 : f32
    %459 = vector.broadcast %cst_350 : f32 to vector<8x64xf32>
    %460 = arith.addf %459, %458 : vector<8x64xf32>
    %461 = arith.divf %459, %460 : vector<8x64xf32>
    %462 = arith.mulf %455, %449 : vector<8x64xf32>
    %463 = arith.addf %434, %462 : vector<8x64xf32>
    %464 = math.tanh %463 : vector<8x64xf32>
    %cst_351 = arith.constant 1.000000e+00 : f32
    %465 = vector.broadcast %cst_351 : f32 to vector<8x64xf32>
    %466 = arith.subf %465, %461 : vector<8x64xf32>
    %467 = arith.mulf %466, %464 : vector<8x64xf32>
    %468 = arith.mulf %461, %425 : vector<8x64xf32>
    %469 = arith.addf %467, %468 : vector<8x64xf32>
    %c0_352 = arith.constant 0 : index
    %c0_353 = arith.constant 0 : index
    %470 = vector.load %arg34[%c0_352, %c0_353] : memref<64x64xf32, #tpu.memory_space<vmem>>, vector<8x64xf32>
    tpu.vector_store %arg34[%c0_352, %c0_353], %469 {strides = array<i32>} : memref<64x64xf32, #tpu.memory_space<vmem>>, vector<8x64xf32>,
    %c56_354 = arith.constant 56 : index
    %c0_355 = arith.constant 0 : index
    %471 = vector.load %arg35[%c56_354, %c0_355] : memref<64x64xf32, #tpu.memory_space<vmem>>, vector<8x64xf32>
    tpu.vector_store %arg35[%c56_354, %c0_355], %469 {strides = array<i32>} : memref<64x64xf32, #tpu.memory_space<vmem>>, vector<8x64xf32>,
    %c8_356 = arith.constant 8 : index
    %c0_357 = arith.constant 0 : index
    %472 = vector.load %arg31[%c8_356, %c0_357] : memref<64x64xf32, #tpu.memory_space<vmem>>, vector<8x64xf32>
    %c48_358 = arith.constant 48 : index
    %c0_359 = arith.constant 0 : index
    %473 = vector.load %arg31[%c48_358, %c0_359] : memref<64x64xf32, #tpu.memory_space<vmem>>, vector<8x64xf32>
    %474 = arith.select %13, %472, %473 : vector<8x64xi1>, vector<8x64xf32>
    %c8_360 = arith.constant 8 : index
    %c0_361 = arith.constant 0 : index
    %475 = vector.load %arg32[%c8_360, %c0_361] : memref<64x64xf32, #tpu.memory_space<vmem>>, vector<8x64xf32>
    %c48_362 = arith.constant 48 : index
    %c0_363 = arith.constant 0 : index
    %476 = vector.load %arg32[%c48_362, %c0_363] : memref<64x64xf32, #tpu.memory_space<vmem>>, vector<8x64xf32>
    %477 = arith.select %13, %475, %476 : vector<8x64xi1>, vector<8x64xf32>
    %c8_364 = arith.constant 8 : index
    %c0_365 = arith.constant 0 : index
    %478 = vector.load %arg33[%c8_364, %c0_365] : memref<64x64xf32, #tpu.memory_space<vmem>>, vector<8x64xf32>
    %c48_366 = arith.constant 48 : index
    %c0_367 = arith.constant 0 : index
    %479 = vector.load %arg33[%c48_366, %c0_367] : memref<64x64xf32, #tpu.memory_space<vmem>>, vector<8x64xf32>
    %480 = arith.select %13, %478, %479 : vector<8x64xi1>, vector<8x64xf32>
    %c0_368 = arith.constant 0 : index
    %c0_369 = arith.constant 0 : index
    %481 = vector.load %arg19[%c0_368, %c0_369] : memref<64x64xf32, #tpu.memory_space<vmem>>, vector<64x64xf32>
    %cst_370 = arith.constant dense<0.000000e+00> : vector<8x64xf32>
    %482 = tpu.matmul %469, %481, %cst_370 {dimension_numbers = #tpu.dot_dimension_numbers<[1], [0], [0], [1], [0, 0, 1, 1], [], []>} : vector<8x64xf32>, vector<64x64xf32>, vector<8x64xf32> -> vector<8x64xf32>
    %c0_371 = arith.constant 0 : index
    %c0_372 = arith.constant 0 : index
    %483 = vector.load %arg25[%c0_371, %c0_372] : memref<1x64xf32, #tpu.memory_space<vmem>>, vector<1x64xf32>
    %484 = vector.broadcast %483 : vector<1x64xf32> to vector<8x64xf32>
    %485 = arith.addf %482, %484 : vector<8x64xf32>
    %c0_373 = arith.constant 0 : index
    %c0_374 = arith.constant 0 : index
    %486 = vector.load %arg20[%c0_373, %c0_374] : memref<64x64xf32, #tpu.memory_space<vmem>>, vector<64x64xf32>
    %cst_375 = arith.constant dense<0.000000e+00> : vector<8x64xf32>
    %487 = tpu.matmul %469, %486, %cst_375 {dimension_numbers = #tpu.dot_dimension_numbers<[1], [0], [0], [1], [0, 0, 1, 1], [], []>} : vector<8x64xf32>, vector<64x64xf32>, vector<8x64xf32> -> vector<8x64xf32>
    %c0_376 = arith.constant 0 : index
    %c0_377 = arith.constant 0 : index
    %488 = vector.load %arg26[%c0_376, %c0_377] : memref<1x64xf32, #tpu.memory_space<vmem>>, vector<1x64xf32>
    %489 = vector.broadcast %488 : vector<1x64xf32> to vector<8x64xf32>
    %490 = arith.addf %487, %489 : vector<8x64xf32>
    %c0_378 = arith.constant 0 : index
    %c0_379 = arith.constant 0 : index
    %491 = vector.load %arg21[%c0_378, %c0_379] : memref<64x64xf32, #tpu.memory_space<vmem>>, vector<64x64xf32>
    %cst_380 = arith.constant dense<0.000000e+00> : vector<8x64xf32>
    %492 = tpu.matmul %469, %491, %cst_380 {dimension_numbers = #tpu.dot_dimension_numbers<[1], [0], [0], [1], [0, 0, 1, 1], [], []>} : vector<8x64xf32>, vector<64x64xf32>, vector<8x64xf32> -> vector<8x64xf32>
    %c0_381 = arith.constant 0 : index
    %c0_382 = arith.constant 0 : index
    %493 = vector.load %arg27[%c0_381, %c0_382] : memref<1x64xf32, #tpu.memory_space<vmem>>, vector<1x64xf32>
    %494 = vector.broadcast %493 : vector<1x64xf32> to vector<8x64xf32>
    %495 = arith.addf %492, %494 : vector<8x64xf32>
    %496 = arith.addf %474, %485 : vector<8x64xf32>
    %497 = arith.negf %496 : vector<8x64xf32>
    %498 = math.exp %497 : vector<8x64xf32>
    %cst_383 = arith.constant 1.000000e+00 : f32
    %499 = vector.broadcast %cst_383 : f32 to vector<8x64xf32>
    %500 = arith.addf %499, %498 : vector<8x64xf32>
    %501 = arith.divf %499, %500 : vector<8x64xf32>
    %502 = arith.addf %477, %490 : vector<8x64xf32>
    %503 = arith.negf %502 : vector<8x64xf32>
    %504 = math.exp %503 : vector<8x64xf32>
    %cst_384 = arith.constant 1.000000e+00 : f32
    %505 = vector.broadcast %cst_384 : f32 to vector<8x64xf32>
    %506 = arith.addf %505, %504 : vector<8x64xf32>
    %507 = arith.divf %505, %506 : vector<8x64xf32>
    %508 = arith.mulf %501, %495 : vector<8x64xf32>
    %509 = arith.addf %480, %508 : vector<8x64xf32>
    %510 = math.tanh %509 : vector<8x64xf32>
    %cst_385 = arith.constant 1.000000e+00 : f32
    %511 = vector.broadcast %cst_385 : f32 to vector<8x64xf32>
    %512 = arith.subf %511, %507 : vector<8x64xf32>
    %513 = arith.mulf %512, %510 : vector<8x64xf32>
    %514 = arith.mulf %507, %469 : vector<8x64xf32>
    %515 = arith.addf %513, %514 : vector<8x64xf32>
    %c8_386 = arith.constant 8 : index
    %c0_387 = arith.constant 0 : index
    %516 = vector.load %arg34[%c8_386, %c0_387] : memref<64x64xf32, #tpu.memory_space<vmem>>, vector<8x64xf32>
    tpu.vector_store %arg34[%c8_386, %c0_387], %515 {strides = array<i32>} : memref<64x64xf32, #tpu.memory_space<vmem>>, vector<8x64xf32>,
    %c48_388 = arith.constant 48 : index
    %c0_389 = arith.constant 0 : index
    %517 = vector.load %arg35[%c48_388, %c0_389] : memref<64x64xf32, #tpu.memory_space<vmem>>, vector<8x64xf32>
    tpu.vector_store %arg35[%c48_388, %c0_389], %515 {strides = array<i32>} : memref<64x64xf32, #tpu.memory_space<vmem>>, vector<8x64xf32>,
    %c16_390 = arith.constant 16 : index
    %c0_391 = arith.constant 0 : index
    %518 = vector.load %arg31[%c16_390, %c0_391] : memref<64x64xf32, #tpu.memory_space<vmem>>, vector<8x64xf32>
    %c40_392 = arith.constant 40 : index
    %c0_393 = arith.constant 0 : index
    %519 = vector.load %arg31[%c40_392, %c0_393] : memref<64x64xf32, #tpu.memory_space<vmem>>, vector<8x64xf32>
    %520 = arith.select %13, %518, %519 : vector<8x64xi1>, vector<8x64xf32>
    %c16_394 = arith.constant 16 : index
    %c0_395 = arith.constant 0 : index
    %521 = vector.load %arg32[%c16_394, %c0_395] : memref<64x64xf32, #tpu.memory_space<vmem>>, vector<8x64xf32>
    %c40_396 = arith.constant 40 : index
    %c0_397 = arith.constant 0 : index
    %522 = vector.load %arg32[%c40_396, %c0_397] : memref<64x64xf32, #tpu.memory_space<vmem>>, vector<8x64xf32>
    %523 = arith.select %13, %521, %522 : vector<8x64xi1>, vector<8x64xf32>
    %c16_398 = arith.constant 16 : index
    %c0_399 = arith.constant 0 : index
    %524 = vector.load %arg33[%c16_398, %c0_399] : memref<64x64xf32, #tpu.memory_space<vmem>>, vector<8x64xf32>
    %c40_400 = arith.constant 40 : index
    %c0_401 = arith.constant 0 : index
    %525 = vector.load %arg33[%c40_400, %c0_401] : memref<64x64xf32, #tpu.memory_space<vmem>>, vector<8x64xf32>
    %526 = arith.select %13, %524, %525 : vector<8x64xi1>, vector<8x64xf32>
    %c0_402 = arith.constant 0 : index
    %c0_403 = arith.constant 0 : index
    %527 = vector.load %arg19[%c0_402, %c0_403] : memref<64x64xf32, #tpu.memory_space<vmem>>, vector<64x64xf32>
    %cst_404 = arith.constant dense<0.000000e+00> : vector<8x64xf32>
    %528 = tpu.matmul %515, %527, %cst_404 {dimension_numbers = #tpu.dot_dimension_numbers<[1], [0], [0], [1], [0, 0, 1, 1], [], []>} : vector<8x64xf32>, vector<64x64xf32>, vector<8x64xf32> -> vector<8x64xf32>
    %c0_405 = arith.constant 0 : index
    %c0_406 = arith.constant 0 : index
    %529 = vector.load %arg25[%c0_405, %c0_406] : memref<1x64xf32, #tpu.memory_space<vmem>>, vector<1x64xf32>
    %530 = vector.broadcast %529 : vector<1x64xf32> to vector<8x64xf32>
    %531 = arith.addf %528, %530 : vector<8x64xf32>
    %c0_407 = arith.constant 0 : index
    %c0_408 = arith.constant 0 : index
    %532 = vector.load %arg20[%c0_407, %c0_408] : memref<64x64xf32, #tpu.memory_space<vmem>>, vector<64x64xf32>
    %cst_409 = arith.constant dense<0.000000e+00> : vector<8x64xf32>
    %533 = tpu.matmul %515, %532, %cst_409 {dimension_numbers = #tpu.dot_dimension_numbers<[1], [0], [0], [1], [0, 0, 1, 1], [], []>} : vector<8x64xf32>, vector<64x64xf32>, vector<8x64xf32> -> vector<8x64xf32>
    %c0_410 = arith.constant 0 : index
    %c0_411 = arith.constant 0 : index
    %534 = vector.load %arg26[%c0_410, %c0_411] : memref<1x64xf32, #tpu.memory_space<vmem>>, vector<1x64xf32>
    %535 = vector.broadcast %534 : vector<1x64xf32> to vector<8x64xf32>
    %536 = arith.addf %533, %535 : vector<8x64xf32>
    %c0_412 = arith.constant 0 : index
    %c0_413 = arith.constant 0 : index
    %537 = vector.load %arg21[%c0_412, %c0_413] : memref<64x64xf32, #tpu.memory_space<vmem>>, vector<64x64xf32>
    %cst_414 = arith.constant dense<0.000000e+00> : vector<8x64xf32>
    %538 = tpu.matmul %515, %537, %cst_414 {dimension_numbers = #tpu.dot_dimension_numbers<[1], [0], [0], [1], [0, 0, 1, 1], [], []>} : vector<8x64xf32>, vector<64x64xf32>, vector<8x64xf32> -> vector<8x64xf32>
    %c0_415 = arith.constant 0 : index
    %c0_416 = arith.constant 0 : index
    %539 = vector.load %arg27[%c0_415, %c0_416] : memref<1x64xf32, #tpu.memory_space<vmem>>, vector<1x64xf32>
    %540 = vector.broadcast %539 : vector<1x64xf32> to vector<8x64xf32>
    %541 = arith.addf %538, %540 : vector<8x64xf32>
    %542 = arith.addf %520, %531 : vector<8x64xf32>
    %543 = arith.negf %542 : vector<8x64xf32>
    %544 = math.exp %543 : vector<8x64xf32>
    %cst_417 = arith.constant 1.000000e+00 : f32
    %545 = vector.broadcast %cst_417 : f32 to vector<8x64xf32>
    %546 = arith.addf %545, %544 : vector<8x64xf32>
    %547 = arith.divf %545, %546 : vector<8x64xf32>
    %548 = arith.addf %523, %536 : vector<8x64xf32>
    %549 = arith.negf %548 : vector<8x64xf32>
    %550 = math.exp %549 : vector<8x64xf32>
    %cst_418 = arith.constant 1.000000e+00 : f32
    %551 = vector.broadcast %cst_418 : f32 to vector<8x64xf32>
    %552 = arith.addf %551, %550 : vector<8x64xf32>
    %553 = arith.divf %551, %552 : vector<8x64xf32>
    %554 = arith.mulf %547, %541 : vector<8x64xf32>
    %555 = arith.addf %526, %554 : vector<8x64xf32>
    %556 = math.tanh %555 : vector<8x64xf32>
    %cst_419 = arith.constant 1.000000e+00 : f32
    %557 = vector.broadcast %cst_419 : f32 to vector<8x64xf32>
    %558 = arith.subf %557, %553 : vector<8x64xf32>
    %559 = arith.mulf %558, %556 : vector<8x64xf32>
    %560 = arith.mulf %553, %515 : vector<8x64xf32>
    %561 = arith.addf %559, %560 : vector<8x64xf32>
    %c16_420 = arith.constant 16 : index
    %c0_421 = arith.constant 0 : index
    %562 = vector.load %arg34[%c16_420, %c0_421] : memref<64x64xf32, #tpu.memory_space<vmem>>, vector<8x64xf32>
    tpu.vector_store %arg34[%c16_420, %c0_421], %561 {strides = array<i32>} : memref<64x64xf32, #tpu.memory_space<vmem>>, vector<8x64xf32>,
    %c40_422 = arith.constant 40 : index
    %c0_423 = arith.constant 0 : index
    %563 = vector.load %arg35[%c40_422, %c0_423] : memref<64x64xf32, #tpu.memory_space<vmem>>, vector<8x64xf32>
    tpu.vector_store %arg35[%c40_422, %c0_423], %561 {strides = array<i32>} : memref<64x64xf32, #tpu.memory_space<vmem>>, vector<8x64xf32>,
    %c24_424 = arith.constant 24 : index
    %c0_425 = arith.constant 0 : index
    %564 = vector.load %arg31[%c24_424, %c0_425] : memref<64x64xf32, #tpu.memory_space<vmem>>, vector<8x64xf32>
    %c32_426 = arith.constant 32 : index
    %c0_427 = arith.constant 0 : index
    %565 = vector.load %arg31[%c32_426, %c0_427] : memref<64x64xf32, #tpu.memory_space<vmem>>, vector<8x64xf32>
    %566 = arith.select %13, %564, %565 : vector<8x64xi1>, vector<8x64xf32>
    %c24_428 = arith.constant 24 : index
    %c0_429 = arith.constant 0 : index
    %567 = vector.load %arg32[%c24_428, %c0_429] : memref<64x64xf32, #tpu.memory_space<vmem>>, vector<8x64xf32>
    %c32_430 = arith.constant 32 : index
    %c0_431 = arith.constant 0 : index
    %568 = vector.load %arg32[%c32_430, %c0_431] : memref<64x64xf32, #tpu.memory_space<vmem>>, vector<8x64xf32>
    %569 = arith.select %13, %567, %568 : vector<8x64xi1>, vector<8x64xf32>
    %c24_432 = arith.constant 24 : index
    %c0_433 = arith.constant 0 : index
    %570 = vector.load %arg33[%c24_432, %c0_433] : memref<64x64xf32, #tpu.memory_space<vmem>>, vector<8x64xf32>
    %c32_434 = arith.constant 32 : index
    %c0_435 = arith.constant 0 : index
    %571 = vector.load %arg33[%c32_434, %c0_435] : memref<64x64xf32, #tpu.memory_space<vmem>>, vector<8x64xf32>
    %572 = arith.select %13, %570, %571 : vector<8x64xi1>, vector<8x64xf32>
    %c0_436 = arith.constant 0 : index
    %c0_437 = arith.constant 0 : index
    %573 = vector.load %arg19[%c0_436, %c0_437] : memref<64x64xf32, #tpu.memory_space<vmem>>, vector<64x64xf32>
    %cst_438 = arith.constant dense<0.000000e+00> : vector<8x64xf32>
    %574 = tpu.matmul %561, %573, %cst_438 {dimension_numbers = #tpu.dot_dimension_numbers<[1], [0], [0], [1], [0, 0, 1, 1], [], []>} : vector<8x64xf32>, vector<64x64xf32>, vector<8x64xf32> -> vector<8x64xf32>
    %c0_439 = arith.constant 0 : index
    %c0_440 = arith.constant 0 : index
    %575 = vector.load %arg25[%c0_439, %c0_440] : memref<1x64xf32, #tpu.memory_space<vmem>>, vector<1x64xf32>
    %576 = vector.broadcast %575 : vector<1x64xf32> to vector<8x64xf32>
    %577 = arith.addf %574, %576 : vector<8x64xf32>
    %c0_441 = arith.constant 0 : index
    %c0_442 = arith.constant 0 : index
    %578 = vector.load %arg20[%c0_441, %c0_442] : memref<64x64xf32, #tpu.memory_space<vmem>>, vector<64x64xf32>
    %cst_443 = arith.constant dense<0.000000e+00> : vector<8x64xf32>
    %579 = tpu.matmul %561, %578, %cst_443 {dimension_numbers = #tpu.dot_dimension_numbers<[1], [0], [0], [1], [0, 0, 1, 1], [], []>} : vector<8x64xf32>, vector<64x64xf32>, vector<8x64xf32> -> vector<8x64xf32>
    %c0_444 = arith.constant 0 : index
    %c0_445 = arith.constant 0 : index
    %580 = vector.load %arg26[%c0_444, %c0_445] : memref<1x64xf32, #tpu.memory_space<vmem>>, vector<1x64xf32>
    %581 = vector.broadcast %580 : vector<1x64xf32> to vector<8x64xf32>
    %582 = arith.addf %579, %581 : vector<8x64xf32>
    %c0_446 = arith.constant 0 : index
    %c0_447 = arith.constant 0 : index
    %583 = vector.load %arg21[%c0_446, %c0_447] : memref<64x64xf32, #tpu.memory_space<vmem>>, vector<64x64xf32>
    %cst_448 = arith.constant dense<0.000000e+00> : vector<8x64xf32>
    %584 = tpu.matmul %561, %583, %cst_448 {dimension_numbers = #tpu.dot_dimension_numbers<[1], [0], [0], [1], [0, 0, 1, 1], [], []>} : vector<8x64xf32>, vector<64x64xf32>, vector<8x64xf32> -> vector<8x64xf32>
    %c0_449 = arith.constant 0 : index
    %c0_450 = arith.constant 0 : index
    %585 = vector.load %arg27[%c0_449, %c0_450] : memref<1x64xf32, #tpu.memory_space<vmem>>, vector<1x64xf32>
    %586 = vector.broadcast %585 : vector<1x64xf32> to vector<8x64xf32>
    %587 = arith.addf %584, %586 : vector<8x64xf32>
    %588 = arith.addf %566, %577 : vector<8x64xf32>
    %589 = arith.negf %588 : vector<8x64xf32>
    %590 = math.exp %589 : vector<8x64xf32>
    %cst_451 = arith.constant 1.000000e+00 : f32
    %591 = vector.broadcast %cst_451 : f32 to vector<8x64xf32>
    %592 = arith.addf %591, %590 : vector<8x64xf32>
    %593 = arith.divf %591, %592 : vector<8x64xf32>
    %594 = arith.addf %569, %582 : vector<8x64xf32>
    %595 = arith.negf %594 : vector<8x64xf32>
    %596 = math.exp %595 : vector<8x64xf32>
    %cst_452 = arith.constant 1.000000e+00 : f32
    %597 = vector.broadcast %cst_452 : f32 to vector<8x64xf32>
    %598 = arith.addf %597, %596 : vector<8x64xf32>
    %599 = arith.divf %597, %598 : vector<8x64xf32>
    %600 = arith.mulf %593, %587 : vector<8x64xf32>
    %601 = arith.addf %572, %600 : vector<8x64xf32>
    %602 = math.tanh %601 : vector<8x64xf32>
    %cst_453 = arith.constant 1.000000e+00 : f32
    %603 = vector.broadcast %cst_453 : f32 to vector<8x64xf32>
    %604 = arith.subf %603, %599 : vector<8x64xf32>
    %605 = arith.mulf %604, %602 : vector<8x64xf32>
    %606 = arith.mulf %599, %561 : vector<8x64xf32>
    %607 = arith.addf %605, %606 : vector<8x64xf32>
    %c24_454 = arith.constant 24 : index
    %c0_455 = arith.constant 0 : index
    %608 = vector.load %arg34[%c24_454, %c0_455] : memref<64x64xf32, #tpu.memory_space<vmem>>, vector<8x64xf32>
    tpu.vector_store %arg34[%c24_454, %c0_455], %607 {strides = array<i32>} : memref<64x64xf32, #tpu.memory_space<vmem>>, vector<8x64xf32>,
    %c32_456 = arith.constant 32 : index
    %c0_457 = arith.constant 0 : index
    %609 = vector.load %arg35[%c32_456, %c0_457] : memref<64x64xf32, #tpu.memory_space<vmem>>, vector<8x64xf32>
    tpu.vector_store %arg35[%c32_456, %c0_457], %607 {strides = array<i32>} : memref<64x64xf32, #tpu.memory_space<vmem>>, vector<8x64xf32>,
    %c32_458 = arith.constant 32 : index
    %c0_459 = arith.constant 0 : index
    %610 = vector.load %arg31[%c32_458, %c0_459] : memref<64x64xf32, #tpu.memory_space<vmem>>, vector<8x64xf32>
    %c24_460 = arith.constant 24 : index
    %c0_461 = arith.constant 0 : index
    %611 = vector.load %arg31[%c24_460, %c0_461] : memref<64x64xf32, #tpu.memory_space<vmem>>, vector<8x64xf32>
    %612 = arith.select %13, %610, %611 : vector<8x64xi1>, vector<8x64xf32>
    %c32_462 = arith.constant 32 : index
    %c0_463 = arith.constant 0 : index
    %613 = vector.load %arg32[%c32_462, %c0_463] : memref<64x64xf32, #tpu.memory_space<vmem>>, vector<8x64xf32>
    %c24_464 = arith.constant 24 : index
    %c0_465 = arith.constant 0 : index
    %614 = vector.load %arg32[%c24_464, %c0_465] : memref<64x64xf32, #tpu.memory_space<vmem>>, vector<8x64xf32>
    %615 = arith.select %13, %613, %614 : vector<8x64xi1>, vector<8x64xf32>
    %c32_466 = arith.constant 32 : index
    %c0_467 = arith.constant 0 : index
    %616 = vector.load %arg33[%c32_466, %c0_467] : memref<64x64xf32, #tpu.memory_space<vmem>>, vector<8x64xf32>
    %c24_468 = arith.constant 24 : index
    %c0_469 = arith.constant 0 : index
    %617 = vector.load %arg33[%c24_468, %c0_469] : memref<64x64xf32, #tpu.memory_space<vmem>>, vector<8x64xf32>
    %618 = arith.select %13, %616, %617 : vector<8x64xi1>, vector<8x64xf32>
    %c0_470 = arith.constant 0 : index
    %c0_471 = arith.constant 0 : index
    %619 = vector.load %arg19[%c0_470, %c0_471] : memref<64x64xf32, #tpu.memory_space<vmem>>, vector<64x64xf32>
    %cst_472 = arith.constant dense<0.000000e+00> : vector<8x64xf32>
    %620 = tpu.matmul %607, %619, %cst_472 {dimension_numbers = #tpu.dot_dimension_numbers<[1], [0], [0], [1], [0, 0, 1, 1], [], []>} : vector<8x64xf32>, vector<64x64xf32>, vector<8x64xf32> -> vector<8x64xf32>
    %c0_473 = arith.constant 0 : index
    %c0_474 = arith.constant 0 : index
    %621 = vector.load %arg25[%c0_473, %c0_474] : memref<1x64xf32, #tpu.memory_space<vmem>>, vector<1x64xf32>
    %622 = vector.broadcast %621 : vector<1x64xf32> to vector<8x64xf32>
    %623 = arith.addf %620, %622 : vector<8x64xf32>
    %c0_475 = arith.constant 0 : index
    %c0_476 = arith.constant 0 : index
    %624 = vector.load %arg20[%c0_475, %c0_476] : memref<64x64xf32, #tpu.memory_space<vmem>>, vector<64x64xf32>
    %cst_477 = arith.constant dense<0.000000e+00> : vector<8x64xf32>
    %625 = tpu.matmul %607, %624, %cst_477 {dimension_numbers = #tpu.dot_dimension_numbers<[1], [0], [0], [1], [0, 0, 1, 1], [], []>} : vector<8x64xf32>, vector<64x64xf32>, vector<8x64xf32> -> vector<8x64xf32>
    %c0_478 = arith.constant 0 : index
    %c0_479 = arith.constant 0 : index
    %626 = vector.load %arg26[%c0_478, %c0_479] : memref<1x64xf32, #tpu.memory_space<vmem>>, vector<1x64xf32>
    %627 = vector.broadcast %626 : vector<1x64xf32> to vector<8x64xf32>
    %628 = arith.addf %625, %627 : vector<8x64xf32>
    %c0_480 = arith.constant 0 : index
    %c0_481 = arith.constant 0 : index
    %629 = vector.load %arg21[%c0_480, %c0_481] : memref<64x64xf32, #tpu.memory_space<vmem>>, vector<64x64xf32>
    %cst_482 = arith.constant dense<0.000000e+00> : vector<8x64xf32>
    %630 = tpu.matmul %607, %629, %cst_482 {dimension_numbers = #tpu.dot_dimension_numbers<[1], [0], [0], [1], [0, 0, 1, 1], [], []>} : vector<8x64xf32>, vector<64x64xf32>, vector<8x64xf32> -> vector<8x64xf32>
    %c0_483 = arith.constant 0 : index
    %c0_484 = arith.constant 0 : index
    %631 = vector.load %arg27[%c0_483, %c0_484] : memref<1x64xf32, #tpu.memory_space<vmem>>, vector<1x64xf32>
    %632 = vector.broadcast %631 : vector<1x64xf32> to vector<8x64xf32>
    %633 = arith.addf %630, %632 : vector<8x64xf32>
    %634 = arith.addf %612, %623 : vector<8x64xf32>
    %635 = arith.negf %634 : vector<8x64xf32>
    %636 = math.exp %635 : vector<8x64xf32>
    %cst_485 = arith.constant 1.000000e+00 : f32
    %637 = vector.broadcast %cst_485 : f32 to vector<8x64xf32>
    %638 = arith.addf %637, %636 : vector<8x64xf32>
    %639 = arith.divf %637, %638 : vector<8x64xf32>
    %640 = arith.addf %615, %628 : vector<8x64xf32>
    %641 = arith.negf %640 : vector<8x64xf32>
    %642 = math.exp %641 : vector<8x64xf32>
    %cst_486 = arith.constant 1.000000e+00 : f32
    %643 = vector.broadcast %cst_486 : f32 to vector<8x64xf32>
    %644 = arith.addf %643, %642 : vector<8x64xf32>
    %645 = arith.divf %643, %644 : vector<8x64xf32>
    %646 = arith.mulf %639, %633 : vector<8x64xf32>
    %647 = arith.addf %618, %646 : vector<8x64xf32>
    %648 = math.tanh %647 : vector<8x64xf32>
    %cst_487 = arith.constant 1.000000e+00 : f32
    %649 = vector.broadcast %cst_487 : f32 to vector<8x64xf32>
    %650 = arith.subf %649, %645 : vector<8x64xf32>
    %651 = arith.mulf %650, %648 : vector<8x64xf32>
    %652 = arith.mulf %645, %607 : vector<8x64xf32>
    %653 = arith.addf %651, %652 : vector<8x64xf32>
    %c32_488 = arith.constant 32 : index
    %c0_489 = arith.constant 0 : index
    %654 = vector.load %arg34[%c32_488, %c0_489] : memref<64x64xf32, #tpu.memory_space<vmem>>, vector<8x64xf32>
    tpu.vector_store %arg34[%c32_488, %c0_489], %653 {strides = array<i32>} : memref<64x64xf32, #tpu.memory_space<vmem>>, vector<8x64xf32>,
    %c24_490 = arith.constant 24 : index
    %c0_491 = arith.constant 0 : index
    %655 = vector.load %arg35[%c24_490, %c0_491] : memref<64x64xf32, #tpu.memory_space<vmem>>, vector<8x64xf32>
    tpu.vector_store %arg35[%c24_490, %c0_491], %653 {strides = array<i32>} : memref<64x64xf32, #tpu.memory_space<vmem>>, vector<8x64xf32>,
    %c40_492 = arith.constant 40 : index
    %c0_493 = arith.constant 0 : index
    %656 = vector.load %arg31[%c40_492, %c0_493] : memref<64x64xf32, #tpu.memory_space<vmem>>, vector<8x64xf32>
    %c16_494 = arith.constant 16 : index
    %c0_495 = arith.constant 0 : index
    %657 = vector.load %arg31[%c16_494, %c0_495] : memref<64x64xf32, #tpu.memory_space<vmem>>, vector<8x64xf32>
    %658 = arith.select %13, %656, %657 : vector<8x64xi1>, vector<8x64xf32>
    %c40_496 = arith.constant 40 : index
    %c0_497 = arith.constant 0 : index
    %659 = vector.load %arg32[%c40_496, %c0_497] : memref<64x64xf32, #tpu.memory_space<vmem>>, vector<8x64xf32>
    %c16_498 = arith.constant 16 : index
    %c0_499 = arith.constant 0 : index
    %660 = vector.load %arg32[%c16_498, %c0_499] : memref<64x64xf32, #tpu.memory_space<vmem>>, vector<8x64xf32>
    %661 = arith.select %13, %659, %660 : vector<8x64xi1>, vector<8x64xf32>
    %c40_500 = arith.constant 40 : index
    %c0_501 = arith.constant 0 : index
    %662 = vector.load %arg33[%c40_500, %c0_501] : memref<64x64xf32, #tpu.memory_space<vmem>>, vector<8x64xf32>
    %c16_502 = arith.constant 16 : index
    %c0_503 = arith.constant 0 : index
    %663 = vector.load %arg33[%c16_502, %c0_503] : memref<64x64xf32, #tpu.memory_space<vmem>>, vector<8x64xf32>
    %664 = arith.select %13, %662, %663 : vector<8x64xi1>, vector<8x64xf32>
    %c0_504 = arith.constant 0 : index
    %c0_505 = arith.constant 0 : index
    %665 = vector.load %arg19[%c0_504, %c0_505] : memref<64x64xf32, #tpu.memory_space<vmem>>, vector<64x64xf32>
    %cst_506 = arith.constant dense<0.000000e+00> : vector<8x64xf32>
    %666 = tpu.matmul %653, %665, %cst_506 {dimension_numbers = #tpu.dot_dimension_numbers<[1], [0], [0], [1], [0, 0, 1, 1], [], []>} : vector<8x64xf32>, vector<64x64xf32>, vector<8x64xf32> -> vector<8x64xf32>
    %c0_507 = arith.constant 0 : index
    %c0_508 = arith.constant 0 : index
    %667 = vector.load %arg25[%c0_507, %c0_508] : memref<1x64xf32, #tpu.memory_space<vmem>>, vector<1x64xf32>
    %668 = vector.broadcast %667 : vector<1x64xf32> to vector<8x64xf32>
    %669 = arith.addf %666, %668 : vector<8x64xf32>
    %c0_509 = arith.constant 0 : index
    %c0_510 = arith.constant 0 : index
    %670 = vector.load %arg20[%c0_509, %c0_510] : memref<64x64xf32, #tpu.memory_space<vmem>>, vector<64x64xf32>
    %cst_511 = arith.constant dense<0.000000e+00> : vector<8x64xf32>
    %671 = tpu.matmul %653, %670, %cst_511 {dimension_numbers = #tpu.dot_dimension_numbers<[1], [0], [0], [1], [0, 0, 1, 1], [], []>} : vector<8x64xf32>, vector<64x64xf32>, vector<8x64xf32> -> vector<8x64xf32>
    %c0_512 = arith.constant 0 : index
    %c0_513 = arith.constant 0 : index
    %672 = vector.load %arg26[%c0_512, %c0_513] : memref<1x64xf32, #tpu.memory_space<vmem>>, vector<1x64xf32>
    %673 = vector.broadcast %672 : vector<1x64xf32> to vector<8x64xf32>
    %674 = arith.addf %671, %673 : vector<8x64xf32>
    %c0_514 = arith.constant 0 : index
    %c0_515 = arith.constant 0 : index
    %675 = vector.load %arg21[%c0_514, %c0_515] : memref<64x64xf32, #tpu.memory_space<vmem>>, vector<64x64xf32>
    %cst_516 = arith.constant dense<0.000000e+00> : vector<8x64xf32>
    %676 = tpu.matmul %653, %675, %cst_516 {dimension_numbers = #tpu.dot_dimension_numbers<[1], [0], [0], [1], [0, 0, 1, 1], [], []>} : vector<8x64xf32>, vector<64x64xf32>, vector<8x64xf32> -> vector<8x64xf32>
    %c0_517 = arith.constant 0 : index
    %c0_518 = arith.constant 0 : index
    %677 = vector.load %arg27[%c0_517, %c0_518] : memref<1x64xf32, #tpu.memory_space<vmem>>, vector<1x64xf32>
    %678 = vector.broadcast %677 : vector<1x64xf32> to vector<8x64xf32>
    %679 = arith.addf %676, %678 : vector<8x64xf32>
    %680 = arith.addf %658, %669 : vector<8x64xf32>
    %681 = arith.negf %680 : vector<8x64xf32>
    %682 = math.exp %681 : vector<8x64xf32>
    %cst_519 = arith.constant 1.000000e+00 : f32
    %683 = vector.broadcast %cst_519 : f32 to vector<8x64xf32>
    %684 = arith.addf %683, %682 : vector<8x64xf32>
    %685 = arith.divf %683, %684 : vector<8x64xf32>
    %686 = arith.addf %661, %674 : vector<8x64xf32>
    %687 = arith.negf %686 : vector<8x64xf32>
    %688 = math.exp %687 : vector<8x64xf32>
    %cst_520 = arith.constant 1.000000e+00 : f32
    %689 = vector.broadcast %cst_520 : f32 to vector<8x64xf32>
    %690 = arith.addf %689, %688 : vector<8x64xf32>
    %691 = arith.divf %689, %690 : vector<8x64xf32>
    %692 = arith.mulf %685, %679 : vector<8x64xf32>
    %693 = arith.addf %664, %692 : vector<8x64xf32>
    %694 = math.tanh %693 : vector<8x64xf32>
    %cst_521 = arith.constant 1.000000e+00 : f32
    %695 = vector.broadcast %cst_521 : f32 to vector<8x64xf32>
    %696 = arith.subf %695, %691 : vector<8x64xf32>
    %697 = arith.mulf %696, %694 : vector<8x64xf32>
    %698 = arith.mulf %691, %653 : vector<8x64xf32>
    %699 = arith.addf %697, %698 : vector<8x64xf32>
    %c40_522 = arith.constant 40 : index
    %c0_523 = arith.constant 0 : index
    %700 = vector.load %arg34[%c40_522, %c0_523] : memref<64x64xf32, #tpu.memory_space<vmem>>, vector<8x64xf32>
    tpu.vector_store %arg34[%c40_522, %c0_523], %699 {strides = array<i32>} : memref<64x64xf32, #tpu.memory_space<vmem>>, vector<8x64xf32>,
    %c16_524 = arith.constant 16 : index
    %c0_525 = arith.constant 0 : index
    %701 = vector.load %arg35[%c16_524, %c0_525] : memref<64x64xf32, #tpu.memory_space<vmem>>, vector<8x64xf32>
    tpu.vector_store %arg35[%c16_524, %c0_525], %699 {strides = array<i32>} : memref<64x64xf32, #tpu.memory_space<vmem>>, vector<8x64xf32>,
    %c48_526 = arith.constant 48 : index
    %c0_527 = arith.constant 0 : index
    %702 = vector.load %arg31[%c48_526, %c0_527] : memref<64x64xf32, #tpu.memory_space<vmem>>, vector<8x64xf32>
    %c8_528 = arith.constant 8 : index
    %c0_529 = arith.constant 0 : index
    %703 = vector.load %arg31[%c8_528, %c0_529] : memref<64x64xf32, #tpu.memory_space<vmem>>, vector<8x64xf32>
    %704 = arith.select %13, %702, %703 : vector<8x64xi1>, vector<8x64xf32>
    %c48_530 = arith.constant 48 : index
    %c0_531 = arith.constant 0 : index
    %705 = vector.load %arg32[%c48_530, %c0_531] : memref<64x64xf32, #tpu.memory_space<vmem>>, vector<8x64xf32>
    %c8_532 = arith.constant 8 : index
    %c0_533 = arith.constant 0 : index
    %706 = vector.load %arg32[%c8_532, %c0_533] : memref<64x64xf32, #tpu.memory_space<vmem>>, vector<8x64xf32>
    %707 = arith.select %13, %705, %706 : vector<8x64xi1>, vector<8x64xf32>
    %c48_534 = arith.constant 48 : index
    %c0_535 = arith.constant 0 : index
    %708 = vector.load %arg33[%c48_534, %c0_535] : memref<64x64xf32, #tpu.memory_space<vmem>>, vector<8x64xf32>
    %c8_536 = arith.constant 8 : index
    %c0_537 = arith.constant 0 : index
    %709 = vector.load %arg33[%c8_536, %c0_537] : memref<64x64xf32, #tpu.memory_space<vmem>>, vector<8x64xf32>
    %710 = arith.select %13, %708, %709 : vector<8x64xi1>, vector<8x64xf32>
    %c0_538 = arith.constant 0 : index
    %c0_539 = arith.constant 0 : index
    %711 = vector.load %arg19[%c0_538, %c0_539] : memref<64x64xf32, #tpu.memory_space<vmem>>, vector<64x64xf32>
    %cst_540 = arith.constant dense<0.000000e+00> : vector<8x64xf32>
    %712 = tpu.matmul %699, %711, %cst_540 {dimension_numbers = #tpu.dot_dimension_numbers<[1], [0], [0], [1], [0, 0, 1, 1], [], []>} : vector<8x64xf32>, vector<64x64xf32>, vector<8x64xf32> -> vector<8x64xf32>
    %c0_541 = arith.constant 0 : index
    %c0_542 = arith.constant 0 : index
    %713 = vector.load %arg25[%c0_541, %c0_542] : memref<1x64xf32, #tpu.memory_space<vmem>>, vector<1x64xf32>
    %714 = vector.broadcast %713 : vector<1x64xf32> to vector<8x64xf32>
    %715 = arith.addf %712, %714 : vector<8x64xf32>
    %c0_543 = arith.constant 0 : index
    %c0_544 = arith.constant 0 : index
    %716 = vector.load %arg20[%c0_543, %c0_544] : memref<64x64xf32, #tpu.memory_space<vmem>>, vector<64x64xf32>
    %cst_545 = arith.constant dense<0.000000e+00> : vector<8x64xf32>
    %717 = tpu.matmul %699, %716, %cst_545 {dimension_numbers = #tpu.dot_dimension_numbers<[1], [0], [0], [1], [0, 0, 1, 1], [], []>} : vector<8x64xf32>, vector<64x64xf32>, vector<8x64xf32> -> vector<8x64xf32>
    %c0_546 = arith.constant 0 : index
    %c0_547 = arith.constant 0 : index
    %718 = vector.load %arg26[%c0_546, %c0_547] : memref<1x64xf32, #tpu.memory_space<vmem>>, vector<1x64xf32>
    %719 = vector.broadcast %718 : vector<1x64xf32> to vector<8x64xf32>
    %720 = arith.addf %717, %719 : vector<8x64xf32>
    %c0_548 = arith.constant 0 : index
    %c0_549 = arith.constant 0 : index
    %721 = vector.load %arg21[%c0_548, %c0_549] : memref<64x64xf32, #tpu.memory_space<vmem>>, vector<64x64xf32>
    %cst_550 = arith.constant dense<0.000000e+00> : vector<8x64xf32>
    %722 = tpu.matmul %699, %721, %cst_550 {dimension_numbers = #tpu.dot_dimension_numbers<[1], [0], [0], [1], [0, 0, 1, 1], [], []>} : vector<8x64xf32>, vector<64x64xf32>, vector<8x64xf32> -> vector<8x64xf32>
    %c0_551 = arith.constant 0 : index
    %c0_552 = arith.constant 0 : index
    %723 = vector.load %arg27[%c0_551, %c0_552] : memref<1x64xf32, #tpu.memory_space<vmem>>, vector<1x64xf32>
    %724 = vector.broadcast %723 : vector<1x64xf32> to vector<8x64xf32>
    %725 = arith.addf %722, %724 : vector<8x64xf32>
    %726 = arith.addf %704, %715 : vector<8x64xf32>
    %727 = arith.negf %726 : vector<8x64xf32>
    %728 = math.exp %727 : vector<8x64xf32>
    %cst_553 = arith.constant 1.000000e+00 : f32
    %729 = vector.broadcast %cst_553 : f32 to vector<8x64xf32>
    %730 = arith.addf %729, %728 : vector<8x64xf32>
    %731 = arith.divf %729, %730 : vector<8x64xf32>
    %732 = arith.addf %707, %720 : vector<8x64xf32>
    %733 = arith.negf %732 : vector<8x64xf32>
    %734 = math.exp %733 : vector<8x64xf32>
    %cst_554 = arith.constant 1.000000e+00 : f32
    %735 = vector.broadcast %cst_554 : f32 to vector<8x64xf32>
    %736 = arith.addf %735, %734 : vector<8x64xf32>
    %737 = arith.divf %735, %736 : vector<8x64xf32>
    %738 = arith.mulf %731, %725 : vector<8x64xf32>
    %739 = arith.addf %710, %738 : vector<8x64xf32>
    %740 = math.tanh %739 : vector<8x64xf32>
    %cst_555 = arith.constant 1.000000e+00 : f32
    %741 = vector.broadcast %cst_555 : f32 to vector<8x64xf32>
    %742 = arith.subf %741, %737 : vector<8x64xf32>
    %743 = arith.mulf %742, %740 : vector<8x64xf32>
    %744 = arith.mulf %737, %699 : vector<8x64xf32>
    %745 = arith.addf %743, %744 : vector<8x64xf32>
    %c48_556 = arith.constant 48 : index
    %c0_557 = arith.constant 0 : index
    %746 = vector.load %arg34[%c48_556, %c0_557] : memref<64x64xf32, #tpu.memory_space<vmem>>, vector<8x64xf32>
    tpu.vector_store %arg34[%c48_556, %c0_557], %745 {strides = array<i32>} : memref<64x64xf32, #tpu.memory_space<vmem>>, vector<8x64xf32>,
    %c8_558 = arith.constant 8 : index
    %c0_559 = arith.constant 0 : index
    %747 = vector.load %arg35[%c8_558, %c0_559] : memref<64x64xf32, #tpu.memory_space<vmem>>, vector<8x64xf32>
    tpu.vector_store %arg35[%c8_558, %c0_559], %745 {strides = array<i32>} : memref<64x64xf32, #tpu.memory_space<vmem>>, vector<8x64xf32>,
    %c56_560 = arith.constant 56 : index
    %c0_561 = arith.constant 0 : index
    %748 = vector.load %arg31[%c56_560, %c0_561] : memref<64x64xf32, #tpu.memory_space<vmem>>, vector<8x64xf32>
    %c0_562 = arith.constant 0 : index
    %c0_563 = arith.constant 0 : index
    %749 = vector.load %arg31[%c0_562, %c0_563] : memref<64x64xf32, #tpu.memory_space<vmem>>, vector<8x64xf32>
    %750 = arith.select %13, %748, %749 : vector<8x64xi1>, vector<8x64xf32>
    %c56_564 = arith.constant 56 : index
    %c0_565 = arith.constant 0 : index
    %751 = vector.load %arg32[%c56_564, %c0_565] : memref<64x64xf32, #tpu.memory_space<vmem>>, vector<8x64xf32>
    %c0_566 = arith.constant 0 : index
    %c0_567 = arith.constant 0 : index
    %752 = vector.load %arg32[%c0_566, %c0_567] : memref<64x64xf32, #tpu.memory_space<vmem>>, vector<8x64xf32>
    %753 = arith.select %13, %751, %752 : vector<8x64xi1>, vector<8x64xf32>
    %c56_568 = arith.constant 56 : index
    %c0_569 = arith.constant 0 : index
    %754 = vector.load %arg33[%c56_568, %c0_569] : memref<64x64xf32, #tpu.memory_space<vmem>>, vector<8x64xf32>
    %c0_570 = arith.constant 0 : index
    %c0_571 = arith.constant 0 : index
    %755 = vector.load %arg33[%c0_570, %c0_571] : memref<64x64xf32, #tpu.memory_space<vmem>>, vector<8x64xf32>
    %756 = arith.select %13, %754, %755 : vector<8x64xi1>, vector<8x64xf32>
    %c0_572 = arith.constant 0 : index
    %c0_573 = arith.constant 0 : index
    %757 = vector.load %arg19[%c0_572, %c0_573] : memref<64x64xf32, #tpu.memory_space<vmem>>, vector<64x64xf32>
    %cst_574 = arith.constant dense<0.000000e+00> : vector<8x64xf32>
    %758 = tpu.matmul %745, %757, %cst_574 {dimension_numbers = #tpu.dot_dimension_numbers<[1], [0], [0], [1], [0, 0, 1, 1], [], []>} : vector<8x64xf32>, vector<64x64xf32>, vector<8x64xf32> -> vector<8x64xf32>
    %c0_575 = arith.constant 0 : index
    %c0_576 = arith.constant 0 : index
    %759 = vector.load %arg25[%c0_575, %c0_576] : memref<1x64xf32, #tpu.memory_space<vmem>>, vector<1x64xf32>
    %760 = vector.broadcast %759 : vector<1x64xf32> to vector<8x64xf32>
    %761 = arith.addf %758, %760 : vector<8x64xf32>
    %c0_577 = arith.constant 0 : index
    %c0_578 = arith.constant 0 : index
    %762 = vector.load %arg20[%c0_577, %c0_578] : memref<64x64xf32, #tpu.memory_space<vmem>>, vector<64x64xf32>
    %cst_579 = arith.constant dense<0.000000e+00> : vector<8x64xf32>
    %763 = tpu.matmul %745, %762, %cst_579 {dimension_numbers = #tpu.dot_dimension_numbers<[1], [0], [0], [1], [0, 0, 1, 1], [], []>} : vector<8x64xf32>, vector<64x64xf32>, vector<8x64xf32> -> vector<8x64xf32>
    %c0_580 = arith.constant 0 : index
    %c0_581 = arith.constant 0 : index
    %764 = vector.load %arg26[%c0_580, %c0_581] : memref<1x64xf32, #tpu.memory_space<vmem>>, vector<1x64xf32>
    %765 = vector.broadcast %764 : vector<1x64xf32> to vector<8x64xf32>
    %766 = arith.addf %763, %765 : vector<8x64xf32>
    %c0_582 = arith.constant 0 : index
    %c0_583 = arith.constant 0 : index
    %767 = vector.load %arg21[%c0_582, %c0_583] : memref<64x64xf32, #tpu.memory_space<vmem>>, vector<64x64xf32>
    %cst_584 = arith.constant dense<0.000000e+00> : vector<8x64xf32>
    %768 = tpu.matmul %745, %767, %cst_584 {dimension_numbers = #tpu.dot_dimension_numbers<[1], [0], [0], [1], [0, 0, 1, 1], [], []>} : vector<8x64xf32>, vector<64x64xf32>, vector<8x64xf32> -> vector<8x64xf32>
    %c0_585 = arith.constant 0 : index
    %c0_586 = arith.constant 0 : index
    %769 = vector.load %arg27[%c0_585, %c0_586] : memref<1x64xf32, #tpu.memory_space<vmem>>, vector<1x64xf32>
    %770 = vector.broadcast %769 : vector<1x64xf32> to vector<8x64xf32>
    %771 = arith.addf %768, %770 : vector<8x64xf32>
    %772 = arith.addf %750, %761 : vector<8x64xf32>
    %773 = arith.negf %772 : vector<8x64xf32>
    %774 = math.exp %773 : vector<8x64xf32>
    %cst_587 = arith.constant 1.000000e+00 : f32
    %775 = vector.broadcast %cst_587 : f32 to vector<8x64xf32>
    %776 = arith.addf %775, %774 : vector<8x64xf32>
    %777 = arith.divf %775, %776 : vector<8x64xf32>
    %778 = arith.addf %753, %766 : vector<8x64xf32>
    %779 = arith.negf %778 : vector<8x64xf32>
    %780 = math.exp %779 : vector<8x64xf32>
    %cst_588 = arith.constant 1.000000e+00 : f32
    %781 = vector.broadcast %cst_588 : f32 to vector<8x64xf32>
    %782 = arith.addf %781, %780 : vector<8x64xf32>
    %783 = arith.divf %781, %782 : vector<8x64xf32>
    %784 = arith.mulf %777, %771 : vector<8x64xf32>
    %785 = arith.addf %756, %784 : vector<8x64xf32>
    %786 = math.tanh %785 : vector<8x64xf32>
    %cst_589 = arith.constant 1.000000e+00 : f32
    %787 = vector.broadcast %cst_589 : f32 to vector<8x64xf32>
    %788 = arith.subf %787, %783 : vector<8x64xf32>
    %789 = arith.mulf %788, %786 : vector<8x64xf32>
    %790 = arith.mulf %783, %745 : vector<8x64xf32>
    %791 = arith.addf %789, %790 : vector<8x64xf32>
    %c56_590 = arith.constant 56 : index
    %c0_591 = arith.constant 0 : index
    %792 = vector.load %arg34[%c56_590, %c0_591] : memref<64x64xf32, #tpu.memory_space<vmem>>, vector<8x64xf32>
    tpu.vector_store %arg34[%c56_590, %c0_591], %791 {strides = array<i32>} : memref<64x64xf32, #tpu.memory_space<vmem>>, vector<8x64xf32>,
    %c0_592 = arith.constant 0 : index
    %c0_593 = arith.constant 0 : index
    %793 = vector.load %arg35[%c0_592, %c0_593] : memref<64x64xf32, #tpu.memory_space<vmem>>, vector<8x64xf32>
    tpu.vector_store %arg35[%c0_592, %c0_593], %791 {strides = array<i32>} : memref<64x64xf32, #tpu.memory_space<vmem>>, vector<8x64xf32>,
    %794 = tpu.iota {dimensions = array<i32: 1>} : vector<64x64xi32>
    %c32_i32_594 = arith.constant 32 : i32
    %795 = vector.broadcast %c32_i32_594 : i32 to vector<64x64xi32>
    %796 = arith.cmpi slt, %794, %795 : vector<64x64xi32>
    %c0_595 = arith.constant 0 : index
    %c0_596 = arith.constant 0 : index
    %797 = vector.load %arg34[%c0_595, %c0_596] : memref<64x64xf32, #tpu.memory_space<vmem>>, vector<64x64xf32>
    %c0_597 = arith.constant 0 : index
    %c0_598 = arith.constant 0 : index
    %798 = vector.load %arg35[%c0_597, %c0_598] : memref<64x64xf32, #tpu.memory_space<vmem>>, vector<64x64xf32>
    %799 = arith.select %796, %797, %798 : vector<64x64xi1>, vector<64x64xf32>
    %c0_599 = arith.constant 0 : index
    %c0_600 = arith.constant 0 : index
    %800 = vector.load %arg28[%c0_599, %c0_600] : memref<64x8xf32, #tpu.memory_space<vmem>>, vector<64x8xf32>
    %cst_601 = arith.constant dense<0.000000e+00> : vector<64x8xf32>
    %801 = tpu.matmul %799, %800, %cst_601 {dimension_numbers = #tpu.dot_dimension_numbers<[1], [0], [0], [1], [0, 0, 1, 1], [], []>} : vector<64x64xf32>, vector<64x8xf32>, vector<64x8xf32> -> vector<64x8xf32>
    %c0_602 = arith.constant 0 : index
    %c0_603 = arith.constant 0 : index
    %802 = vector.load %arg29[%c0_602, %c0_603] : memref<1x8xf32, #tpu.memory_space<vmem>>, vector<1x8xf32>
    %803 = vector.broadcast %802 : vector<1x8xf32> to vector<64x8xf32>
    %804 = arith.addf %801, %803 : vector<64x8xf32>
    %805 = arith.subf %804, %0 : vector<64x8xf32>
    %806 = arith.mulf %805, %805 : vector<64x8xf32>
    %807 = vector.broadcast %1 : vector<64x1xf32> to vector<64x8xf32>
    %808 = arith.mulf %806, %807 : vector<64x8xf32>
    %809 = vector.shape_cast %808 : vector<64x8xf32> to vector<1x64x8xf32>
    %cst_604 = arith.constant dense<0.000000e+00> : vector<1xf32>
    %810 = vector.multi_reduction <add>, %809, %cst_604 [1, 2] : vector<1x64x8xf32> to vector<1xf32>
    %811 = vector.shape_cast %810 : vector<1xf32> to vector<1x1x1xf32>
    %812 = vector.extract %811[0, 0, 0] : f32 from vector<1x1x1xf32>
    %813 = vector.broadcast %812 : f32 to vector<1x1xf32>
    %c0_605 = arith.constant 0 : index
    %c0_606 = arith.constant 0 : index
    %814 = vector.load %arg30[%c0_605, %c0_606] : memref<1x1xf32, #tpu.memory_space<vmem>>, vector<1x1xf32>
    tpu.vector_store %arg30[%c0_605, %c0_606], %813 {strides = array<i32>} : memref<1x1xf32, #tpu.memory_space<vmem>>, vector<1x1xf32>,
    return
  }
}

</mosaic_0001>

<llo_original>
// kernel: patch_detector_gru_forward.1
$region0: #{patch_detector_gru_forward.1}
  #allocation0 [shape = 'u32[]', space=smem, size = 0x4, offset = 0x4, fixed_abs, tag = 'smem constant byte address 0x4 - core index']
  #allocation1 [shape = 'u32[72,128]{1,0:T(1,128)}', space=vmem, size = 0x9000, scoped, tag = 'internal scratch']
  #allocation2 [shape = 'f32[64,64]{1,0:T(8,128)}', space=vmem, size = 0x8000, scoped, tag = 'scratch operand']
  #allocation3 [shape = 'f32[64,64]{1,0:T(8,128)}', space=vmem, size = 0x8000, scoped, tag = 'scratch operand']
  #allocation4 [shape = 'f32[64,64]{1,0:T(8,128)}', space=vmem, size = 0x8000, scoped, tag = 'scratch operand']
  #allocation5 [shape = 'f32[64,64]{1,0:T(8,128)}', space=vmem, size = 0x8000, scoped, tag = 'scratch operand']
  #allocation6 [shape = 'f32[64,64]{1,0:T(8,128)}', space=vmem, size = 0x8000, scoped, tag = 'scratch operand']
  %s0 = inlined_call_operand.smem [shape: u32[31], index: -1, kind: input, shape index: {}]
  %s1 = sld [smem:[%s0]]
  %s2 = scalar_lea.smem %s0, 1
  %s3 = sld [smem:[%s2]]
  %s4 = scalar_lea.smem %s0, 2
  %s5 = sld [smem:[%s4]]
  %s6 = scalar_lea.smem %s0, 3
  %s7 = sld [smem:[%s6]]
  %s8 = scalar_lea.smem %s0, 4
  %s9 = sld [smem:[%s8]]
  %s10 = scalar_lea.smem %s0, 5
  %s11 = sld [smem:[%s10]]
  %s12 = scalar_lea.smem %s0, 6
  %s13 = sld [smem:[%s12]]
  %s14 = scalar_lea.smem %s0, 7
  %s15 = sld [smem:[%s14]]
  %s16 = scalar_lea.smem %s0, 8
  %s17 = sld [smem:[%s16]]
  %s18 = scalar_lea.smem %s0, 9
  %s19 = sld [smem:[%s18]]
  %s20 = scalar_lea.smem %s0, 10
  %s21 = sld [smem:[%s20]]
  %s22 = scalar_lea.smem %s0, 11
  %s23 = sld [smem:[%s22]]
  %s24 = scalar_lea.smem %s0, 12
  %s25 = sld [smem:[%s24]]
  %s26 = scalar_lea.smem %s0, 13
  %s27 = sld [smem:[%s26]]
  %s28 = scalar_lea.smem %s0, 14
  %s29 = sld [smem:[%s28]]
  %s30 = scalar_lea.smem %s0, 15
  %s31 = sld [smem:[%s30]]
  %s32 = scalar_lea.smem %s0, 16
  %s33 = sld [smem:[%s32]]
  %s34 = scalar_lea.smem %s0, 17
  %s35 = sld [smem:[%s34]]
  %s36 = scalar_lea.smem %s0, 18
  %s37 = sld [smem:[%s36]]
  %s38 = scalar_lea.smem %s0, 19
  %s39 = sld [smem:[%s38]]
  %s40 = scalar_lea.smem %s0, 20
  %s41 = sld [smem:[%s40]]
  %s42 = scalar_lea.smem %s0, 21
  %s43 = sld [smem:[%s42]]
  %s44 = scalar_lea.smem %s0, 22
  %s45 = sld [smem:[%s44]]
  %s46 = scalar_lea.smem %s0, 23
  %s47 = sld [smem:[%s46]]
  %s48 = scalar_lea.smem %s0, 24
  %s49 = sld [smem:[%s48]]
  %s50 = scalar_lea.smem %s0, 25
  %s51 = sld [smem:[%s50]]
  %s52 = scalar_lea.smem %s0, 26
  %s53 = sld [smem:[%s52]]
  %s54 = scalar_lea.smem %s0, 27
  %s55 = sld [smem:[%s54]]
  %s56 = scalar_lea.smem %s0, 28
  %s57 = sld [smem:[%s56]]
  %s58 = scalar_lea.smem %s0, 29
  %s59 = sld [smem:[%s58]]
  %s60 = scalar_lea.smem %s0, 30
  %s61 = sld [smem:[%s60]]
  %s62 = sld [smem:[#allocation0]]
  $region130: #{patch_detector_gru_forward.1} parent=0
    _
  %s64 = ssub.s32 1, %s62
  %s65 = scalar_select 0, %s64, %s62
  $region1: #{patch_detector_gru_forward.1} parent=0
    #allocation7 [shape = 'u8[512]{0}', space=vmem, size = 0x400, scoped, tag = 'output window, operand 0, single buffered']
    #allocation8 [shape = 's32[1]{0}', space=sflag, size = 0x4, scoped, tag = 'scoped memory for patch_detector_gru_forward.1']
    %66 = vsyncpa [#allocation8], 0
    // Predicated region
    $region2: #{patch_detector_gru_forward.1} parent=1 // pred_check
      _
    $region3: #{patch_detector_gru_forward.1} parent=1 // pred_check_branch
      %68 = sbr.rel (0) target = $region5
    $region4: #{patch_detector_gru_forward.1} parent=1 // pred_region
      _
    $region5: #{patch_detector_gru_forward.1} parent=1 // pred_fallthru
      _
    // Predicated region
    $region6: #{patch_detector_gru_forward.1} parent=1 // pred_check
      _
    $region7: #{patch_detector_gru_forward.1} parent=1 // pred_check_branch
      %70 = sbr.rel (0) target = $region9
    $region8: #{patch_detector_gru_forward.1} parent=1 // pred_region
      _
    $region9: #{patch_detector_gru_forward.1} parent=1 // pred_fallthru
      _
    // Predicated region
    $region10: #{patch_detector_gru_forward.1} parent=1 // pred_check
      _
    $region11: #{patch_detector_gru_forward.1} parent=1 // pred_check_branch
      %72 = sbr.rel (0) target = $region13
    $region12: #{patch_detector_gru_forward.1} parent=1 // pred_region
      _
    $region13: #{patch_detector_gru_forward.1} parent=1 // pred_fallthru
      _
    // Predicated region
    $region14: #{patch_detector_gru_forward.1} parent=1 // pred_check
      _
    $region15: #{patch_detector_gru_forward.1} parent=1 // pred_check_branch
      %74 = sbr.rel (0) target = $region17
    $region16: #{patch_detector_gru_forward.1} parent=1 // pred_region
      _
    $region17: #{patch_detector_gru_forward.1} parent=1 // pred_fallthru
      _
    // Predicated region
    $region18: #{patch_detector_gru_forward.1} parent=1 // pred_check
      _
    $region19: #{patch_detector_gru_forward.1} parent=1 // pred_check_branch
      %76 = sbr.rel (0) target = $region21
    $region20: #{patch_detector_gru_forward.1} parent=1 // pred_region
      _
    $region21: #{patch_detector_gru_forward.1} parent=1 // pred_fallthru
      _
    // Predicated region
    $region22: #{patch_detector_gru_forward.1} parent=1 // pred_check
      _
    $region23: #{patch_detector_gru_forward.1} parent=1 // pred_check_branch
      %78 = sbr.rel (0) target = $region25
    $region24: #{patch_detector_gru_forward.1} parent=1 // pred_region
      _
    $region25: #{patch_detector_gru_forward.1} parent=1 // pred_fallthru
      _
    // Predicated region
    $region26: #{patch_detector_gru_forward.1} parent=1 // pred_check
      _
    $region27: #{patch_detector_gru_forward.1} parent=1 // pred_check_branch
      %80 = sbr.rel (0) target = $region29
    $region28: #{patch_detector_gru_forward.1} parent=1 // pred_region
      _
    $region29: #{patch_detector_gru_forward.1} parent=1 // pred_fallthru
      _
    // Predicated region
    $region30: #{patch_detector_gru_forward.1} parent=1 // pred_check
      _
    $region31: #{patch_detector_gru_forward.1} parent=1 // pred_check_branch
      %82 = sbr.rel (0) target = $region33
    $region32: #{patch_detector_gru_forward.1} parent=1 // pred_region
      _
    $region33: #{patch_detector_gru_forward.1} parent=1 // pred_fallthru
      _
    // Predicated region
    $region34: #{patch_detector_gru_forward.1} parent=1 // pred_check
      _
    $region35: #{patch_detector_gru_forward.1} parent=1 // pred_check_branch
      %84 = sbr.rel (0) target = $region37
    $region36: #{patch_detector_gru_forward.1} parent=1 // pred_region
      _
    $region37: #{patch_detector_gru_forward.1} parent=1 // pred_fallthru
      _
    // Predicated region
    $region38: #{patch_detector_gru_forward.1} parent=1 // pred_check
      _
    $region39: #{patch_detector_gru_forward.1} parent=1 // pred_check_branch
      %86 = sbr.rel (0) target = $region41
    $region40: #{patch_detector_gru_forward.1} parent=1 // pred_region
      _
    $region41: #{patch_detector_gru_forward.1} parent=1 // pred_fallthru
      _
    // Predicated region
    $region42: #{patch_detector_gru_forward.1} parent=1 // pred_check
      _
    $region43: #{patch_detector_gru_forward.1} parent=1 // pred_check_branch
      %88 = sbr.rel (0) target = $region45
    $region44: #{patch_detector_gru_forward.1} parent=1 // pred_region
      _
    $region45: #{patch_detector_gru_forward.1} parent=1 // pred_fallthru
      _
    // Predicated region
    $region46: #{patch_detector_gru_forward.1} parent=1 // pred_check
      _
    $region47: #{patch_detector_gru_forward.1} parent=1 // pred_check_branch
      %90 = sbr.rel (0) target = $region49
    $region48: #{patch_detector_gru_forward.1} parent=1 // pred_region
      _
    $region49: #{patch_detector_gru_forward.1} parent=1 // pred_fallthru
      _
    // Predicated region
    $region50: #{patch_detector_gru_forward.1} parent=1 // pred_check
      _
    $region51: #{patch_detector_gru_forward.1} parent=1 // pred_check_branch
      %92 = sbr.rel (0) target = $region53
    $region52: #{patch_detector_gru_forward.1} parent=1 // pred_region
      _
    $region53: #{patch_detector_gru_forward.1} parent=1 // pred_fallthru
      _
    // Predicated region
    $region54: #{patch_detector_gru_forward.1} parent=1 // pred_check
      _
    $region55: #{patch_detector_gru_forward.1} parent=1 // pred_check_branch
      %94 = sbr.rel (0) target = $region57
    $region56: #{patch_detector_gru_forward.1} parent=1 // pred_region
      _
    $region57: #{patch_detector_gru_forward.1} parent=1 // pred_fallthru
      _
    // Predicated region
    $region58: #{patch_detector_gru_forward.1} parent=1 // pred_check
      _
    $region59: #{patch_detector_gru_forward.1} parent=1 // pred_check_branch
      %96 = sbr.rel (0) target = $region61
    $region60: #{patch_detector_gru_forward.1} parent=1 // pred_region
      _
    $region61: #{patch_detector_gru_forward.1} parent=1 // pred_fallthru
      _
    // Predicated region
    $region62: #{patch_detector_gru_forward.1} parent=1 // pred_check
      _
    $region63: #{patch_detector_gru_forward.1} parent=1 // pred_check_branch
      %98 = sbr.rel (0) target = $region65
    $region64: #{patch_detector_gru_forward.1} parent=1 // pred_region
      _
    $region65: #{patch_detector_gru_forward.1} parent=1 // pred_fallthru
      _
    // Predicated region
    $region66: #{patch_detector_gru_forward.1} parent=1 // pred_check
      _
    $region67: #{patch_detector_gru_forward.1} parent=1 // pred_check_branch
      %100 = sbr.rel (0) target = $region69
    $region68: #{patch_detector_gru_forward.1} parent=1 // pred_region
      _
    $region69: #{patch_detector_gru_forward.1} parent=1 // pred_fallthru
      _
    // Predicated region
    $region70: #{patch_detector_gru_forward.1} parent=1 // pred_check
      _
    $region71: #{patch_detector_gru_forward.1} parent=1 // pred_check_branch
      %102 = sbr.rel (0) target = $region73
    $region72: #{patch_detector_gru_forward.1} parent=1 // pred_region
      _
    $region73: #{patch_detector_gru_forward.1} parent=1 // pred_fallthru
      _
    // Predicated region
    $region74: #{patch_detector_gru_forward.1} parent=1 // pred_check
      _
    $region75: #{patch_detector_gru_forward.1} parent=1 // pred_check_branch
      %104 = sbr.rel (0) target = $region77
    $region76: #{patch_detector_gru_forward.1} parent=1 // pred_region
      _
    $region77: #{patch_detector_gru_forward.1} parent=1 // pred_fallthru
      _
    // Predicated region
    $region78: #{patch_detector_gru_forward.1} parent=1 // pred_check
      _
    $region79: #{patch_detector_gru_forward.1} parent=1 // pred_check_branch
      %106 = sbr.rel (0) target = $region81
    $region80: #{patch_detector_gru_forward.1} parent=1 // pred_region
      _
    $region81: #{patch_detector_gru_forward.1} parent=1 // pred_fallthru
      _
    // Predicated region
    $region82: #{patch_detector_gru_forward.1} parent=1 // pred_check
      _
    $region83: #{patch_detector_gru_forward.1} parent=1 // pred_check_branch
      %108 = sbr.rel (0) target = $region85
    $region84: #{patch_detector_gru_forward.1} parent=1 // pred_region
      _
    $region85: #{patch_detector_gru_forward.1} parent=1 // pred_fallthru
      _
    // Predicated region
    $region86: #{patch_detector_gru_forward.1} parent=1 // pred_check
      _
    $region87: #{patch_detector_gru_forward.1} parent=1 // pred_check_branch
      %110 = sbr.rel (0) target = $region89
    $region88: #{patch_detector_gru_forward.1} parent=1 // pred_region
      _
    $region89: #{patch_detector_gru_forward.1} parent=1 // pred_fallthru
      _
    // Predicated region
    $region90: #{patch_detector_gru_forward.1} parent=1 // pred_check
      _
    $region91: #{patch_detector_gru_forward.1} parent=1 // pred_check_branch
      %112 = sbr.rel (0) target = $region93
    $region92: #{patch_detector_gru_forward.1} parent=1 // pred_region
      _
    $region93: #{patch_detector_gru_forward.1} parent=1 // pred_fallthru
      _
    // Predicated region
    $region94: #{patch_detector_gru_forward.1} parent=1 // pred_check
      _
    $region95: #{patch_detector_gru_forward.1} parent=1 // pred_check_branch
      %114 = sbr.rel (0) target = $region97
    $region96: #{patch_detector_gru_forward.1} parent=1 // pred_region
      _
    $region97: #{patch_detector_gru_forward.1} parent=1 // pred_fallthru
      _
    // Predicated region
    $region98: #{patch_detector_gru_forward.1} parent=1 // pred_check
      _
    $region99: #{patch_detector_gru_forward.1} parent=1 // pred_check_branch
      %116 = sbr.rel (0) target = $region101
    $region100: #{patch_detector_gru_forward.1} parent=1 // pred_region
      _
    $region101: #{patch_detector_gru_forward.1} parent=1 // pred_fallthru
      _
    // Predicated region
    $region102: #{patch_detector_gru_forward.1} parent=1 // pred_check
      _
    $region103: #{patch_detector_gru_forward.1} parent=1 // pred_check_branch
      %118 = sbr.rel (0) target = $region105
    $region104: #{patch_detector_gru_forward.1} parent=1 // pred_region
      _
    $region105: #{patch_detector_gru_forward.1} parent=1 // pred_fallthru
      _
    // Predicated region
    $region106: #{patch_detector_gru_forward.1} parent=1 // pred_check
      _
    $region107: #{patch_detector_gru_forward.1} parent=1 // pred_check_branch
      %120 = sbr.rel (0) target = $region109
    $region108: #{patch_detector_gru_forward.1} parent=1 // pred_region
      _
    $region109: #{patch_detector_gru_forward.1} parent=1 // pred_fallthru
      _
    // Predicated region
    $region110: #{patch_detector_gru_forward.1} parent=1 // pred_check
      _
    $region111: #{patch_detector_gru_forward.1} parent=1 // pred_check_branch
      %122 = sbr.rel (0) target = $region113
    $region112: #{patch_detector_gru_forward.1} parent=1 // pred_region
      _
    $region113: #{patch_detector_gru_forward.1} parent=1 // pred_fallthru
      _
    // Predicated region
    $region114: #{patch_detector_gru_forward.1} parent=1 // pred_check
      _
    $region115: #{patch_detector_gru_forward.1} parent=1 // pred_check_branch
      %124 = sbr.rel (0) target = $region117
    $region116: #{patch_detector_gru_forward.1} parent=1 // pred_region
      _
    $region117: #{patch_detector_gru_forward.1} parent=1 // pred_fallthru
      _
    // Predicated region
    $region118: #{patch_detector_gru_forward.1} parent=1 // pred_check
      _
    $region119: #{patch_detector_gru_forward.1} parent=1 // pred_check_branch
      %126 = sbr.rel (0) target = $region121
    $region120: #{patch_detector_gru_forward.1} parent=1 // pred_region
      _
    $region121: #{patch_detector_gru_forward.1} parent=1 // pred_fallthru
      _
    %v127 = vld [vmem:[%s1] sm:$0xff]
    %v128 = vld [vmem:[%s1 + $0x8] sm:$0xff]
    %v129 = vld [vmem:[%s1 + $0x10] sm:$0xff]
    %v130 = vld [vmem:[%s1 + $0x18] sm:$0xff]
    %v131 = vld [vmem:[%s1 + $0x20] sm:$0xff]
    %v132 = vld [vmem:[%s1 + $0x28] sm:$0xff]
    %v133 = vld [vmem:[%s1 + $0x30] sm:$0xff]
    %v134 = vld [vmem:[%s1 + $0x38] sm:$0xff]
    %v135 = vld [vmem:[%s3] sm:$0xff]
    %v136 = vld [vmem:[%s3 + $0x8] sm:$0xff]
    %v137 = vld [vmem:[%s3 + $0x10] sm:$0xff]
    %v138 = vld [vmem:[%s3 + $0x18] sm:$0xff]
    %v139 = vld [vmem:[%s3 + $0x20] sm:$0xff]
    %v140 = vld [vmem:[%s3 + $0x28] sm:$0xff]
    %v141 = vld [vmem:[%s3 + $0x30] sm:$0xff]
    %v142 = vld [vmem:[%s3 + $0x38] sm:$0xff]
    %v143 = vsub.f32 1.0, %v135
    %v144 = vsub.f32 1.0, %v136
    %v145 = vsub.f32 1.0, %v137
    %v146 = vsub.f32 1.0, %v138
    %v147 = vsub.f32 1.0, %v139
    %v148 = vsub.f32 1.0, %v140
    %v149 = vsub.f32 1.0, %v141
    %v150 = vsub.f32 1.0, %v142
    %152 = vset.pattern.permute.xlu0 0
    %153 = vperm.xlu0 %152, %v143
    %v154 = vpop.permute.xlu0 %153
    %157 = vset.pattern.permute.xlu0 0
    %158 = vperm.xlu0 %157, %v144
    %v159 = vpop.permute.xlu0 %158
    %162 = vset.pattern.permute.xlu0 0
    %163 = vperm.xlu0 %162, %v145
    %v164 = vpop.permute.xlu0 %163
    %167 = vset.pattern.permute.xlu0 0
    %168 = vperm.xlu0 %167, %v146
    %v169 = vpop.permute.xlu0 %168
    %172 = vset.pattern.permute.xlu0 0
    %173 = vperm.xlu0 %172, %v147
    %v174 = vpop.permute.xlu0 %173
    %177 = vset.pattern.permute.xlu0 0
    %178 = vperm.xlu0 %177, %v148
    %v179 = vpop.permute.xlu0 %178
    %182 = vset.pattern.permute.xlu0 0
    %183 = vperm.xlu0 %182, %v149
    %v184 = vpop.permute.xlu0 %183
    %187 = vset.pattern.permute.xlu0 0
    %188 = vperm.xlu0 %187, %v150
    %v189 = vpop.permute.xlu0 %188
    %v191 = vmul.f32 %v127, %v154
    %v192 = vmul.f32 %v128, %v159
    %v193 = vmul.f32 %v129, %v164
    %v194 = vmul.f32 %v130, %v169
    %v195 = vmul.f32 %v131, %v174
    %v196 = vmul.f32 %v132, %v179
    %v197 = vmul.f32 %v133, %v184
    %v198 = vmul.f32 %v134, %v189
    %v199 = vld [vmem:[%s5] sm:$0xff]
    %v200 = vld [vmem:[%s7] sm:$0x1]
    %v202 = vperm.slane %v200, 0
    %vm204 = vcmask 64512
    %v206 = vsel %vm204, %v191, 0
    %v209 = vsel %vm204, %v192, 0
    %v212 = vsel %vm204, %v193, 0
    %v215 = vsel %vm204, %v194, 0
    %v218 = vsel %vm204, %v195, 0
    %v221 = vsel %vm204, %v196, 0
    %v224 = vsel %vm204, %v197, 0
    %v227 = vsel %vm204, %v198, 0
    %229 = vmatpush.msra.mxu0 0.0
    %230 = vmatpush.msra.mxu0 0.0
    %231 = vmatpush.msra.mxu0 0.0
    %232 = vmatpush.msra.mxu0 0.0
    %233 = vmatpush.msra.mxu0 0.0
    %234 = vmatpush.msra.mxu0 0.0
    %235 = vmatpush.msra.mxu0 0.0
    %236 = vmatpush.msra.mxu0 0.0
    %237 = vmatpush.msra.mxu0 0.0
    %238 = vmatpush.msra.mxu0 0.0
    %239 = vmatpush.msra.mxu0 0.0
    %240 = vmatpush.msra.mxu0 0.0
    %241 = vmatpush.msra.mxu0 0.0
    %242 = vmatpush.msra.mxu0 0.0
    %243 = vmatpush.msra.mxu0 0.0
    %244 = vmatpush.msra.mxu0 %v199
    %245 = vmatmul.f32.gmra.mxu0 %v206
    %v246 = vpop.f32.mrf.mxu0
    %v247 = vadd.f32 %v202, %v246
    %248 = vmatmul.f32.gmra.mxu0 %v209
    %v249 = vpop.f32.mrf.mxu0
    %v250 = vadd.f32 %v202, %v249
    %251 = vmatmul.f32.gmra.mxu0 %v212
    %v252 = vpop.f32.mrf.mxu0
    %v253 = vadd.f32 %v202, %v252
    %254 = vmatmul.f32.gmra.mxu0 %v215
    %v255 = vpop.f32.mrf.mxu0
    %v256 = vadd.f32 %v202, %v255
    %257 = vmatmul.f32.gmra.mxu0 %v218
    %v258 = vpop.f32.mrf.mxu0
    %v259 = vadd.f32 %v202, %v258
    %260 = vmatmul.f32.gmra.mxu0 %v221
    %v261 = vpop.f32.mrf.mxu0
    %v262 = vadd.f32 %v202, %v261
    %263 = vmatmul.f32.gmra.mxu0 %v224
    %v264 = vpop.f32.mrf.mxu0
    %v265 = vadd.f32 %v202, %v264
    %266 = vmatmul.f32.gmra.mxu0 %v227
    %v267 = vpop.f32.mrf.mxu0
    %v268 = vadd.f32 %v202, %v267
    %269 = vdwg.mxu0
    %v270 = vlaneseq
    %v271 = vand.u32 %v270, 127
    %vm272 = vcmp.lt.s32.totalorder %v271, 32
    %v273 = vld [vmem:[%s9] sm:$0xff]
    %v274 = vld [vmem:[%s9 + $0x8] sm:$0xff]
    %v275 = vld [vmem:[%s9 + $0x10] sm:$0xff]
    %v276 = vld [vmem:[%s9 + $0x18] sm:$0xff]
    %v277 = vld [vmem:[%s21] sm:$0x1]
    %v279 = vperm.slane %v277, 0
    %vm281 = vcmask 261120
    %v283 = vsel %vm281, %v247, 0
    %v286 = vsel %vm281, %v250, 0
    %v289 = vsel %vm281, %v253, 0
    %v292 = vsel %vm281, %v256, 0
    %v295 = vsel %vm281, %v259, 0
    %v298 = vsel %vm281, %v262, 0
    %v301 = vsel %vm281, %v265, 0
    %v304 = vsel %vm281, %v268, 0
    %306 = vmatpush.msra.mxu0 0.0
    %307 = vmatpush.msra.mxu0 0.0
    %308 = vmatpush.msra.mxu0 0.0
    %309 = vmatpush.msra.mxu0 0.0
    %310 = vmatpush.msra.mxu0 0.0
    %311 = vmatpush.msra.mxu0 0.0
    %312 = vmatpush.msra.mxu0 0.0
    %313 = vmatpush.msra.mxu0 0.0
    %314 = vmatpush.msra.mxu0 0.0
    %315 = vmatpush.msra.mxu0 0.0
    %316 = vmatpush.msra.mxu0 0.0
    %317 = vmatpush.msra.mxu0 0.0
    %318 = vmatpush.msra.mxu0 %v276
    %319 = vmatpush.msra.mxu0 %v275
    %320 = vmatpush.msra.mxu0 %v274
    %321 = vmatpush.msra.mxu0 %v273
    %322 = vmatmul.f32.gmra.mxu0 %v283
    %v323 = vpop.f32.mrf.mxu0
    %v324 = vadd.f32 %v279, %v323
    %325 = vmatmul.f32.gmra.mxu0 %v286
    %v326 = vpop.f32.mrf.mxu0
    %v327 = vadd.f32 %v279, %v326
    %328 = vmatmul.f32.gmra.mxu0 %v289
    %v329 = vpop.f32.mrf.mxu0
    %v330 = vadd.f32 %v279, %v329
    %331 = vmatmul.f32.gmra.mxu0 %v292
    %v332 = vpop.f32.mrf.mxu0
    %v333 = vadd.f32 %v279, %v332
    %334 = vmatmul.f32.gmra.mxu0 %v295
    %v335 = vpop.f32.mrf.mxu0
    %v336 = vadd.f32 %v279, %v335
    %337 = vmatmul.f32.gmra.mxu0 %v298
    %v338 = vpop.f32.mrf.mxu0
    %v339 = vadd.f32 %v279, %v338
    %340 = vmatmul.f32.gmra.mxu0 %v301
    %v341 = vpop.f32.mrf.mxu0
    %v342 = vadd.f32 %v279, %v341
    %343 = vmatmul.f32.gmra.mxu0 %v304
    %v344 = vpop.f32.mrf.mxu0
    %v345 = vadd.f32 %v279, %v344
    %346 = vdwg.mxu0
    %vm347 = vcmask 523264
    %348 = vst.msk [vmem:[#allocation2] sm:$0xff] %vm347, %v324
    %349 = vst.msk [vmem:[#allocation2 + $0x8] sm:$0xff] %vm347, %v327
    %350 = vst.msk [vmem:[#allocation2 + $0x10] sm:$0xff] %vm347, %v330
    %351 = vst.msk [vmem:[#allocation2 + $0x18] sm:$0xff] %vm347, %v333
    %352 = vst.msk [vmem:[#allocation2 + $0x20] sm:$0xff] %vm347, %v336
    %353 = vst.msk [vmem:[#allocation2 + $0x28] sm:$0xff] %vm347, %v339
    %354 = vst.msk [vmem:[#allocation2 + $0x30] sm:$0xff] %vm347, %v342
    %355 = vst.msk [vmem:[#allocation2 + $0x38] sm:$0xff] %vm347, %v345
    %v356 = vld [vmem:[%s11] sm:$0xff]
    %v357 = vld [vmem:[%s11 + $0x8] sm:$0xff]
    %v358 = vld [vmem:[%s11 + $0x10] sm:$0xff]
    %v359 = vld [vmem:[%s11 + $0x18] sm:$0xff]
    %v360 = vld [vmem:[%s23] sm:$0x1]
    %v362 = vperm.slane %v360, 0
    %364 = vmatpush.msra.mxu0 0.0
    %365 = vmatpush.msra.mxu0 0.0
    %366 = vmatpush.msra.mxu0 0.0
    %367 = vmatpush.msra.mxu0 0.0
    %368 = vmatpush.msra.mxu0 0.0
    %369 = vmatpush.msra.mxu0 0.0
    %370 = vmatpush.msra.mxu0 0.0
    %371 = vmatpush.msra.mxu0 0.0
    %372 = vmatpush.msra.mxu0 0.0
    %373 = vmatpush.msra.mxu0 0.0
    %374 = vmatpush.msra.mxu0 0.0
    %375 = vmatpush.msra.mxu0 0.0
    %376 = vmatpush.msra.mxu0 %v359
    %377 = vmatpush.msra.mxu0 %v358
    %378 = vmatpush.msra.mxu0 %v357
    %379 = vmatpush.msra.mxu0 %v356
    %380 = vmatmul.f32.gmra.mxu0 %v283
    %v381 = vpop.f32.mrf.mxu0
    %v382 = vadd.f32 %v362, %v381
    %383 = vmatmul.f32.gmra.mxu0 %v286
    %v384 = vpop.f32.mrf.mxu0
    %v385 = vadd.f32 %v362, %v384
    %386 = vmatmul.f32.gmra.mxu0 %v289
    %v387 = vpop.f32.mrf.mxu0
    %v388 = vadd.f32 %v362, %v387
    %389 = vmatmul.f32.gmra.mxu0 %v292
    %v390 = vpop.f32.mrf.mxu0
    %v391 = vadd.f32 %v362, %v390
    %392 = vmatmul.f32.gmra.mxu0 %v295
    %v393 = vpop.f32.mrf.mxu0
    %v394 = vadd.f32 %v362, %v393
    %395 = vmatmul.f32.gmra.mxu0 %v298
    %v396 = vpop.f32.mrf.mxu0
    %v397 = vadd.f32 %v362, %v396
    %398 = vmatmul.f32.gmra.mxu0 %v301
    %v399 = vpop.f32.mrf.mxu0
    %v400 = vadd.f32 %v362, %v399
    %401 = vmatmul.f32.gmra.mxu0 %v304
    %v402 = vpop.f32.mrf.mxu0
    %v403 = vadd.f32 %v362, %v402
    %404 = vdwg.mxu0
    %405 = vst.msk [vmem:[#allocation3] sm:$0xff] %vm347, %v382
    %406 = vst.msk [vmem:[#allocation3 + $0x8] sm:$0xff] %vm347, %v385
    %407 = vst.msk [vmem:[#allocation3 + $0x10] sm:$0xff] %vm347, %v388
    %408 = vst.msk [vmem:[#allocation3 + $0x18] sm:$0xff] %vm347, %v391
    %409 = vst.msk [vmem:[#allocation3 + $0x20] sm:$0xff] %vm347, %v394
    %410 = vst.msk [vmem:[#allocation3 + $0x28] sm:$0xff] %vm347, %v397
    %411 = vst.msk [vmem:[#allocation3 + $0x30] sm:$0xff] %vm347, %v400
    %412 = vst.msk [vmem:[#allocation3 + $0x38] sm:$0xff] %vm347, %v403
    %v413 = vld [vmem:[%s13] sm:$0xff]
    %v414 = vld [vmem:[%s13 + $0x8] sm:$0xff]
    %v415 = vld [vmem:[%s13 + $0x10] sm:$0xff]
    %v416 = vld [vmem:[%s13 + $0x18] sm:$0xff]
    %v417 = vld [vmem:[%s25] sm:$0x1]
    %v419 = vperm.slane %v417, 0
    %421 = vmatpush.msra.mxu0 0.0
    %422 = vmatpush.msra.mxu0 0.0
    %423 = vmatpush.msra.mxu0 0.0
    %424 = vmatpush.msra.mxu0 0.0
    %425 = vmatpush.msra.mxu0 0.0
    %426 = vmatpush.msra.mxu0 0.0
    %427 = vmatpush.msra.mxu0 0.0
    %428 = vmatpush.msra.mxu0 0.0
    %429 = vmatpush.msra.mxu0 0.0
    %430 = vmatpush.msra.mxu0 0.0
    %431 = vmatpush.msra.mxu0 0.0
    %432 = vmatpush.msra.mxu0 0.0
    %433 = vmatpush.msra.mxu0 %v416
    %434 = vmatpush.msra.mxu0 %v415
    %435 = vmatpush.msra.mxu0 %v414
    %436 = vmatpush.msra.mxu0 %v413
    %437 = vmatmul.f32.gmra.mxu0 %v283
    %v438 = vpop.f32.mrf.mxu0
    %v439 = vadd.f32 %v419, %v438
    %440 = vmatmul.f32.gmra.mxu0 %v286
    %v441 = vpop.f32.mrf.mxu0
    %v442 = vadd.f32 %v419, %v441
    %443 = vmatmul.f32.gmra.mxu0 %v289
    %v444 = vpop.f32.mrf.mxu0
    %v445 = vadd.f32 %v419, %v444
    %446 = vmatmul.f32.gmra.mxu0 %v292
    %v447 = vpop.f32.mrf.mxu0
    %v448 = vadd.f32 %v419, %v447
    %449 = vmatmul.f32.gmra.mxu0 %v295
    %v450 = vpop.f32.mrf.mxu0
    %v451 = vadd.f32 %v419, %v450
    %452 = vmatmul.f32.gmra.mxu0 %v298
    %v453 = vpop.f32.mrf.mxu0
    %v454 = vadd.f32 %v419, %v453
    %455 = vmatmul.f32.gmra.mxu0 %v301
    %v456 = vpop.f32.mrf.mxu0
    %v457 = vadd.f32 %v419, %v456
    %458 = vmatmul.f32.gmra.mxu0 %v304
    %v459 = vpop.f32.mrf.mxu0
    %v460 = vadd.f32 %v419, %v459
    %461 = vdwg.mxu0
    %462 = vst.msk [vmem:[#allocation4] sm:$0xff] %vm347, %v439
    %463 = vst.msk [vmem:[#allocation4 + $0x8] sm:$0xff] %vm347, %v442
    %464 = vst.msk [vmem:[#allocation4 + $0x10] sm:$0xff] %vm347, %v445
    %465 = vst.msk [vmem:[#allocation4 + $0x18] sm:$0xff] %vm347, %v448
    %466 = vst.msk [vmem:[#allocation4 + $0x20] sm:$0xff] %vm347, %v451
    %467 = vst.msk [vmem:[#allocation4 + $0x28] sm:$0xff] %vm347, %v454
    %468 = vst.msk [vmem:[#allocation4 + $0x30] sm:$0xff] %vm347, %v457
    %469 = vst.msk [vmem:[#allocation4 + $0x38] sm:$0xff] %vm347, %v460
    %v470 = vld [vmem:[#allocation2] sm:$0xff]
    %v471 = vld [vmem:[#allocation2 + $0x38] sm:$0xff]
    %v472 = vsel %vm272, %v470, %v471
    %v473 = vld [vmem:[#allocation3] sm:$0xff]
    %v474 = vld [vmem:[#allocation3 + $0x38] sm:$0xff]
    %v475 = vsel %vm272, %v473, %v474
    %v476 = vld [vmem:[#allocation4] sm:$0xff]
    %v477 = vld [vmem:[#allocation4 + $0x38] sm:$0xff]
    %v478 = vsel %vm272, %v476, %v477
    %v479 = vld [vmem:[%s15] sm:$0xff]
    %v480 = vld [vmem:[%s15 + $0x8] sm:$0xff]
    %v481 = vld [vmem:[%s15 + $0x10] sm:$0xff]
    %v482 = vld [vmem:[%s15 + $0x18] sm:$0xff]
    %v483 = vld [vmem:[%s15 + $0x20] sm:$0xff]
    %v484 = vld [vmem:[%s15 + $0x28] sm:$0xff]
    %v485 = vld [vmem:[%s15 + $0x30] sm:$0xff]
    %v486 = vld [vmem:[%s15 + $0x38] sm:$0xff]
    %v487 = vld [vmem:[%s27] sm:$0x1]
    %v489 = vperm.slane %v487, 0
    %v492 = vsel %vm347, 0.0, 0
    %494 = vmatpush.msra.mxu0 0.0
    %495 = vmatpush.msra.mxu0 0.0
    %496 = vmatpush.msra.mxu0 0.0
    %497 = vmatpush.msra.mxu0 0.0
    %498 = vmatpush.msra.mxu0 0.0
    %499 = vmatpush.msra.mxu0 0.0
    %500 = vmatpush.msra.mxu0 0.0
    %501 = vmatpush.msra.mxu0 0.0
    %502 = vmatpush.msra.mxu0 %v486
    %503 = vmatpush.msra.mxu0 %v485
    %504 = vmatpush.msra.mxu0 %v484
    %505 = vmatpush.msra.mxu0 %v483
    %506 = vmatpush.msra.mxu0 %v482
    %507 = vmatpush.msra.mxu0 %v481
    %508 = vmatpush.msra.mxu0 %v480
    %509 = vmatpush.msra.mxu0 %v479
    %510 = vmatmul.f32.gmra.mxu0 %v492
    %v511 = vpop.f32.mrf.mxu0
    %v512 = vadd.f32 %v489, %v511
    %513 = vdwg.mxu0
    %v514 = vld [vmem:[%s17] sm:$0xff]
    %v515 = vld [vmem:[%s17 + $0x8] sm:$0xff]
    %v516 = vld [vmem:[%s17 + $0x10] sm:$0xff]
    %v517 = vld [vmem:[%s17 + $0x18] sm:$0xff]
    %v518 = vld [vmem:[%s17 + $0x20] sm:$0xff]
    %v519 = vld [vmem:[%s17 + $0x28] sm:$0xff]
    %v520 = vld [vmem:[%s17 + $0x30] sm:$0xff]
    %v521 = vld [vmem:[%s17 + $0x38] sm:$0xff]
    %v522 = vld [vmem:[%s29] sm:$0x1]
    %v524 = vperm.slane %v522, 0
    %526 = vmatpush.msra.mxu0 0.0
    %527 = vmatpush.msra.mxu0 0.0
    %528 = vmatpush.msra.mxu0 0.0
    %529 = vmatpush.msra.mxu0 0.0
    %530 = vmatpush.msra.mxu0 0.0
    %531 = vmatpush.msra.mxu0 0.0
    %532 = vmatpush.msra.mxu0 0.0
    %533 = vmatpush.msra.mxu0 0.0
    %534 = vmatpush.msra.mxu0 %v521
    %535 = vmatpush.msra.mxu0 %v520
    %536 = vmatpush.msra.mxu0 %v519
    %537 = vmatpush.msra.mxu0 %v518
    %538 = vmatpush.msra.mxu0 %v517
    %539 = vmatpush.msra.mxu0 %v516
    %540 = vmatpush.msra.mxu0 %v515
    %541 = vmatpush.msra.mxu0 %v514
    %542 = vmatmul.f32.gmra.mxu0 %v492
    %v543 = vpop.f32.mrf.mxu0
    %v544 = vadd.f32 %v524, %v543
    %545 = vdwg.mxu0
    %v546 = vld [vmem:[%s19] sm:$0xff]
    %v547 = vld [vmem:[%s19 + $0x8] sm:$0xff]
    %v548 = vld [vmem:[%s19 + $0x10] sm:$0xff]
    %v549 = vld [vmem:[%s19 + $0x18] sm:$0xff]
    %v550 = vld [vmem:[%s19 + $0x20] sm:$0xff]
    %v551 = vld [vmem:[%s19 + $0x28] sm:$0xff]
    %v552 = vld [vmem:[%s19 + $0x30] sm:$0xff]
    %v553 = vld [vmem:[%s19 + $0x38] sm:$0xff]
    %v554 = vld [vmem:[%s31] sm:$0x1]
    %v556 = vperm.slane %v554, 0
    %558 = vmatpush.msra.mxu0 0.0
    %559 = vmatpush.msra.mxu0 0.0
    %560 = vmatpush.msra.mxu0 0.0
    %561 = vmatpush.msra.mxu0 0.0
    %562 = vmatpush.msra.mxu0 0.0
    %563 = vmatpush.msra.mxu0 0.0
    %564 = vmatpush.msra.mxu0 0.0
    %565 = vmatpush.msra.mxu0 0.0
    %566 = vmatpush.msra.mxu0 %v553
    %567 = vmatpush.msra.mxu0 %v552
    %568 = vmatpush.msra.mxu0 %v551
    %569 = vmatpush.msra.mxu0 %v550
    %570 = vmatpush.msra.mxu0 %v549
    %571 = vmatpush.msra.mxu0 %v548
    %572 = vmatpush.msra.mxu0 %v547
    %573 = vmatpush.msra.mxu0 %v546
    %574 = vmatmul.f32.gmra.mxu0 %v492
    %v575 = vpop.f32.mrf.mxu0
    %v576 = vadd.f32 %v556, %v575
    %577 = vdwg.mxu0
    %v578 = vadd.f32 %v472, %v512
    %v579 = vxor.u32 %v578, 2147483648
    %v580 = vmul.f32 %v579, 1.442695
    %v581 = vpow.pop %v580
    %v582 = vadd.f32 %v581, 1.0
    %v583 = vrcp.pop %v582
    %v584 = vmul.f32 %v582, %v583
    %v585 = vsub.f32 1.0, %v584
    %v586 = vmul.f32 %v583, %v585
    %v587 = vadd.f32 %v583, %v586
    %vm588 = vweird.f32 %v582
    %vm589 = vweird.f32 %v583
    %vm590 = vmor %vm588, %vm589
    %v591 = vsel %vm590, %v583, %v587
    %v592 = vand.u32 2147483647, %v582
    %vm593 = vcmp.eq.f32.partialorder %v592, 8.507059e+37
    %v594 = vand.u32 %v582, 2147483648
    %v595 = vor.u32 1.1754944e-38, %v594
    %v596 = vsel %vm593, %v595, %v591
    %v597 = vmul.f32 1.0, %v596
    %v598 = vadd.f32 %v475, %v544
    %v599 = vxor.u32 %v598, 2147483648
    %v600 = vmul.f32 %v599, 1.442695
    %v601 = vpow.pop %v600
    %v602 = vadd.f32 %v601, 1.0
    %v603 = vrcp.pop %v602
    %v604 = vmul.f32 %v602, %v603
    %v605 = vsub.f32 1.0, %v604
    %v606 = vmul.f32 %v603, %v605
    %v607 = vadd.f32 %v603, %v606
    %vm608 = vweird.f32 %v602
    %vm609 = vweird.f32 %v603
    %vm610 = vmor %vm608, %vm609
    %v611 = vsel %vm610, %v603, %v607
    %v612 = vand.u32 2147483647, %v602
    %vm613 = vcmp.eq.f32.partialorder %v612, 8.507059e+37
    %v614 = vand.u32 %v602, 2147483648
    %v615 = vor.u32 1.1754944e-38, %v614
    %v616 = vsel %vm613, %v615, %v611
    %v617 = vmul.f32 1.0, %v616
    %v618 = vmul.f32 %v597, %v576
    %v619 = vadd.f32 %v478, %v618
    %v620 = vtanh.pop %v619
    %v621 = vsub.f32 1.0, %v617
    %v622 = vmul.f32 %v621, %v620
    %v623 = vmul.f32 %v617, 0.0
    %v624 = vadd.f32 %v622, %v623
    %625 = vst.msk [vmem:[#allocation5] sm:$0xff] %vm347, %v624
    %626 = vst.msk [vmem:[#allocation6 + $0x38] sm:$0xff] %vm347, %v624
    %v627 = vld [vmem:[#allocation2 + $0x8] sm:$0xff]
    %v628 = vld [vmem:[#allocation2 + $0x30] sm:$0xff]
    %v629 = vsel %vm272, %v627, %v628
    %v630 = vld [vmem:[#allocation3 + $0x8] sm:$0xff]
    %v631 = vld [vmem:[#allocation3 + $0x30] sm:$0xff]
    %v632 = vsel %vm272, %v630, %v631
    %v633 = vld [vmem:[#allocation4 + $0x8] sm:$0xff]
    %v634 = vld [vmem:[#allocation4 + $0x30] sm:$0xff]
    %v635 = vsel %vm272, %v633, %v634
    %v636 = vld [vmem:[%s15] sm:$0xff]
    %v637 = vld [vmem:[%s15 + $0x8] sm:$0xff]
    %v638 = vld [vmem:[%s15 + $0x10] sm:$0xff]
    %v639 = vld [vmem:[%s15 + $0x18] sm:$0xff]
    %v640 = vld [vmem:[%s15 + $0x20] sm:$0xff]
    %v641 = vld [vmem:[%s15 + $0x28] sm:$0xff]
    %v642 = vld [vmem:[%s15 + $0x30] sm:$0xff]
    %v643 = vld [vmem:[%s15 + $0x38] sm:$0xff]
    %v644 = vld [vmem:[%s27] sm:$0x1]
    %v646 = vperm.slane %v644, 0
    %v649 = vsel %vm347, %v624, 0
    %651 = vmatpush.msra.mxu0 0.0
    %652 = vmatpush.msra.mxu0 0.0
    %653 = vmatpush.msra.mxu0 0.0
    %654 = vmatpush.msra.mxu0 0.0
    %655 = vmatpush.msra.mxu0 0.0
    %656 = vmatpush.msra.mxu0 0.0
    %657 = vmatpush.msra.mxu0 0.0
    %658 = vmatpush.msra.mxu0 0.0
    %659 = vmatpush.msra.mxu0 %v643
    %660 = vmatpush.msra.mxu0 %v642
    %661 = vmatpush.msra.mxu0 %v641
    %662 = vmatpush.msra.mxu0 %v640
    %663 = vmatpush.msra.mxu0 %v639
    %664 = vmatpush.msra.mxu0 %v638
    %665 = vmatpush.msra.mxu0 %v637
    %666 = vmatpush.msra.mxu0 %v636
    %667 = vmatmul.f32.gmra.mxu0 %v649
    %v668 = vpop.f32.mrf.mxu0
    %v669 = vadd.f32 %v646, %v668
    %670 = vdwg.mxu0
    %v671 = vld [vmem:[%s17] sm:$0xff]
    %v672 = vld [vmem:[%s17 + $0x8] sm:$0xff]
    %v673 = vld [vmem:[%s17 + $0x10] sm:$0xff]
    %v674 = vld [vmem:[%s17 + $0x18] sm:$0xff]
    %v675 = vld [vmem:[%s17 + $0x20] sm:$0xff]
    %v676 = vld [vmem:[%s17 + $0x28] sm:$0xff]
    %v677 = vld [vmem:[%s17 + $0x30] sm:$0xff]
    %v678 = vld [vmem:[%s17 + $0x38] sm:$0xff]
    %v679 = vld [vmem:[%s29] sm:$0x1]
    %v681 = vperm.slane %v679, 0
    %683 = vmatpush.msra.mxu0 0.0
    %684 = vmatpush.msra.mxu0 0.0
    %685 = vmatpush.msra.mxu0 0.0
    %686 = vmatpush.msra.mxu0 0.0
    %687 = vmatpush.msra.mxu0 0.0
    %688 = vmatpush.msra.mxu0 0.0
    %689 = vmatpush.msra.mxu0 0.0
    %690 = vmatpush.msra.mxu0 0.0
    %691 = vmatpush.msra.mxu0 %v678
    %692 = vmatpush.msra.mxu0 %v677
    %693 = vmatpush.msra.mxu0 %v676
    %694 = vmatpush.msra.mxu0 %v675
    %695 = vmatpush.msra.mxu0 %v674
    %696 = vmatpush.msra.mxu0 %v673
    %697 = vmatpush.msra.mxu0 %v672
    %698 = vmatpush.msra.mxu0 %v671
    %699 = vmatmul.f32.gmra.mxu0 %v649
    %v700 = vpop.f32.mrf.mxu0
    %v701 = vadd.f32 %v681, %v700
    %702 = vdwg.mxu0
    %v703 = vld [vmem:[%s19] sm:$0xff]
    %v704 = vld [vmem:[%s19 + $0x8] sm:$0xff]
    %v705 = vld [vmem:[%s19 + $0x10] sm:$0xff]
    %v706 = vld [vmem:[%s19 + $0x18] sm:$0xff]
    %v707 = vld [vmem:[%s19 + $0x20] sm:$0xff]
    %v708 = vld [vmem:[%s19 + $0x28] sm:$0xff]
    %v709 = vld [vmem:[%s19 + $0x30] sm:$0xff]
    %v710 = vld [vmem:[%s19 + $0x38] sm:$0xff]
    %v711 = vld [vmem:[%s31] sm:$0x1]
    %v713 = vperm.slane %v711, 0
    %715 = vmatpush.msra.mxu0 0.0
    %716 = vmatpush.msra.mxu0 0.0
    %717 = vmatpush.msra.mxu0 0.0
    %718 = vmatpush.msra.mxu0 0.0
    %719 = vmatpush.msra.mxu0 0.0
    %720 = vmatpush.msra.mxu0 0.0
    %721 = vmatpush.msra.mxu0 0.0
    %722 = vmatpush.msra.mxu0 0.0
    %723 = vmatpush.msra.mxu0 %v710
    %724 = vmatpush.msra.mxu0 %v709
    %725 = vmatpush.msra.mxu0 %v708
    %726 = vmatpush.msra.mxu0 %v707
    %727 = vmatpush.msra.mxu0 %v706
    %728 = vmatpush.msra.mxu0 %v705
    %729 = vmatpush.msra.mxu0 %v704
    %730 = vmatpush.msra.mxu0 %v703
    %731 = vmatmul.f32.gmra.mxu0 %v649
    %v732 = vpop.f32.mrf.mxu0
    %v733 = vadd.f32 %v713, %v732
    %734 = vdwg.mxu0
    %v735 = vadd.f32 %v629, %v669
    %v736 = vxor.u32 %v735, 2147483648
    %v737 = vmul.f32 %v736, 1.442695
    %v738 = vpow.pop %v737
    %v739 = vadd.f32 %v738, 1.0
    %v740 = vrcp.pop %v739
    %v741 = vmul.f32 %v739, %v740
    %v742 = vsub.f32 1.0, %v741
    %v743 = vmul.f32 %v740, %v742
    %v744 = vadd.f32 %v740, %v743
    %vm745 = vweird.f32 %v739
    %vm746 = vweird.f32 %v740
    %vm747 = vmor %vm745, %vm746
    %v748 = vsel %vm747, %v740, %v744
    %v749 = vand.u32 2147483647, %v739
    %vm750 = vcmp.eq.f32.partialorder %v749, 8.507059e+37
    %v751 = vand.u32 %v739, 2147483648
    %v752 = vor.u32 1.1754944e-38, %v751
    %v753 = vsel %vm750, %v752, %v748
    %v754 = vmul.f32 1.0, %v753
    %v755 = vadd.f32 %v632, %v701
    %v756 = vxor.u32 %v755, 2147483648
    %v757 = vmul.f32 %v756, 1.442695
    %v758 = vpow.pop %v757
    %v759 = vadd.f32 %v758, 1.0
    %v760 = vrcp.pop %v759
    %v761 = vmul.f32 %v759, %v760
    %v762 = vsub.f32 1.0, %v761
    %v763 = vmul.f32 %v760, %v762
    %v764 = vadd.f32 %v760, %v763
    %vm765 = vweird.f32 %v759
    %vm766 = vweird.f32 %v760
    %vm767 = vmor %vm765, %vm766
    %v768 = vsel %vm767, %v760, %v764
    %v769 = vand.u32 2147483647, %v759
    %vm770 = vcmp.eq.f32.partialorder %v769, 8.507059e+37
    %v771 = vand.u32 %v759, 2147483648
    %v772 = vor.u32 1.1754944e-38, %v771
    %v773 = vsel %vm770, %v772, %v768
    %v774 = vmul.f32 1.0, %v773
    %v775 = vmul.f32 %v754, %v733
    %v776 = vadd.f32 %v635, %v775
    %v777 = vtanh.pop %v776
    %v778 = vsub.f32 1.0, %v774
    %v779 = vmul.f32 %v778, %v777
    %v780 = vmul.f32 %v774, %v624
    %v781 = vadd.f32 %v779, %v780
    %782 = vst.msk [vmem:[#allocation5 + $0x8] sm:$0xff] %vm347, %v781
    %783 = vst.msk [vmem:[#allocation6 + $0x30] sm:$0xff] %vm347, %v781
    %v784 = vld [vmem:[#allocation2 + $0x10] sm:$0xff]
    %v785 = vld [vmem:[#allocation2 + $0x28] sm:$0xff]
    %v786 = vsel %vm272, %v784, %v785
    %v787 = vld [vmem:[#allocation3 + $0x10] sm:$0xff]
    %v788 = vld [vmem:[#allocation3 + $0x28] sm:$0xff]
    %v789 = vsel %vm272, %v787, %v788
    %v790 = vld [vmem:[#allocation4 + $0x10] sm:$0xff]
    %v791 = vld [vmem:[#allocation4 + $0x28] sm:$0xff]
    %v792 = vsel %vm272, %v790, %v791
    %v793 = vld [vmem:[%s15] sm:$0xff]
    %v794 = vld [vmem:[%s15 + $0x8] sm:$0xff]
    %v795 = vld [vmem:[%s15 + $0x10] sm:$0xff]
    %v796 = vld [vmem:[%s15 + $0x18] sm:$0xff]
    %v797 = vld [vmem:[%s15 + $0x20] sm:$0xff]
    %v798 = vld [vmem:[%s15 + $0x28] sm:$0xff]
    %v799 = vld [vmem:[%s15 + $0x30] sm:$0xff]
    %v800 = vld [vmem:[%s15 + $0x38] sm:$0xff]
    %v801 = vld [vmem:[%s27] sm:$0x1]
    %v803 = vperm.slane %v801, 0
    %v806 = vsel %vm347, %v781, 0
    %808 = vmatpush.msra.mxu0 0.0
    %809 = vmatpush.msra.mxu0 0.0
    %810 = vmatpush.msra.mxu0 0.0
    %811 = vmatpush.msra.mxu0 0.0
    %812 = vmatpush.msra.mxu0 0.0
    %813 = vmatpush.msra.mxu0 0.0
    %814 = vmatpush.msra.mxu0 0.0
    %815 = vmatpush.msra.mxu0 0.0
    %816 = vmatpush.msra.mxu0 %v800
    %817 = vmatpush.msra.mxu0 %v799
    %818 = vmatpush.msra.mxu0 %v798
    %819 = vmatpush.msra.mxu0 %v797
    %820 = vmatpush.msra.mxu0 %v796
    %821 = vmatpush.msra.mxu0 %v795
    %822 = vmatpush.msra.mxu0 %v794
    %823 = vmatpush.msra.mxu0 %v793
    %824 = vmatmul.f32.gmra.mxu0 %v806
    %v825 = vpop.f32.mrf.mxu0
    %v826 = vadd.f32 %v803, %v825
    %827 = vdwg.mxu0
    %v828 = vld [vmem:[%s17] sm:$0xff]
    %v829 = vld [vmem:[%s17 + $0x8] sm:$0xff]
    %v830 = vld [vmem:[%s17 + $0x10] sm:$0xff]
    %v831 = vld [vmem:[%s17 + $0x18] sm:$0xff]
    %v832 = vld [vmem:[%s17 + $0x20] sm:$0xff]
    %v833 = vld [vmem:[%s17 + $0x28] sm:$0xff]
    %v834 = vld [vmem:[%s17 + $0x30] sm:$0xff]
    %v835 = vld [vmem:[%s17 + $0x38] sm:$0xff]
    %v836 = vld [vmem:[%s29] sm:$0x1]
    %v838 = vperm.slane %v836, 0
    %840 = vmatpush.msra.mxu0 0.0
    %841 = vmatpush.msra.mxu0 0.0
    %842 = vmatpush.msra.mxu0 0.0
    %843 = vmatpush.msra.mxu0 0.0
    %844 = vmatpush.msra.mxu0 0.0
    %845 = vmatpush.msra.mxu0 0.0
    %846 = vmatpush.msra.mxu0 0.0
    %847 = vmatpush.msra.mxu0 0.0
    %848 = vmatpush.msra.mxu0 %v835
    %849 = vmatpush.msra.mxu0 %v834
    %850 = vmatpush.msra.mxu0 %v833
    %851 = vmatpush.msra.mxu0 %v832
    %852 = vmatpush.msra.mxu0 %v831
    %853 = vmatpush.msra.mxu0 %v830
    %854 = vmatpush.msra.mxu0 %v829
    %855 = vmatpush.msra.mxu0 %v828
    %856 = vmatmul.f32.gmra.mxu0 %v806
    %v857 = vpop.f32.mrf.mxu0
    %v858 = vadd.f32 %v838, %v857
    %859 = vdwg.mxu0
    %v860 = vld [vmem:[%s19] sm:$0xff]
    %v861 = vld [vmem:[%s19 + $0x8] sm:$0xff]
    %v862 = vld [vmem:[%s19 + $0x10] sm:$0xff]
    %v863 = vld [vmem:[%s19 + $0x18] sm:$0xff]
    %v864 = vld [vmem:[%s19 + $0x20] sm:$0xff]
    %v865 = vld [vmem:[%s19 + $0x28] sm:$0xff]
    %v866 = vld [vmem:[%s19 + $0x30] sm:$0xff]
    %v867 = vld [vmem:[%s19 + $0x38] sm:$0xff]
    %v868 = vld [vmem:[%s31] sm:$0x1]
    %v870 = vperm.slane %v868, 0
    %872 = vmatpush.msra.mxu0 0.0
    %873 = vmatpush.msra.mxu0 0.0
    %874 = vmatpush.msra.mxu0 0.0
    %875 = vmatpush.msra.mxu0 0.0
    %876 = vmatpush.msra.mxu0 0.0
    %877 = vmatpush.msra.mxu0 0.0
    %878 = vmatpush.msra.mxu0 0.0
    %879 = vmatpush.msra.mxu0 0.0
    %880 = vmatpush.msra.mxu0 %v867
    %881 = vmatpush.msra.mxu0 %v866
    %882 = vmatpush.msra.mxu0 %v865
    %883 = vmatpush.msra.mxu0 %v864
    %884 = vmatpush.msra.mxu0 %v863
    %885 = vmatpush.msra.mxu0 %v862
    %886 = vmatpush.msra.mxu0 %v861
    %887 = vmatpush.msra.mxu0 %v860
    %888 = vmatmul.f32.gmra.mxu0 %v806
    %v889 = vpop.f32.mrf.mxu0
    %v890 = vadd.f32 %v870, %v889
    %891 = vdwg.mxu0
    %v892 = vadd.f32 %v786, %v826
    %v893 = vxor.u32 %v892, 2147483648
    %v894 = vmul.f32 %v893, 1.442695
    %v895 = vpow.pop %v894
    %v896 = vadd.f32 %v895, 1.0
    %v897 = vrcp.pop %v896
    %v898 = vmul.f32 %v896, %v897
    %v899 = vsub.f32 1.0, %v898
    %v900 = vmul.f32 %v897, %v899
    %v901 = vadd.f32 %v897, %v900
    %vm902 = vweird.f32 %v896
    %vm903 = vweird.f32 %v897
    %vm904 = vmor %vm902, %vm903
    %v905 = vsel %vm904, %v897, %v901
    %v906 = vand.u32 2147483647, %v896
    %vm907 = vcmp.eq.f32.partialorder %v906, 8.507059e+37
    %v908 = vand.u32 %v896, 2147483648
    %v909 = vor.u32 1.1754944e-38, %v908
    %v910 = vsel %vm907, %v909, %v905
    %v911 = vmul.f32 1.0, %v910
    %v912 = vadd.f32 %v789, %v858
    %v913 = vxor.u32 %v912, 2147483648
    %v914 = vmul.f32 %v913, 1.442695
    %v915 = vpow.pop %v914
    %v916 = vadd.f32 %v915, 1.0
    %v917 = vrcp.pop %v916
    %v918 = vmul.f32 %v916, %v917
    %v919 = vsub.f32 1.0, %v918
    %v920 = vmul.f32 %v917, %v919
    %v921 = vadd.f32 %v917, %v920
    %vm922 = vweird.f32 %v916
    %vm923 = vweird.f32 %v917
    %vm924 = vmor %vm922, %vm923
    %v925 = vsel %vm924, %v917, %v921
    %v926 = vand.u32 2147483647, %v916
    %vm927 = vcmp.eq.f32.partialorder %v926, 8.507059e+37
    %v928 = vand.u32 %v916, 2147483648
    %v929 = vor.u32 1.1754944e-38, %v928
    %v930 = vsel %vm927, %v929, %v925
    %v931 = vmul.f32 1.0, %v930
    %v932 = vmul.f32 %v911, %v890
    %v933 = vadd.f32 %v792, %v932
    %v934 = vtanh.pop %v933
    %v935 = vsub.f32 1.0, %v931
    %v936 = vmul.f32 %v935, %v934
    %v937 = vmul.f32 %v931, %v781
    %v938 = vadd.f32 %v936, %v937
    %939 = vst.msk [vmem:[#allocation5 + $0x10] sm:$0xff] %vm347, %v938
    %940 = vst.msk [vmem:[#allocation6 + $0x28] sm:$0xff] %vm347, %v938
    %v941 = vld [vmem:[#allocation2 + $0x18] sm:$0xff]
    %v942 = vld [vmem:[#allocation2 + $0x20] sm:$0xff]
    %v943 = vsel %vm272, %v941, %v942
    %v944 = vld [vmem:[#allocation3 + $0x18] sm:$0xff]
    %v945 = vld [vmem:[#allocation3 + $0x20] sm:$0xff]
    %v946 = vsel %vm272, %v944, %v945
    %v947 = vld [vmem:[#allocation4 + $0x18] sm:$0xff]
    %v948 = vld [vmem:[#allocation4 + $0x20] sm:$0xff]
    %v949 = vsel %vm272, %v947, %v948
    %v950 = vld [vmem:[%s15] sm:$0xff]
    %v951 = vld [vmem:[%s15 + $0x8] sm:$0xff]
    %v952 = vld [vmem:[%s15 + $0x10] sm:$0xff]
    %v953 = vld [vmem:[%s15 + $0x18] sm:$0xff]
    %v954 = vld [vmem:[%s15 + $0x20] sm:$0xff]
    %v955 = vld [vmem:[%s15 + $0x28] sm:$0xff]
    %v956 = vld [vmem:[%s15 + $0x30] sm:$0xff]
    %v957 = vld [vmem:[%s15 + $0x38] sm:$0xff]
    %v958 = vld [vmem:[%s27] sm:$0x1]
    %v960 = vperm.slane %v958, 0
    %v963 = vsel %vm347, %v938, 0
    %965 = vmatpush.msra.mxu0 0.0
    %966 = vmatpush.msra.mxu0 0.0
    %967 = vmatpush.msra.mxu0 0.0
    %968 = vmatpush.msra.mxu0 0.0
    %969 = vmatpush.msra.mxu0 0.0
    %970 = vmatpush.msra.mxu0 0.0
    %971 = vmatpush.msra.mxu0 0.0
    %972 = vmatpush.msra.mxu0 0.0
    %973 = vmatpush.msra.mxu0 %v957
    %974 = vmatpush.msra.mxu0 %v956
    %975 = vmatpush.msra.mxu0 %v955
    %976 = vmatpush.msra.mxu0 %v954
    %977 = vmatpush.msra.mxu0 %v953
    %978 = vmatpush.msra.mxu0 %v952
    %979 = vmatpush.msra.mxu0 %v951
    %980 = vmatpush.msra.mxu0 %v950
    %981 = vmatmul.f32.gmra.mxu0 %v963
    %v982 = vpop.f32.mrf.mxu0
    %v983 = vadd.f32 %v960, %v982
    %984 = vdwg.mxu0
    %v985 = vld [vmem:[%s17] sm:$0xff]
    %v986 = vld [vmem:[%s17 + $0x8] sm:$0xff]
    %v987 = vld [vmem:[%s17 + $0x10] sm:$0xff]
    %v988 = vld [vmem:[%s17 + $0x18] sm:$0xff]
    %v989 = vld [vmem:[%s17 + $0x20] sm:$0xff]
    %v990 = vld [vmem:[%s17 + $0x28] sm:$0xff]
    %v991 = vld [vmem:[%s17 + $0x30] sm:$0xff]
    %v992 = vld [vmem:[%s17 + $0x38] sm:$0xff]
    %v993 = vld [vmem:[%s29] sm:$0x1]
    %v995 = vperm.slane %v993, 0
    %997 = vmatpush.msra.mxu0 0.0
    %998 = vmatpush.msra.mxu0 0.0
    %999 = vmatpush.msra.mxu0 0.0
    %1000 = vmatpush.msra.mxu0 0.0
    %1001 = vmatpush.msra.mxu0 0.0
    %1002 = vmatpush.msra.mxu0 0.0
    %1003 = vmatpush.msra.mxu0 0.0
    %1004 = vmatpush.msra.mxu0 0.0
    %1005 = vmatpush.msra.mxu0 %v992
    %1006 = vmatpush.msra.mxu0 %v991
    %1007 = vmatpush.msra.mxu0 %v990
    %1008 = vmatpush.msra.mxu0 %v989
    %1009 = vmatpush.msra.mxu0 %v988
    %1010 = vmatpush.msra.mxu0 %v987
    %1011 = vmatpush.msra.mxu0 %v986
    %1012 = vmatpush.msra.mxu0 %v985
    %1013 = vmatmul.f32.gmra.mxu0 %v963
    %v1014 = vpop.f32.mrf.mxu0
    %v1015 = vadd.f32 %v995, %v1014
    %1016 = vdwg.mxu0
    %v1017 = vld [vmem:[%s19] sm:$0xff]
    %v1018 = vld [vmem:[%s19 + $0x8] sm:$0xff]
    %v1019 = vld [vmem:[%s19 + $0x10] sm:$0xff]
    %v1020 = vld [vmem:[%s19 + $0x18] sm:$0xff]
    %v1021 = vld [vmem:[%s19 + $0x20] sm:$0xff]
    %v1022 = vld [vmem:[%s19 + $0x28] sm:$0xff]
    %v1023 = vld [vmem:[%s19 + $0x30] sm:$0xff]
    %v1024 = vld [vmem:[%s19 + $0x38] sm:$0xff]
    %v1025 = vld [vmem:[%s31] sm:$0x1]
    %v1027 = vperm.slane %v1025, 0
    %1029 = vmatpush.msra.mxu0 0.0
    %1030 = vmatpush.msra.mxu0 0.0
    %1031 = vmatpush.msra.mxu0 0.0
    %1032 = vmatpush.msra.mxu0 0.0
    %1033 = vmatpush.msra.mxu0 0.0
    %1034 = vmatpush.msra.mxu0 0.0
    %1035 = vmatpush.msra.mxu0 0.0
    %1036 = vmatpush.msra.mxu0 0.0
    %1037 = vmatpush.msra.mxu0 %v1024
    %1038 = vmatpush.msra.mxu0 %v1023
    %1039 = vmatpush.msra.mxu0 %v1022
    %1040 = vmatpush.msra.mxu0 %v1021
    %1041 = vmatpush.msra.mxu0 %v1020
    %1042 = vmatpush.msra.mxu0 %v1019
    %1043 = vmatpush.msra.mxu0 %v1018
    %1044 = vmatpush.msra.mxu0 %v1017
    %1045 = vmatmul.f32.gmra.mxu0 %v963
    %v1046 = vpop.f32.mrf.mxu0
    %v1047 = vadd.f32 %v1027, %v1046
    %1048 = vdwg.mxu0
    %v1049 = vadd.f32 %v943, %v983
    %v1050 = vxor.u32 %v1049, 2147483648
    %v1051 = vmul.f32 %v1050, 1.442695
    %v1052 = vpow.pop %v1051
    %v1053 = vadd.f32 %v1052, 1.0
    %v1054 = vrcp.pop %v1053
    %v1055 = vmul.f32 %v1053, %v1054
    %v1056 = vsub.f32 1.0, %v1055
    %v1057 = vmul.f32 %v1054, %v1056
    %v1058 = vadd.f32 %v1054, %v1057
    %vm1059 = vweird.f32 %v1053
    %vm1060 = vweird.f32 %v1054
    %vm1061 = vmor %vm1059, %vm1060
    %v1062 = vsel %vm1061, %v1054, %v1058
    %v1063 = vand.u32 2147483647, %v1053
    %vm1064 = vcmp.eq.f32.partialorder %v1063, 8.507059e+37
    %v1065 = vand.u32 %v1053, 2147483648
    %v1066 = vor.u32 1.1754944e-38, %v1065
    %v1067 = vsel %vm1064, %v1066, %v1062
    %v1068 = vmul.f32 1.0, %v1067
    %v1069 = vadd.f32 %v946, %v1015
    %v1070 = vxor.u32 %v1069, 2147483648
    %v1071 = vmul.f32 %v1070, 1.442695
    %v1072 = vpow.pop %v1071
    %v1073 = vadd.f32 %v1072, 1.0
    %v1074 = vrcp.pop %v1073
    %v1075 = vmul.f32 %v1073, %v1074
    %v1076 = vsub.f32 1.0, %v1075
    %v1077 = vmul.f32 %v1074, %v1076
    %v1078 = vadd.f32 %v1074, %v1077
    %vm1079 = vweird.f32 %v1073
    %vm1080 = vweird.f32 %v1074
    %vm1081 = vmor %vm1079, %vm1080
    %v1082 = vsel %vm1081, %v1074, %v1078
    %v1083 = vand.u32 2147483647, %v1073
    %vm1084 = vcmp.eq.f32.partialorder %v1083, 8.507059e+37
    %v1085 = vand.u32 %v1073, 2147483648
    %v1086 = vor.u32 1.1754944e-38, %v1085
    %v1087 = vsel %vm1084, %v1086, %v1082
    %v1088 = vmul.f32 1.0, %v1087
    %v1089 = vmul.f32 %v1068, %v1047
    %v1090 = vadd.f32 %v949, %v1089
    %v1091 = vtanh.pop %v1090
    %v1092 = vsub.f32 1.0, %v1088
    %v1093 = vmul.f32 %v1092, %v1091
    %v1094 = vmul.f32 %v1088, %v938
    %v1095 = vadd.f32 %v1093, %v1094
    %1096 = vst.msk [vmem:[#allocation5 + $0x18] sm:$0xff] %vm347, %v1095
    %1097 = vst.msk [vmem:[#allocation6 + $0x20] sm:$0xff] %vm347, %v1095
    %v1098 = vld [vmem:[#allocation2 + $0x20] sm:$0xff]
    %v1099 = vld [vmem:[#allocation2 + $0x18] sm:$0xff]
    %v1100 = vsel %vm272, %v1098, %v1099
    %v1101 = vld [vmem:[#allocation3 + $0x20] sm:$0xff]
    %v1102 = vld [vmem:[#allocation3 + $0x18] sm:$0xff]
    %v1103 = vsel %vm272, %v1101, %v1102
    %v1104 = vld [vmem:[#allocation4 + $0x20] sm:$0xff]
    %v1105 = vld [vmem:[#allocation4 + $0x18] sm:$0xff]
    %v1106 = vsel %vm272, %v1104, %v1105
    %v1107 = vld [vmem:[%s15] sm:$0xff]
    %v1108 = vld [vmem:[%s15 + $0x8] sm:$0xff]
    %v1109 = vld [vmem:[%s15 + $0x10] sm:$0xff]
    %v1110 = vld [vmem:[%s15 + $0x18] sm:$0xff]
    %v1111 = vld [vmem:[%s15 + $0x20] sm:$0xff]
    %v1112 = vld [vmem:[%s15 + $0x28] sm:$0xff]
    %v1113 = vld [vmem:[%s15 + $0x30] sm:$0xff]
    %v1114 = vld [vmem:[%s15 + $0x38] sm:$0xff]
    %v1115 = vld [vmem:[%s27] sm:$0x1]
    %v1117 = vperm.slane %v1115, 0
    %v1120 = vsel %vm347, %v1095, 0
    %1122 = vmatpush.msra.mxu0 0.0
    %1123 = vmatpush.msra.mxu0 0.0
    %1124 = vmatpush.msra.mxu0 0.0
    %1125 = vmatpush.msra.mxu0 0.0
    %1126 = vmatpush.msra.mxu0 0.0
    %1127 = vmatpush.msra.mxu0 0.0
    %1128 = vmatpush.msra.mxu0 0.0
    %1129 = vmatpush.msra.mxu0 0.0
    %1130 = vmatpush.msra.mxu0 %v1114
    %1131 = vmatpush.msra.mxu0 %v1113
    %1132 = vmatpush.msra.mxu0 %v1112
    %1133 = vmatpush.msra.mxu0 %v1111
    %1134 = vmatpush.msra.mxu0 %v1110
    %1135 = vmatpush.msra.mxu0 %v1109
    %1136 = vmatpush.msra.mxu0 %v1108
    %1137 = vmatpush.msra.mxu0 %v1107
    %1138 = vmatmul.f32.gmra.mxu0 %v1120
    %v1139 = vpop.f32.mrf.mxu0
    %v1140 = vadd.f32 %v1117, %v1139
    %1141 = vdwg.mxu0
    %v1142 = vld [vmem:[%s17] sm:$0xff]
    %v1143 = vld [vmem:[%s17 + $0x8] sm:$0xff]
    %v1144 = vld [vmem:[%s17 + $0x10] sm:$0xff]
    %v1145 = vld [vmem:[%s17 + $0x18] sm:$0xff]
    %v1146 = vld [vmem:[%s17 + $0x20] sm:$0xff]
    %v1147 = vld [vmem:[%s17 + $0x28] sm:$0xff]
    %v1148 = vld [vmem:[%s17 + $0x30] sm:$0xff]
    %v1149 = vld [vmem:[%s17 + $0x38] sm:$0xff]
    %v1150 = vld [vmem:[%s29] sm:$0x1]
    %v1152 = vperm.slane %v1150, 0
    %1154 = vmatpush.msra.mxu0 0.0
    %1155 = vmatpush.msra.mxu0 0.0
    %1156 = vmatpush.msra.mxu0 0.0
    %1157 = vmatpush.msra.mxu0 0.0
    %1158 = vmatpush.msra.mxu0 0.0
    %1159 = vmatpush.msra.mxu0 0.0
    %1160 = vmatpush.msra.mxu0 0.0
    %1161 = vmatpush.msra.mxu0 0.0
    %1162 = vmatpush.msra.mxu0 %v1149
    %1163 = vmatpush.msra.mxu0 %v1148
    %1164 = vmatpush.msra.mxu0 %v1147
    %1165 = vmatpush.msra.mxu0 %v1146
    %1166 = vmatpush.msra.mxu0 %v1145
    %1167 = vmatpush.msra.mxu0 %v1144
    %1168 = vmatpush.msra.mxu0 %v1143
    %1169 = vmatpush.msra.mxu0 %v1142
    %1170 = vmatmul.f32.gmra.mxu0 %v1120
    %v1171 = vpop.f32.mrf.mxu0
    %v1172 = vadd.f32 %v1152, %v1171
    %1173 = vdwg.mxu0
    %v1174 = vld [vmem:[%s19] sm:$0xff]
    %v1175 = vld [vmem:[%s19 + $0x8] sm:$0xff]
    %v1176 = vld [vmem:[%s19 + $0x10] sm:$0xff]
    %v1177 = vld [vmem:[%s19 + $0x18] sm:$0xff]
    %v1178 = vld [vmem:[%s19 + $0x20] sm:$0xff]
    %v1179 = vld [vmem:[%s19 + $0x28] sm:$0xff]
    %v1180 = vld [vmem:[%s19 + $0x30] sm:$0xff]
    %v1181 = vld [vmem:[%s19 + $0x38] sm:$0xff]
    %v1182 = vld [vmem:[%s31] sm:$0x1]
    %v1184 = vperm.slane %v1182, 0
    %1186 = vmatpush.msra.mxu0 0.0
    %1187 = vmatpush.msra.mxu0 0.0
    %1188 = vmatpush.msra.mxu0 0.0
    %1189 = vmatpush.msra.mxu0 0.0
    %1190 = vmatpush.msra.mxu0 0.0
    %1191 = vmatpush.msra.mxu0 0.0
    %1192 = vmatpush.msra.mxu0 0.0
    %1193 = vmatpush.msra.mxu0 0.0
    %1194 = vmatpush.msra.mxu0 %v1181
    %1195 = vmatpush.msra.mxu0 %v1180
    %1196 = vmatpush.msra.mxu0 %v1179
    %1197 = vmatpush.msra.mxu0 %v1178
    %1198 = vmatpush.msra.mxu0 %v1177
    %1199 = vmatpush.msra.mxu0 %v1176
    %1200 = vmatpush.msra.mxu0 %v1175
    %1201 = vmatpush.msra.mxu0 %v1174
    %1202 = vmatmul.f32.gmra.mxu0 %v1120
    %v1203 = vpop.f32.mrf.mxu0
    %v1204 = vadd.f32 %v1184, %v1203
    %1205 = vdwg.mxu0
    %v1206 = vadd.f32 %v1100, %v1140
    %v1207 = vxor.u32 %v1206, 2147483648
    %v1208 = vmul.f32 %v1207, 1.442695
    %v1209 = vpow.pop %v1208
    %v1210 = vadd.f32 %v1209, 1.0
    %v1211 = vrcp.pop %v1210
    %v1212 = vmul.f32 %v1210, %v1211
    %v1213 = vsub.f32 1.0, %v1212
    %v1214 = vmul.f32 %v1211, %v1213
    %v1215 = vadd.f32 %v1211, %v1214
    %vm1216 = vweird.f32 %v1210
    %vm1217 = vweird.f32 %v1211
    %vm1218 = vmor %vm1216, %vm1217
    %v1219 = vsel %vm1218, %v1211, %v1215
    %v1220 = vand.u32 2147483647, %v1210
    %vm1221 = vcmp.eq.f32.partialorder %v1220, 8.507059e+37
    %v1222 = vand.u32 %v1210, 2147483648
    %v1223 = vor.u32 1.1754944e-38, %v1222
    %v1224 = vsel %vm1221, %v1223, %v1219
    %v1225 = vmul.f32 1.0, %v1224
    %v1226 = vadd.f32 %v1103, %v1172
    %v1227 = vxor.u32 %v1226, 2147483648
    %v1228 = vmul.f32 %v1227, 1.442695
    %v1229 = vpow.pop %v1228
    %v1230 = vadd.f32 %v1229, 1.0
    %v1231 = vrcp.pop %v1230
    %v1232 = vmul.f32 %v1230, %v1231
    %v1233 = vsub.f32 1.0, %v1232
    %v1234 = vmul.f32 %v1231, %v1233
    %v1235 = vadd.f32 %v1231, %v1234
    %vm1236 = vweird.f32 %v1230
    %vm1237 = vweird.f32 %v1231
    %vm1238 = vmor %vm1236, %vm1237
    %v1239 = vsel %vm1238, %v1231, %v1235
    %v1240 = vand.u32 2147483647, %v1230
    %vm1241 = vcmp.eq.f32.partialorder %v1240, 8.507059e+37
    %v1242 = vand.u32 %v1230, 2147483648
    %v1243 = vor.u32 1.1754944e-38, %v1242
    %v1244 = vsel %vm1241, %v1243, %v1239
    %v1245 = vmul.f32 1.0, %v1244
    %v1246 = vmul.f32 %v1225, %v1204
    %v1247 = vadd.f32 %v1106, %v1246
    %v1248 = vtanh.pop %v1247
    %v1249 = vsub.f32 1.0, %v1245
    %v1250 = vmul.f32 %v1249, %v1248
    %v1251 = vmul.f32 %v1245, %v1095
    %v1252 = vadd.f32 %v1250, %v1251
    %1253 = vst.msk [vmem:[#allocation5 + $0x20] sm:$0xff] %vm347, %v1252
    %1254 = vst.msk [vmem:[#allocation6 + $0x18] sm:$0xff] %vm347, %v1252
    %v1255 = vld [vmem:[#allocation2 + $0x28] sm:$0xff]
    %v1256 = vld [vmem:[#allocation2 + $0x10] sm:$0xff]
    %v1257 = vsel %vm272, %v1255, %v1256
    %v1258 = vld [vmem:[#allocation3 + $0x28] sm:$0xff]
    %v1259 = vld [vmem:[#allocation3 + $0x10] sm:$0xff]
    %v1260 = vsel %vm272, %v1258, %v1259
    %v1261 = vld [vmem:[#allocation4 + $0x28] sm:$0xff]
    %v1262 = vld [vmem:[#allocation4 + $0x10] sm:$0xff]
    %v1263 = vsel %vm272, %v1261, %v1262
    %v1264 = vld [vmem:[%s15] sm:$0xff]
    %v1265 = vld [vmem:[%s15 + $0x8] sm:$0xff]
    %v1266 = vld [vmem:[%s15 + $0x10] sm:$0xff]
    %v1267 = vld [vmem:[%s15 + $0x18] sm:$0xff]
    %v1268 = vld [vmem:[%s15 + $0x20] sm:$0xff]
    %v1269 = vld [vmem:[%s15 + $0x28] sm:$0xff]
    %v1270 = vld [vmem:[%s15 + $0x30] sm:$0xff]
    %v1271 = vld [vmem:[%s15 + $0x38] sm:$0xff]
    %v1272 = vld [vmem:[%s27] sm:$0x1]
    %v1274 = vperm.slane %v1272, 0
    %v1277 = vsel %vm347, %v1252, 0
    %1279 = vmatpush.msra.mxu0 0.0
    %1280 = vmatpush.msra.mxu0 0.0
    %1281 = vmatpush.msra.mxu0 0.0
    %1282 = vmatpush.msra.mxu0 0.0
    %1283 = vmatpush.msra.mxu0 0.0
    %1284 = vmatpush.msra.mxu0 0.0
    %1285 = vmatpush.msra.mxu0 0.0
    %1286 = vmatpush.msra.mxu0 0.0
    %1287 = vmatpush.msra.mxu0 %v1271
    %1288 = vmatpush.msra.mxu0 %v1270
    %1289 = vmatpush.msra.mxu0 %v1269
    %1290 = vmatpush.msra.mxu0 %v1268
    %1291 = vmatpush.msra.mxu0 %v1267
    %1292 = vmatpush.msra.mxu0 %v1266
    %1293 = vmatpush.msra.mxu0 %v1265
    %1294 = vmatpush.msra.mxu0 %v1264
    %1295 = vmatmul.f32.gmra.mxu0 %v1277
    %v1296 = vpop.f32.mrf.mxu0
    %v1297 = vadd.f32 %v1274, %v1296
    %1298 = vdwg.mxu0
    %v1299 = vld [vmem:[%s17] sm:$0xff]
    %v1300 = vld [vmem:[%s17 + $0x8] sm:$0xff]
    %v1301 = vld [vmem:[%s17 + $0x10] sm:$0xff]
    %v1302 = vld [vmem:[%s17 + $0x18] sm:$0xff]
    %v1303 = vld [vmem:[%s17 + $0x20] sm:$0xff]
    %v1304 = vld [vmem:[%s17 + $0x28] sm:$0xff]
    %v1305 = vld [vmem:[%s17 + $0x30] sm:$0xff]
    %v1306 = vld [vmem:[%s17 + $0x38] sm:$0xff]
    %v1307 = vld [vmem:[%s29] sm:$0x1]
    %v1309 = vperm.slane %v1307, 0
    %1311 = vmatpush.msra.mxu0 0.0
    %1312 = vmatpush.msra.mxu0 0.0
    %1313 = vmatpush.msra.mxu0 0.0
    %1314 = vmatpush.msra.mxu0 0.0
    %1315 = vmatpush.msra.mxu0 0.0
    %1316 = vmatpush.msra.mxu0 0.0
    %1317 = vmatpush.msra.mxu0 0.0
    %1318 = vmatpush.msra.mxu0 0.0
    %1319 = vmatpush.msra.mxu0 %v1306
    %1320 = vmatpush.msra.mxu0 %v1305
    %1321 = vmatpush.msra.mxu0 %v1304
    %1322 = vmatpush.msra.mxu0 %v1303
    %1323 = vmatpush.msra.mxu0 %v1302
    %1324 = vmatpush.msra.mxu0 %v1301
    %1325 = vmatpush.msra.mxu0 %v1300
    %1326 = vmatpush.msra.mxu0 %v1299
    %1327 = vmatmul.f32.gmra.mxu0 %v1277
    %v1328 = vpop.f32.mrf.mxu0
    %v1329 = vadd.f32 %v1309, %v1328
    %1330 = vdwg.mxu0
    %v1331 = vld [vmem:[%s19] sm:$0xff]
    %v1332 = vld [vmem:[%s19 + $0x8] sm:$0xff]
    %v1333 = vld [vmem:[%s19 + $0x10] sm:$0xff]
    %v1334 = vld [vmem:[%s19 + $0x18] sm:$0xff]
    %v1335 = vld [vmem:[%s19 + $0x20] sm:$0xff]
    %v1336 = vld [vmem:[%s19 + $0x28] sm:$0xff]
    %v1337 = vld [vmem:[%s19 + $0x30] sm:$0xff]
    %v1338 = vld [vmem:[%s19 + $0x38] sm:$0xff]
    %v1339 = vld [vmem:[%s31] sm:$0x1]
    %v1341 = vperm.slane %v1339, 0
    %1343 = vmatpush.msra.mxu0 0.0
    %1344 = vmatpush.msra.mxu0 0.0
    %1345 = vmatpush.msra.mxu0 0.0
    %1346 = vmatpush.msra.mxu0 0.0
    %1347 = vmatpush.msra.mxu0 0.0
    %1348 = vmatpush.msra.mxu0 0.0
    %1349 = vmatpush.msra.mxu0 0.0
    %1350 = vmatpush.msra.mxu0 0.0
    %1351 = vmatpush.msra.mxu0 %v1338
    %1352 = vmatpush.msra.mxu0 %v1337
    %1353 = vmatpush.msra.mxu0 %v1336
    %1354 = vmatpush.msra.mxu0 %v1335
    %1355 = vmatpush.msra.mxu0 %v1334
    %1356 = vmatpush.msra.mxu0 %v1333
    %1357 = vmatpush.msra.mxu0 %v1332
    %1358 = vmatpush.msra.mxu0 %v1331
    %1359 = vmatmul.f32.gmra.mxu0 %v1277
    %v1360 = vpop.f32.mrf.mxu0
    %v1361 = vadd.f32 %v1341, %v1360
    %1362 = vdwg.mxu0
    %v1363 = vadd.f32 %v1257, %v1297
    %v1364 = vxor.u32 %v1363, 2147483648
    %v1365 = vmul.f32 %v1364, 1.442695
    %v1366 = vpow.pop %v1365
    %v1367 = vadd.f32 %v1366, 1.0
    %v1368 = vrcp.pop %v1367
    %v1369 = vmul.f32 %v1367, %v1368
    %v1370 = vsub.f32 1.0, %v1369
    %v1371 = vmul.f32 %v1368, %v1370
    %v1372 = vadd.f32 %v1368, %v1371
    %vm1373 = vweird.f32 %v1367
    %vm1374 = vweird.f32 %v1368
    %vm1375 = vmor %vm1373, %vm1374
    %v1376 = vsel %vm1375, %v1368, %v1372
    %v1377 = vand.u32 2147483647, %v1367
    %vm1378 = vcmp.eq.f32.partialorder %v1377, 8.507059e+37
    %v1379 = vand.u32 %v1367, 2147483648
    %v1380 = vor.u32 1.1754944e-38, %v1379
    %v1381 = vsel %vm1378, %v1380, %v1376
    %v1382 = vmul.f32 1.0, %v1381
    %v1383 = vadd.f32 %v1260, %v1329
    %v1384 = vxor.u32 %v1383, 2147483648
    %v1385 = vmul.f32 %v1384, 1.442695
    %v1386 = vpow.pop %v1385
    %v1387 = vadd.f32 %v1386, 1.0
    %v1388 = vrcp.pop %v1387
    %v1389 = vmul.f32 %v1387, %v1388
    %v1390 = vsub.f32 1.0, %v1389
    %v1391 = vmul.f32 %v1388, %v1390
    %v1392 = vadd.f32 %v1388, %v1391
    %vm1393 = vweird.f32 %v1387
    %vm1394 = vweird.f32 %v1388
    %vm1395 = vmor %vm1393, %vm1394
    %v1396 = vsel %vm1395, %v1388, %v1392
    %v1397 = vand.u32 2147483647, %v1387
    %vm1398 = vcmp.eq.f32.partialorder %v1397, 8.507059e+37
    %v1399 = vand.u32 %v1387, 2147483648
    %v1400 = vor.u32 1.1754944e-38, %v1399
    %v1401 = vsel %vm1398, %v1400, %v1396
    %v1402 = vmul.f32 1.0, %v1401
    %v1403 = vmul.f32 %v1382, %v1361
    %v1404 = vadd.f32 %v1263, %v1403
    %v1405 = vtanh.pop %v1404
    %v1406 = vsub.f32 1.0, %v1402
    %v1407 = vmul.f32 %v1406, %v1405
    %v1408 = vmul.f32 %v1402, %v1252
    %v1409 = vadd.f32 %v1407, %v1408
    %1410 = vst.msk [vmem:[#allocation5 + $0x28] sm:$0xff] %vm347, %v1409
    %1411 = vst.msk [vmem:[#allocation6 + $0x10] sm:$0xff] %vm347, %v1409
    %v1412 = vld [vmem:[#allocation2 + $0x30] sm:$0xff]
    %v1413 = vld [vmem:[#allocation2 + $0x8] sm:$0xff]
    %v1414 = vsel %vm272, %v1412, %v1413
    %v1415 = vld [vmem:[#allocation3 + $0x30] sm:$0xff]
    %v1416 = vld [vmem:[#allocation3 + $0x8] sm:$0xff]
    %v1417 = vsel %vm272, %v1415, %v1416
    %v1418 = vld [vmem:[#allocation4 + $0x30] sm:$0xff]
    %v1419 = vld [vmem:[#allocation4 + $0x8] sm:$0xff]
    %v1420 = vsel %vm272, %v1418, %v1419
    %v1421 = vld [vmem:[%s15] sm:$0xff]
    %v1422 = vld [vmem:[%s15 + $0x8] sm:$0xff]
    %v1423 = vld [vmem:[%s15 + $0x10] sm:$0xff]
    %v1424 = vld [vmem:[%s15 + $0x18] sm:$0xff]
    %v1425 = vld [vmem:[%s15 + $0x20] sm:$0xff]
    %v1426 = vld [vmem:[%s15 + $0x28] sm:$0xff]
    %v1427 = vld [vmem:[%s15 + $0x30] sm:$0xff]
    %v1428 = vld [vmem:[%s15 + $0x38] sm:$0xff]
    %v1429 = vld [vmem:[%s27] sm:$0x1]
    %v1431 = vperm.slane %v1429, 0
    %v1434 = vsel %vm347, %v1409, 0
    %1436 = vmatpush.msra.mxu0 0.0
    %1437 = vmatpush.msra.mxu0 0.0
    %1438 = vmatpush.msra.mxu0 0.0
    %1439 = vmatpush.msra.mxu0 0.0
    %1440 = vmatpush.msra.mxu0 0.0
    %1441 = vmatpush.msra.mxu0 0.0
    %1442 = vmatpush.msra.mxu0 0.0
    %1443 = vmatpush.msra.mxu0 0.0
    %1444 = vmatpush.msra.mxu0 %v1428
    %1445 = vmatpush.msra.mxu0 %v1427
    %1446 = vmatpush.msra.mxu0 %v1426
    %1447 = vmatpush.msra.mxu0 %v1425
    %1448 = vmatpush.msra.mxu0 %v1424
    %1449 = vmatpush.msra.mxu0 %v1423
    %1450 = vmatpush.msra.mxu0 %v1422
    %1451 = vmatpush.msra.mxu0 %v1421
    %1452 = vmatmul.f32.gmra.mxu0 %v1434
    %v1453 = vpop.f32.mrf.mxu0
    %v1454 = vadd.f32 %v1431, %v1453
    %1455 = vdwg.mxu0
    %v1456 = vld [vmem:[%s17] sm:$0xff]
    %v1457 = vld [vmem:[%s17 + $0x8] sm:$0xff]
    %v1458 = vld [vmem:[%s17 + $0x10] sm:$0xff]
    %v1459 = vld [vmem:[%s17 + $0x18] sm:$0xff]
    %v1460 = vld [vmem:[%s17 + $0x20] sm:$0xff]
    %v1461 = vld [vmem:[%s17 + $0x28] sm:$0xff]
    %v1462 = vld [vmem:[%s17 + $0x30] sm:$0xff]
    %v1463 = vld [vmem:[%s17 + $0x38] sm:$0xff]
    %v1464 = vld [vmem:[%s29] sm:$0x1]
    %v1466 = vperm.slane %v1464, 0
    %1468 = vmatpush.msra.mxu0 0.0
    %1469 = vmatpush.msra.mxu0 0.0
    %1470 = vmatpush.msra.mxu0 0.0
    %1471 = vmatpush.msra.mxu0 0.0
    %1472 = vmatpush.msra.mxu0 0.0
    %1473 = vmatpush.msra.mxu0 0.0
    %1474 = vmatpush.msra.mxu0 0.0
    %1475 = vmatpush.msra.mxu0 0.0
    %1476 = vmatpush.msra.mxu0 %v1463
    %1477 = vmatpush.msra.mxu0 %v1462
    %1478 = vmatpush.msra.mxu0 %v1461
    %1479 = vmatpush.msra.mxu0 %v1460
    %1480 = vmatpush.msra.mxu0 %v1459
    %1481 = vmatpush.msra.mxu0 %v1458
    %1482 = vmatpush.msra.mxu0 %v1457
    %1483 = vmatpush.msra.mxu0 %v1456
    %1484 = vmatmul.f32.gmra.mxu0 %v1434
    %v1485 = vpop.f32.mrf.mxu0
    %v1486 = vadd.f32 %v1466, %v1485
    %1487 = vdwg.mxu0
    %v1488 = vld [vmem:[%s19] sm:$0xff]
    %v1489 = vld [vmem:[%s19 + $0x8] sm:$0xff]
    %v1490 = vld [vmem:[%s19 + $0x10] sm:$0xff]
    %v1491 = vld [vmem:[%s19 + $0x18] sm:$0xff]
    %v1492 = vld [vmem:[%s19 + $0x20] sm:$0xff]
    %v1493 = vld [vmem:[%s19 + $0x28] sm:$0xff]
    %v1494 = vld [vmem:[%s19 + $0x30] sm:$0xff]
    %v1495 = vld [vmem:[%s19 + $0x38] sm:$0xff]
    %v1496 = vld [vmem:[%s31] sm:$0x1]
    %v1498 = vperm.slane %v1496, 0
    %1500 = vmatpush.msra.mxu0 0.0
    %1501 = vmatpush.msra.mxu0 0.0
    %1502 = vmatpush.msra.mxu0 0.0
    %1503 = vmatpush.msra.mxu0 0.0
    %1504 = vmatpush.msra.mxu0 0.0
    %1505 = vmatpush.msra.mxu0 0.0
    %1506 = vmatpush.msra.mxu0 0.0
    %1507 = vmatpush.msra.mxu0 0.0
    %1508 = vmatpush.msra.mxu0 %v1495
    %1509 = vmatpush.msra.mxu0 %v1494
    %1510 = vmatpush.msra.mxu0 %v1493
    %1511 = vmatpush.msra.mxu0 %v1492
    %1512 = vmatpush.msra.mxu0 %v1491
    %1513 = vmatpush.msra.mxu0 %v1490
    %1514 = vmatpush.msra.mxu0 %v1489
    %1515 = vmatpush.msra.mxu0 %v1488
    %1516 = vmatmul.f32.gmra.mxu0 %v1434
    %v1517 = vpop.f32.mrf.mxu0
    %v1518 = vadd.f32 %v1498, %v1517
    %1519 = vdwg.mxu0
    %v1520 = vadd.f32 %v1414, %v1454
    %v1521 = vxor.u32 %v1520, 2147483648
    %v1522 = vmul.f32 %v1521, 1.442695
    %v1523 = vpow.pop %v1522
    %v1524 = vadd.f32 %v1523, 1.0
    %v1525 = vrcp.pop %v1524
    %v1526 = vmul.f32 %v1524, %v1525
    %v1527 = vsub.f32 1.0, %v1526
    %v1528 = vmul.f32 %v1525, %v1527
    %v1529 = vadd.f32 %v1525, %v1528
    %vm1530 = vweird.f32 %v1524
    %vm1531 = vweird.f32 %v1525
    %vm1532 = vmor %vm1530, %vm1531
    %v1533 = vsel %vm1532, %v1525, %v1529
    %v1534 = vand.u32 2147483647, %v1524
    %vm1535 = vcmp.eq.f32.partialorder %v1534, 8.507059e+37
    %v1536 = vand.u32 %v1524, 2147483648
    %v1537 = vor.u32 1.1754944e-38, %v1536
    %v1538 = vsel %vm1535, %v1537, %v1533
    %v1539 = vmul.f32 1.0, %v1538
    %v1540 = vadd.f32 %v1417, %v1486
    %v1541 = vxor.u32 %v1540, 2147483648
    %v1542 = vmul.f32 %v1541, 1.442695
    %v1543 = vpow.pop %v1542
    %v1544 = vadd.f32 %v1543, 1.0
    %v1545 = vrcp.pop %v1544
    %v1546 = vmul.f32 %v1544, %v1545
    %v1547 = vsub.f32 1.0, %v1546
    %v1548 = vmul.f32 %v1545, %v1547
    %v1549 = vadd.f32 %v1545, %v1548
    %vm1550 = vweird.f32 %v1544
    %vm1551 = vweird.f32 %v1545
    %vm1552 = vmor %vm1550, %vm1551
    %v1553 = vsel %vm1552, %v1545, %v1549
    %v1554 = vand.u32 2147483647, %v1544
    %vm1555 = vcmp.eq.f32.partialorder %v1554, 8.507059e+37
    %v1556 = vand.u32 %v1544, 2147483648
    %v1557 = vor.u32 1.1754944e-38, %v1556
    %v1558 = vsel %vm1555, %v1557, %v1553
    %v1559 = vmul.f32 1.0, %v1558
    %v1560 = vmul.f32 %v1539, %v1518
    %v1561 = vadd.f32 %v1420, %v1560
    %v1562 = vtanh.pop %v1561
    %v1563 = vsub.f32 1.0, %v1559
    %v1564 = vmul.f32 %v1563, %v1562
    %v1565 = vmul.f32 %v1559, %v1409
    %v1566 = vadd.f32 %v1564, %v1565
    %1567 = vst.msk [vmem:[#allocation5 + $0x30] sm:$0xff] %vm347, %v1566
    %1568 = vst.msk [vmem:[#allocation6 + $0x8] sm:$0xff] %vm347, %v1566
    %v1569 = vld [vmem:[#allocation2 + $0x38] sm:$0xff]
    %v1570 = vld [vmem:[#allocation2] sm:$0xff]
    %v1571 = vsel %vm272, %v1569, %v1570
    %v1572 = vld [vmem:[#allocation3 + $0x38] sm:$0xff]
    %v1573 = vld [vmem:[#allocation3] sm:$0xff]
    %v1574 = vsel %vm272, %v1572, %v1573
    %v1575 = vld [vmem:[#allocation4 + $0x38] sm:$0xff]
    %v1576 = vld [vmem:[#allocation4] sm:$0xff]
    %v1577 = vsel %vm272, %v1575, %v1576
    %v1578 = vld [vmem:[%s15] sm:$0xff]
    %v1579 = vld [vmem:[%s15 + $0x8] sm:$0xff]
    %v1580 = vld [vmem:[%s15 + $0x10] sm:$0xff]
    %v1581 = vld [vmem:[%s15 + $0x18] sm:$0xff]
    %v1582 = vld [vmem:[%s15 + $0x20] sm:$0xff]
    %v1583 = vld [vmem:[%s15 + $0x28] sm:$0xff]
    %v1584 = vld [vmem:[%s15 + $0x30] sm:$0xff]
    %v1585 = vld [vmem:[%s15 + $0x38] sm:$0xff]
    %v1586 = vld [vmem:[%s27] sm:$0x1]
    %v1588 = vperm.slane %v1586, 0
    %v1591 = vsel %vm347, %v1566, 0
    %1593 = vmatpush.msra.mxu0 0.0
    %1594 = vmatpush.msra.mxu0 0.0
    %1595 = vmatpush.msra.mxu0 0.0
    %1596 = vmatpush.msra.mxu0 0.0
    %1597 = vmatpush.msra.mxu0 0.0
    %1598 = vmatpush.msra.mxu0 0.0
    %1599 = vmatpush.msra.mxu0 0.0
    %1600 = vmatpush.msra.mxu0 0.0
    %1601 = vmatpush.msra.mxu0 %v1585
    %1602 = vmatpush.msra.mxu0 %v1584
    %1603 = vmatpush.msra.mxu0 %v1583
    %1604 = vmatpush.msra.mxu0 %v1582
    %1605 = vmatpush.msra.mxu0 %v1581
    %1606 = vmatpush.msra.mxu0 %v1580
    %1607 = vmatpush.msra.mxu0 %v1579
    %1608 = vmatpush.msra.mxu0 %v1578
    %1609 = vmatmul.f32.gmra.mxu0 %v1591
    %v1610 = vpop.f32.mrf.mxu0
    %v1611 = vadd.f32 %v1588, %v1610
    %1612 = vdwg.mxu0
    %v1613 = vld [vmem:[%s17] sm:$0xff]
    %v1614 = vld [vmem:[%s17 + $0x8] sm:$0xff]
    %v1615 = vld [vmem:[%s17 + $0x10] sm:$0xff]
    %v1616 = vld [vmem:[%s17 + $0x18] sm:$0xff]
    %v1617 = vld [vmem:[%s17 + $0x20] sm:$0xff]
    %v1618 = vld [vmem:[%s17 + $0x28] sm:$0xff]
    %v1619 = vld [vmem:[%s17 + $0x30] sm:$0xff]
    %v1620 = vld [vmem:[%s17 + $0x38] sm:$0xff]
    %v1621 = vld [vmem:[%s29] sm:$0x1]
    %v1623 = vperm.slane %v1621, 0
    %1625 = vmatpush.msra.mxu0 0.0
    %1626 = vmatpush.msra.mxu0 0.0
    %1627 = vmatpush.msra.mxu0 0.0
    %1628 = vmatpush.msra.mxu0 0.0
    %1629 = vmatpush.msra.mxu0 0.0
    %1630 = vmatpush.msra.mxu0 0.0
    %1631 = vmatpush.msra.mxu0 0.0
    %1632 = vmatpush.msra.mxu0 0.0
    %1633 = vmatpush.msra.mxu0 %v1620
    %1634 = vmatpush.msra.mxu0 %v1619
    %1635 = vmatpush.msra.mxu0 %v1618
    %1636 = vmatpush.msra.mxu0 %v1617
    %1637 = vmatpush.msra.mxu0 %v1616
    %1638 = vmatpush.msra.mxu0 %v1615
    %1639 = vmatpush.msra.mxu0 %v1614
    %1640 = vmatpush.msra.mxu0 %v1613
    %1641 = vmatmul.f32.gmra.mxu0 %v1591
    %v1642 = vpop.f32.mrf.mxu0
    %v1643 = vadd.f32 %v1623, %v1642
    %1644 = vdwg.mxu0
    %v1645 = vld [vmem:[%s19] sm:$0xff]
    %v1646 = vld [vmem:[%s19 + $0x8] sm:$0xff]
    %v1647 = vld [vmem:[%s19 + $0x10] sm:$0xff]
    %v1648 = vld [vmem:[%s19 + $0x18] sm:$0xff]
    %v1649 = vld [vmem:[%s19 + $0x20] sm:$0xff]
    %v1650 = vld [vmem:[%s19 + $0x28] sm:$0xff]
    %v1651 = vld [vmem:[%s19 + $0x30] sm:$0xff]
    %v1652 = vld [vmem:[%s19 + $0x38] sm:$0xff]
    %v1653 = vld [vmem:[%s31] sm:$0x1]
    %v1655 = vperm.slane %v1653, 0
    %1657 = vmatpush.msra.mxu0 0.0
    %1658 = vmatpush.msra.mxu0 0.0
    %1659 = vmatpush.msra.mxu0 0.0
    %1660 = vmatpush.msra.mxu0 0.0
    %1661 = vmatpush.msra.mxu0 0.0
    %1662 = vmatpush.msra.mxu0 0.0
    %1663 = vmatpush.msra.mxu0 0.0
    %1664 = vmatpush.msra.mxu0 0.0
    %1665 = vmatpush.msra.mxu0 %v1652
    %1666 = vmatpush.msra.mxu0 %v1651
    %1667 = vmatpush.msra.mxu0 %v1650
    %1668 = vmatpush.msra.mxu0 %v1649
    %1669 = vmatpush.msra.mxu0 %v1648
    %1670 = vmatpush.msra.mxu0 %v1647
    %1671 = vmatpush.msra.mxu0 %v1646
    %1672 = vmatpush.msra.mxu0 %v1645
    %1673 = vmatmul.f32.gmra.mxu0 %v1591
    %v1674 = vpop.f32.mrf.mxu0
    %v1675 = vadd.f32 %v1655, %v1674
    %1676 = vdwg.mxu0
    %v1677 = vadd.f32 %v1571, %v1611
    %v1678 = vxor.u32 %v1677, 2147483648
    %v1679 = vmul.f32 %v1678, 1.442695
    %v1680 = vpow.pop %v1679
    %v1681 = vadd.f32 %v1680, 1.0
    %v1682 = vrcp.pop %v1681
    %v1683 = vmul.f32 %v1681, %v1682
    %v1684 = vsub.f32 1.0, %v1683
    %v1685 = vmul.f32 %v1682, %v1684
    %v1686 = vadd.f32 %v1682, %v1685
    %vm1687 = vweird.f32 %v1681
    %vm1688 = vweird.f32 %v1682
    %vm1689 = vmor %vm1687, %vm1688
    %v1690 = vsel %vm1689, %v1682, %v1686
    %v1691 = vand.u32 2147483647, %v1681
    %vm1692 = vcmp.eq.f32.partialorder %v1691, 8.507059e+37
    %v1693 = vand.u32 %v1681, 2147483648
    %v1694 = vor.u32 1.1754944e-38, %v1693
    %v1695 = vsel %vm1692, %v1694, %v1690
    %v1696 = vmul.f32 1.0, %v1695
    %v1697 = vadd.f32 %v1574, %v1643
    %v1698 = vxor.u32 %v1697, 2147483648
    %v1699 = vmul.f32 %v1698, 1.442695
    %v1700 = vpow.pop %v1699
    %v1701 = vadd.f32 %v1700, 1.0
    %v1702 = vrcp.pop %v1701
    %v1703 = vmul.f32 %v1701, %v1702
    %v1704 = vsub.f32 1.0, %v1703
    %v1705 = vmul.f32 %v1702, %v1704
    %v1706 = vadd.f32 %v1702, %v1705
    %vm1707 = vweird.f32 %v1701
    %vm1708 = vweird.f32 %v1702
    %vm1709 = vmor %vm1707, %vm1708
    %v1710 = vsel %vm1709, %v1702, %v1706
    %v1711 = vand.u32 2147483647, %v1701
    %vm1712 = vcmp.eq.f32.partialorder %v1711, 8.507059e+37
    %v1713 = vand.u32 %v1701, 2147483648
    %v1714 = vor.u32 1.1754944e-38, %v1713
    %v1715 = vsel %vm1712, %v1714, %v1710
    %v1716 = vmul.f32 1.0, %v1715
    %v1717 = vmul.f32 %v1696, %v1675
    %v1718 = vadd.f32 %v1577, %v1717
    %v1719 = vtanh.pop %v1718
    %v1720 = vsub.f32 1.0, %v1716
    %v1721 = vmul.f32 %v1720, %v1719
    %v1722 = vmul.f32 %v1716, %v1566
    %v1723 = vadd.f32 %v1721, %v1722
    %1724 = vst.msk [vmem:[#allocation5 + $0x38] sm:$0xff] %vm347, %v1723
    %1725 = vst.msk [vmem:[#allocation6] sm:$0xff] %vm347, %v1723
    %v1726 = vld [vmem:[#allocation5] sm:$0xff]
    %v1727 = vld [vmem:[#allocation5 + $0x8] sm:$0xff]
    %v1728 = vld [vmem:[#allocation5 + $0x10] sm:$0xff]
    %v1729 = vld [vmem:[#allocation5 + $0x18] sm:$0xff]
    %v1730 = vld [vmem:[#allocation5 + $0x20] sm:$0xff]
    %v1731 = vld [vmem:[#allocation5 + $0x28] sm:$0xff]
    %v1732 = vld [vmem:[#allocation5 + $0x30] sm:$0xff]
    %v1733 = vld [vmem:[#allocation5 + $0x38] sm:$0xff]
    %v1734 = vld [vmem:[#allocation6] sm:$0xff]
    %v1735 = vld [vmem:[#allocation6 + $0x8] sm:$0xff]
    %v1736 = vld [vmem:[#allocation6 + $0x10] sm:$0xff]
    %v1737 = vld [vmem:[#allocation6 + $0x18] sm:$0xff]
    %v1738 = vld [vmem:[#allocation6 + $0x20] sm:$0xff]
    %v1739 = vld [vmem:[#allocation6 + $0x28] sm:$0xff]
    %v1740 = vld [vmem:[#allocation6 + $0x30] sm:$0xff]
    %v1741 = vld [vmem:[#allocation6 + $0x38] sm:$0xff]
    %v1742 = vsel %vm272, %v1726, %v1734
    %v1743 = vsel %vm272, %v1727, %v1735
    %v1744 = vsel %vm272, %v1728, %v1736
    %v1745 = vsel %vm272, %v1729, %v1737
    %v1746 = vsel %vm272, %v1730, %v1738
    %v1747 = vsel %vm272, %v1731, %v1739
    %v1748 = vsel %vm272, %v1732, %v1740
    %v1749 = vsel %vm272, %v1733, %v1741
    %v1750 = vld [vmem:[%s33] sm:$0xff]
    %v1751 = vld [vmem:[%s33 + $0x8] sm:$0xff]
    %v1752 = vld [vmem:[%s33 + $0x10] sm:$0xff]
    %v1753 = vld [vmem:[%s33 + $0x18] sm:$0xff]
    %v1754 = vld [vmem:[%s33 + $0x20] sm:$0xff]
    %v1755 = vld [vmem:[%s33 + $0x28] sm:$0xff]
    %v1756 = vld [vmem:[%s33 + $0x30] sm:$0xff]
    %v1757 = vld [vmem:[%s33 + $0x38] sm:$0xff]
    %v1758 = vld [vmem:[%s45] sm:$0x1]
    %v1760 = vperm.slane %v1758, 0
    %v1763 = vsel %vm347, %v1742, 0
    %v1766 = vsel %vm347, %v1743, 0
    %v1769 = vsel %vm347, %v1744, 0
    %v1772 = vsel %vm347, %v1745, 0
    %v1775 = vsel %vm347, %v1746, 0
    %v1778 = vsel %vm347, %v1747, 0
    %v1781 = vsel %vm347, %v1748, 0
    %v1784 = vsel %vm347, %v1749, 0
    %1786 = vmatpush.msra.mxu0 0.0
    %1787 = vmatpush.msra.mxu0 0.0
    %1788 = vmatpush.msra.mxu0 0.0
    %1789 = vmatpush.msra.mxu0 0.0
    %1790 = vmatpush.msra.mxu0 0.0
    %1791 = vmatpush.msra.mxu0 0.0
    %1792 = vmatpush.msra.mxu0 0.0
    %1793 = vmatpush.msra.mxu0 0.0
    %1794 = vmatpush.msra.mxu0 %v1757
    %1795 = vmatpush.msra.mxu0 %v1756
    %1796 = vmatpush.msra.mxu0 %v1755
    %1797 = vmatpush.msra.mxu0 %v1754
    %1798 = vmatpush.msra.mxu0 %v1753
    %1799 = vmatpush.msra.mxu0 %v1752
    %1800 = vmatpush.msra.mxu0 %v1751
    %1801 = vmatpush.msra.mxu0 %v1750
    %1802 = vmatmul.f32.gmra.mxu0 %v1763
    %v1803 = vpop.f32.mrf.mxu0
    %v1804 = vadd.f32 %v1760, %v1803
    %1805 = vmatmul.f32.gmra.mxu0 %v1766
    %v1806 = vpop.f32.mrf.mxu0
    %v1807 = vadd.f32 %v1760, %v1806
    %1808 = vmatmul.f32.gmra.mxu0 %v1769
    %v1809 = vpop.f32.mrf.mxu0
    %v1810 = vadd.f32 %v1760, %v1809
    %1811 = vmatmul.f32.gmra.mxu0 %v1772
    %v1812 = vpop.f32.mrf.mxu0
    %v1813 = vadd.f32 %v1760, %v1812
    %1814 = vmatmul.f32.gmra.mxu0 %v1775
    %v1815 = vpop.f32.mrf.mxu0
    %v1816 = vadd.f32 %v1760, %v1815
    %1817 = vmatmul.f32.gmra.mxu0 %v1778
    %v1818 = vpop.f32.mrf.mxu0
    %v1819 = vadd.f32 %v1760, %v1818
    %1820 = vmatmul.f32.gmra.mxu0 %v1781
    %v1821 = vpop.f32.mrf.mxu0
    %v1822 = vadd.f32 %v1760, %v1821
    %1823 = vmatmul.f32.gmra.mxu0 %v1784
    %v1824 = vpop.f32.mrf.mxu0
    %v1825 = vadd.f32 %v1760, %v1824
    %1826 = vdwg.mxu0
    %1827 = vst.msk [vmem:[#allocation2] sm:$0xff] %vm347, %v1804
    %1828 = vst.msk [vmem:[#allocation2 + $0x8] sm:$0xff] %vm347, %v1807
    %1829 = vst.msk [vmem:[#allocation2 + $0x10] sm:$0xff] %vm347, %v1810
    %1830 = vst.msk [vmem:[#allocation2 + $0x18] sm:$0xff] %vm347, %v1813
    %1831 = vst.msk [vmem:[#allocation2 + $0x20] sm:$0xff] %vm347, %v1816
    %1832 = vst.msk [vmem:[#allocation2 + $0x28] sm:$0xff] %vm347, %v1819
    %1833 = vst.msk [vmem:[#allocation2 + $0x30] sm:$0xff] %vm347, %v1822
    %1834 = vst.msk [vmem:[#allocation2 + $0x38] sm:$0xff] %vm347, %v1825
    %v1835 = vld [vmem:[%s35] sm:$0xff]
    %v1836 = vld [vmem:[%s35 + $0x8] sm:$0xff]
    %v1837 = vld [vmem:[%s35 + $0x10] sm:$0xff]
    %v1838 = vld [vmem:[%s35 + $0x18] sm:$0xff]
    %v1839 = vld [vmem:[%s35 + $0x20] sm:$0xff]
    %v1840 = vld [vmem:[%s35 + $0x28] sm:$0xff]
    %v1841 = vld [vmem:[%s35 + $0x30] sm:$0xff]
    %v1842 = vld [vmem:[%s35 + $0x38] sm:$0xff]
    %v1843 = vld [vmem:[%s47] sm:$0x1]
    %v1845 = vperm.slane %v1843, 0
    %1847 = vmatpush.msra.mxu0 0.0
    %1848 = vmatpush.msra.mxu0 0.0
    %1849 = vmatpush.msra.mxu0 0.0
    %1850 = vmatpush.msra.mxu0 0.0
    %1851 = vmatpush.msra.mxu0 0.0
    %1852 = vmatpush.msra.mxu0 0.0
    %1853 = vmatpush.msra.mxu0 0.0
    %1854 = vmatpush.msra.mxu0 0.0
    %1855 = vmatpush.msra.mxu0 %v1842
    %1856 = vmatpush.msra.mxu0 %v1841
    %1857 = vmatpush.msra.mxu0 %v1840
    %1858 = vmatpush.msra.mxu0 %v1839
    %1859 = vmatpush.msra.mxu0 %v1838
    %1860 = vmatpush.msra.mxu0 %v1837
    %1861 = vmatpush.msra.mxu0 %v1836
    %1862 = vmatpush.msra.mxu0 %v1835
    %1863 = vmatmul.f32.gmra.mxu0 %v1763
    %v1864 = vpop.f32.mrf.mxu0
    %v1865 = vadd.f32 %v1845, %v1864
    %1866 = vmatmul.f32.gmra.mxu0 %v1766
    %v1867 = vpop.f32.mrf.mxu0
    %v1868 = vadd.f32 %v1845, %v1867
    %1869 = vmatmul.f32.gmra.mxu0 %v1769
    %v1870 = vpop.f32.mrf.mxu0
    %v1871 = vadd.f32 %v1845, %v1870
    %1872 = vmatmul.f32.gmra.mxu0 %v1772
    %v1873 = vpop.f32.mrf.mxu0
    %v1874 = vadd.f32 %v1845, %v1873
    %1875 = vmatmul.f32.gmra.mxu0 %v1775
    %v1876 = vpop.f32.mrf.mxu0
    %v1877 = vadd.f32 %v1845, %v1876
    %1878 = vmatmul.f32.gmra.mxu0 %v1778
    %v1879 = vpop.f32.mrf.mxu0
    %v1880 = vadd.f32 %v1845, %v1879
    %1881 = vmatmul.f32.gmra.mxu0 %v1781
    %v1882 = vpop.f32.mrf.mxu0
    %v1883 = vadd.f32 %v1845, %v1882
    %1884 = vmatmul.f32.gmra.mxu0 %v1784
    %v1885 = vpop.f32.mrf.mxu0
    %v1886 = vadd.f32 %v1845, %v1885
    %1887 = vdwg.mxu0
    %1888 = vst.msk [vmem:[#allocation3] sm:$0xff] %vm347, %v1865
    %1889 = vst.msk [vmem:[#allocation3 + $0x8] sm:$0xff] %vm347, %v1868
    %1890 = vst.msk [vmem:[#allocation3 + $0x10] sm:$0xff] %vm347, %v1871
    %1891 = vst.msk [vmem:[#allocation3 + $0x18] sm:$0xff] %vm347, %v1874
    %1892 = vst.msk [vmem:[#allocation3 + $0x20] sm:$0xff] %vm347, %v1877
    %1893 = vst.msk [vmem:[#allocation3 + $0x28] sm:$0xff] %vm347, %v1880
    %1894 = vst.msk [vmem:[#allocation3 + $0x30] sm:$0xff] %vm347, %v1883
    %1895 = vst.msk [vmem:[#allocation3 + $0x38] sm:$0xff] %vm347, %v1886
    %v1896 = vld [vmem:[%s37] sm:$0xff]
    %v1897 = vld [vmem:[%s37 + $0x8] sm:$0xff]
    %v1898 = vld [vmem:[%s37 + $0x10] sm:$0xff]
    %v1899 = vld [vmem:[%s37 + $0x18] sm:$0xff]
    %v1900 = vld [vmem:[%s37 + $0x20] sm:$0xff]
    %v1901 = vld [vmem:[%s37 + $0x28] sm:$0xff]
    %v1902 = vld [vmem:[%s37 + $0x30] sm:$0xff]
    %v1903 = vld [vmem:[%s37 + $0x38] sm:$0xff]
    %v1904 = vld [vmem:[%s49] sm:$0x1]
    %v1906 = vperm.slane %v1904, 0
    %1908 = vmatpush.msra.mxu0 0.0
    %1909 = vmatpush.msra.mxu0 0.0
    %1910 = vmatpush.msra.mxu0 0.0
    %1911 = vmatpush.msra.mxu0 0.0
    %1912 = vmatpush.msra.mxu0 0.0
    %1913 = vmatpush.msra.mxu0 0.0
    %1914 = vmatpush.msra.mxu0 0.0
    %1915 = vmatpush.msra.mxu0 0.0
    %1916 = vmatpush.msra.mxu0 %v1903
    %1917 = vmatpush.msra.mxu0 %v1902
    %1918 = vmatpush.msra.mxu0 %v1901
    %1919 = vmatpush.msra.mxu0 %v1900
    %1920 = vmatpush.msra.mxu0 %v1899
    %1921 = vmatpush.msra.mxu0 %v1898
    %1922 = vmatpush.msra.mxu0 %v1897
    %1923 = vmatpush.msra.mxu0 %v1896
    %1924 = vmatmul.f32.gmra.mxu0 %v1763
    %v1925 = vpop.f32.mrf.mxu0
    %v1926 = vadd.f32 %v1906, %v1925
    %1927 = vmatmul.f32.gmra.mxu0 %v1766
    %v1928 = vpop.f32.mrf.mxu0
    %v1929 = vadd.f32 %v1906, %v1928
    %1930 = vmatmul.f32.gmra.mxu0 %v1769
    %v1931 = vpop.f32.mrf.mxu0
    %v1932 = vadd.f32 %v1906, %v1931
    %1933 = vmatmul.f32.gmra.mxu0 %v1772
    %v1934 = vpop.f32.mrf.mxu0
    %v1935 = vadd.f32 %v1906, %v1934
    %1936 = vmatmul.f32.gmra.mxu0 %v1775
    %v1937 = vpop.f32.mrf.mxu0
    %v1938 = vadd.f32 %v1906, %v1937
    %1939 = vmatmul.f32.gmra.mxu0 %v1778
    %v1940 = vpop.f32.mrf.mxu0
    %v1941 = vadd.f32 %v1906, %v1940
    %1942 = vmatmul.f32.gmra.mxu0 %v1781
    %v1943 = vpop.f32.mrf.mxu0
    %v1944 = vadd.f32 %v1906, %v1943
    %1945 = vmatmul.f32.gmra.mxu0 %v1784
    %v1946 = vpop.f32.mrf.mxu0
    %v1947 = vadd.f32 %v1906, %v1946
    %1948 = vdwg.mxu0
    %1949 = vst.msk [vmem:[#allocation4] sm:$0xff] %vm347, %v1926
    %1950 = vst.msk [vmem:[#allocation4 + $0x8] sm:$0xff] %vm347, %v1929
    %1951 = vst.msk [vmem:[#allocation4 + $0x10] sm:$0xff] %vm347, %v1932
    %1952 = vst.msk [vmem:[#allocation4 + $0x18] sm:$0xff] %vm347, %v1935
    %1953 = vst.msk [vmem:[#allocation4 + $0x20] sm:$0xff] %vm347, %v1938
    %1954 = vst.msk [vmem:[#allocation4 + $0x28] sm:$0xff] %vm347, %v1941
    %1955 = vst.msk [vmem:[#allocation4 + $0x30] sm:$0xff] %vm347, %v1944
    %1956 = vst.msk [vmem:[#allocation4 + $0x38] sm:$0xff] %vm347, %v1947
    %v1957 = vld [vmem:[#allocation2] sm:$0xff]
    %v1958 = vld [vmem:[#allocation2 + $0x38] sm:$0xff]
    %v1959 = vsel %vm272, %v1957, %v1958
    %v1960 = vld [vmem:[#allocation3] sm:$0xff]
    %v1961 = vld [vmem:[#allocation3 + $0x38] sm:$0xff]
    %v1962 = vsel %vm272, %v1960, %v1961
    %v1963 = vld [vmem:[#allocation4] sm:$0xff]
    %v1964 = vld [vmem:[#allocation4 + $0x38] sm:$0xff]
    %v1965 = vsel %vm272, %v1963, %v1964
    %v1966 = vld [vmem:[%s39] sm:$0xff]
    %v1967 = vld [vmem:[%s39 + $0x8] sm:$0xff]
    %v1968 = vld [vmem:[%s39 + $0x10] sm:$0xff]
    %v1969 = vld [vmem:[%s39 + $0x18] sm:$0xff]
    %v1970 = vld [vmem:[%s39 + $0x20] sm:$0xff]
    %v1971 = vld [vmem:[%s39 + $0x28] sm:$0xff]
    %v1972 = vld [vmem:[%s39 + $0x30] sm:$0xff]
    %v1973 = vld [vmem:[%s39 + $0x38] sm:$0xff]
    %v1974 = vld [vmem:[%s51] sm:$0x1]
    %v1976 = vperm.slane %v1974, 0
    %1978 = vmatpush.msra.mxu0 0.0
    %1979 = vmatpush.msra.mxu0 0.0
    %1980 = vmatpush.msra.mxu0 0.0
    %1981 = vmatpush.msra.mxu0 0.0
    %1982 = vmatpush.msra.mxu0 0.0
    %1983 = vmatpush.msra.mxu0 0.0
    %1984 = vmatpush.msra.mxu0 0.0
    %1985 = vmatpush.msra.mxu0 0.0
    %1986 = vmatpush.msra.mxu0 %v1973
    %1987 = vmatpush.msra.mxu0 %v1972
    %1988 = vmatpush.msra.mxu0 %v1971
    %1989 = vmatpush.msra.mxu0 %v1970
    %1990 = vmatpush.msra.mxu0 %v1969
    %1991 = vmatpush.msra.mxu0 %v1968
    %1992 = vmatpush.msra.mxu0 %v1967
    %1993 = vmatpush.msra.mxu0 %v1966
    %1994 = vmatmul.f32.gmra.mxu0 %v492
    %v1995 = vpop.f32.mrf.mxu0
    %v1996 = vadd.f32 %v1976, %v1995
    %1997 = vdwg.mxu0
    %v1998 = vld [vmem:[%s41] sm:$0xff]
    %v1999 = vld [vmem:[%s41 + $0x8] sm:$0xff]
    %v2000 = vld [vmem:[%s41 + $0x10] sm:$0xff]
    %v2001 = vld [vmem:[%s41 + $0x18] sm:$0xff]
    %v2002 = vld [vmem:[%s41 + $0x20] sm:$0xff]
    %v2003 = vld [vmem:[%s41 + $0x28] sm:$0xff]
    %v2004 = vld [vmem:[%s41 + $0x30] sm:$0xff]
    %v2005 = vld [vmem:[%s41 + $0x38] sm:$0xff]
    %v2006 = vld [vmem:[%s53] sm:$0x1]
    %v2008 = vperm.slane %v2006, 0
    %2010 = vmatpush.msra.mxu0 0.0
    %2011 = vmatpush.msra.mxu0 0.0
    %2012 = vmatpush.msra.mxu0 0.0
    %2013 = vmatpush.msra.mxu0 0.0
    %2014 = vmatpush.msra.mxu0 0.0
    %2015 = vmatpush.msra.mxu0 0.0
    %2016 = vmatpush.msra.mxu0 0.0
    %2017 = vmatpush.msra.mxu0 0.0
    %2018 = vmatpush.msra.mxu0 %v2005
    %2019 = vmatpush.msra.mxu0 %v2004
    %2020 = vmatpush.msra.mxu0 %v2003
    %2021 = vmatpush.msra.mxu0 %v2002
    %2022 = vmatpush.msra.mxu0 %v2001
    %2023 = vmatpush.msra.mxu0 %v2000
    %2024 = vmatpush.msra.mxu0 %v1999
    %2025 = vmatpush.msra.mxu0 %v1998
    %2026 = vmatmul.f32.gmra.mxu0 %v492
    %v2027 = vpop.f32.mrf.mxu0
    %v2028 = vadd.f32 %v2008, %v2027
    %2029 = vdwg.mxu0
    %v2030 = vld [vmem:[%s43] sm:$0xff]
    %v2031 = vld [vmem:[%s43 + $0x8] sm:$0xff]
    %v2032 = vld [vmem:[%s43 + $0x10] sm:$0xff]
    %v2033 = vld [vmem:[%s43 + $0x18] sm:$0xff]
    %v2034 = vld [vmem:[%s43 + $0x20] sm:$0xff]
    %v2035 = vld [vmem:[%s43 + $0x28] sm:$0xff]
    %v2036 = vld [vmem:[%s43 + $0x30] sm:$0xff]
    %v2037 = vld [vmem:[%s43 + $0x38] sm:$0xff]
    %v2038 = vld [vmem:[%s55] sm:$0x1]
    %v2040 = vperm.slane %v2038, 0
    %2042 = vmatpush.msra.mxu0 0.0
    %2043 = vmatpush.msra.mxu0 0.0
    %2044 = vmatpush.msra.mxu0 0.0
    %2045 = vmatpush.msra.mxu0 0.0
    %2046 = vmatpush.msra.mxu0 0.0
    %2047 = vmatpush.msra.mxu0 0.0
    %2048 = vmatpush.msra.mxu0 0.0
    %2049 = vmatpush.msra.mxu0 0.0
    %2050 = vmatpush.msra.mxu0 %v2037
    %2051 = vmatpush.msra.mxu0 %v2036
    %2052 = vmatpush.msra.mxu0 %v2035
    %2053 = vmatpush.msra.mxu0 %v2034
    %2054 = vmatpush.msra.mxu0 %v2033
    %2055 = vmatpush.msra.mxu0 %v2032
    %2056 = vmatpush.msra.mxu0 %v2031
    %2057 = vmatpush.msra.mxu0 %v2030
    %2058 = vmatmul.f32.gmra.mxu0 %v492
    %v2059 = vpop.f32.mrf.mxu0
    %v2060 = vadd.f32 %v2040, %v2059
    %2061 = vdwg.mxu0
    %v2062 = vadd.f32 %v1959, %v1996
    %v2063 = vxor.u32 %v2062, 2147483648
    %v2064 = vmul.f32 %v2063, 1.442695
    %v2065 = vpow.pop %v2064
    %v2066 = vadd.f32 %v2065, 1.0
    %v2067 = vrcp.pop %v2066
    %v2068 = vmul.f32 %v2066, %v2067
    %v2069 = vsub.f32 1.0, %v2068
    %v2070 = vmul.f32 %v2067, %v2069
    %v2071 = vadd.f32 %v2067, %v2070
    %vm2072 = vweird.f32 %v2066
    %vm2073 = vweird.f32 %v2067
    %vm2074 = vmor %vm2072, %vm2073
    %v2075 = vsel %vm2074, %v2067, %v2071
    %v2076 = vand.u32 2147483647, %v2066
    %vm2077 = vcmp.eq.f32.partialorder %v2076, 8.507059e+37
    %v2078 = vand.u32 %v2066, 2147483648
    %v2079 = vor.u32 1.1754944e-38, %v2078
    %v2080 = vsel %vm2077, %v2079, %v2075
    %v2081 = vmul.f32 1.0, %v2080
    %v2082 = vadd.f32 %v1962, %v2028
    %v2083 = vxor.u32 %v2082, 2147483648
    %v2084 = vmul.f32 %v2083, 1.442695
    %v2085 = vpow.pop %v2084
    %v2086 = vadd.f32 %v2085, 1.0
    %v2087 = vrcp.pop %v2086
    %v2088 = vmul.f32 %v2086, %v2087
    %v2089 = vsub.f32 1.0, %v2088
    %v2090 = vmul.f32 %v2087, %v2089
    %v2091 = vadd.f32 %v2087, %v2090
    %vm2092 = vweird.f32 %v2086
    %vm2093 = vweird.f32 %v2087
    %vm2094 = vmor %vm2092, %vm2093
    %v2095 = vsel %vm2094, %v2087, %v2091
    %v2096 = vand.u32 2147483647, %v2086
    %vm2097 = vcmp.eq.f32.partialorder %v2096, 8.507059e+37
    %v2098 = vand.u32 %v2086, 2147483648
    %v2099 = vor.u32 1.1754944e-38, %v2098
    %v2100 = vsel %vm2097, %v2099, %v2095
    %v2101 = vmul.f32 1.0, %v2100
    %v2102 = vmul.f32 %v2081, %v2060
    %v2103 = vadd.f32 %v1965, %v2102
    %v2104 = vtanh.pop %v2103
    %v2105 = vsub.f32 1.0, %v2101
    %v2106 = vmul.f32 %v2105, %v2104
    %v2107 = vmul.f32 %v2101, 0.0
    %v2108 = vadd.f32 %v2106, %v2107
    %2109 = vst.msk [vmem:[#allocation5] sm:$0xff] %vm347, %v2108
    %2110 = vst.msk [vmem:[#allocation6 + $0x38] sm:$0xff] %vm347, %v2108
    %v2111 = vld [vmem:[#allocation2 + $0x8] sm:$0xff]
    %v2112 = vld [vmem:[#allocation2 + $0x30] sm:$0xff]
    %v2113 = vsel %vm272, %v2111, %v2112
    %v2114 = vld [vmem:[#allocation3 + $0x8] sm:$0xff]
    %v2115 = vld [vmem:[#allocation3 + $0x30] sm:$0xff]
    %v2116 = vsel %vm272, %v2114, %v2115
    %v2117 = vld [vmem:[#allocation4 + $0x8] sm:$0xff]
    %v2118 = vld [vmem:[#allocation4 + $0x30] sm:$0xff]
    %v2119 = vsel %vm272, %v2117, %v2118
    %v2120 = vld [vmem:[%s39] sm:$0xff]
    %v2121 = vld [vmem:[%s39 + $0x8] sm:$0xff]
    %v2122 = vld [vmem:[%s39 + $0x10] sm:$0xff]
    %v2123 = vld [vmem:[%s39 + $0x18] sm:$0xff]
    %v2124 = vld [vmem:[%s39 + $0x20] sm:$0xff]
    %v2125 = vld [vmem:[%s39 + $0x28] sm:$0xff]
    %v2126 = vld [vmem:[%s39 + $0x30] sm:$0xff]
    %v2127 = vld [vmem:[%s39 + $0x38] sm:$0xff]
    %v2128 = vld [vmem:[%s51] sm:$0x1]
    %v2130 = vperm.slane %v2128, 0
    %v2133 = vsel %vm347, %v2108, 0
    %2135 = vmatpush.msra.mxu0 0.0
    %2136 = vmatpush.msra.mxu0 0.0
    %2137 = vmatpush.msra.mxu0 0.0
    %2138 = vmatpush.msra.mxu0 0.0
    %2139 = vmatpush.msra.mxu0 0.0
    %2140 = vmatpush.msra.mxu0 0.0
    %2141 = vmatpush.msra.mxu0 0.0
    %2142 = vmatpush.msra.mxu0 0.0
    %2143 = vmatpush.msra.mxu0 %v2127
    %2144 = vmatpush.msra.mxu0 %v2126
    %2145 = vmatpush.msra.mxu0 %v2125
    %2146 = vmatpush.msra.mxu0 %v2124
    %2147 = vmatpush.msra.mxu0 %v2123
    %2148 = vmatpush.msra.mxu0 %v2122
    %2149 = vmatpush.msra.mxu0 %v2121
    %2150 = vmatpush.msra.mxu0 %v2120
    %2151 = vmatmul.f32.gmra.mxu0 %v2133
    %v2152 = vpop.f32.mrf.mxu0
    %v2153 = vadd.f32 %v2130, %v2152
    %2154 = vdwg.mxu0
    %v2155 = vld [vmem:[%s41] sm:$0xff]
    %v2156 = vld [vmem:[%s41 + $0x8] sm:$0xff]
    %v2157 = vld [vmem:[%s41 + $0x10] sm:$0xff]
    %v2158 = vld [vmem:[%s41 + $0x18] sm:$0xff]
    %v2159 = vld [vmem:[%s41 + $0x20] sm:$0xff]
    %v2160 = vld [vmem:[%s41 + $0x28] sm:$0xff]
    %v2161 = vld [vmem:[%s41 + $0x30] sm:$0xff]
    %v2162 = vld [vmem:[%s41 + $0x38] sm:$0xff]
    %v2163 = vld [vmem:[%s53] sm:$0x1]
    %v2165 = vperm.slane %v2163, 0
    %2167 = vmatpush.msra.mxu0 0.0
    %2168 = vmatpush.msra.mxu0 0.0
    %2169 = vmatpush.msra.mxu0 0.0
    %2170 = vmatpush.msra.mxu0 0.0
    %2171 = vmatpush.msra.mxu0 0.0
    %2172 = vmatpush.msra.mxu0 0.0
    %2173 = vmatpush.msra.mxu0 0.0
    %2174 = vmatpush.msra.mxu0 0.0
    %2175 = vmatpush.msra.mxu0 %v2162
    %2176 = vmatpush.msra.mxu0 %v2161
    %2177 = vmatpush.msra.mxu0 %v2160
    %2178 = vmatpush.msra.mxu0 %v2159
    %2179 = vmatpush.msra.mxu0 %v2158
    %2180 = vmatpush.msra.mxu0 %v2157
    %2181 = vmatpush.msra.mxu0 %v2156
    %2182 = vmatpush.msra.mxu0 %v2155
    %2183 = vmatmul.f32.gmra.mxu0 %v2133
    %v2184 = vpop.f32.mrf.mxu0
    %v2185 = vadd.f32 %v2165, %v2184
    %2186 = vdwg.mxu0
    %v2187 = vld [vmem:[%s43] sm:$0xff]
    %v2188 = vld [vmem:[%s43 + $0x8] sm:$0xff]
    %v2189 = vld [vmem:[%s43 + $0x10] sm:$0xff]
    %v2190 = vld [vmem:[%s43 + $0x18] sm:$0xff]
    %v2191 = vld [vmem:[%s43 + $0x20] sm:$0xff]
    %v2192 = vld [vmem:[%s43 + $0x28] sm:$0xff]
    %v2193 = vld [vmem:[%s43 + $0x30] sm:$0xff]
    %v2194 = vld [vmem:[%s43 + $0x38] sm:$0xff]
    %v2195 = vld [vmem:[%s55] sm:$0x1]
    %v2197 = vperm.slane %v2195, 0
    %2199 = vmatpush.msra.mxu0 0.0
    %2200 = vmatpush.msra.mxu0 0.0
    %2201 = vmatpush.msra.mxu0 0.0
    %2202 = vmatpush.msra.mxu0 0.0
    %2203 = vmatpush.msra.mxu0 0.0
    %2204 = vmatpush.msra.mxu0 0.0
    %2205 = vmatpush.msra.mxu0 0.0
    %2206 = vmatpush.msra.mxu0 0.0
    %2207 = vmatpush.msra.mxu0 %v2194
    %2208 = vmatpush.msra.mxu0 %v2193
    %2209 = vmatpush.msra.mxu0 %v2192
    %2210 = vmatpush.msra.mxu0 %v2191
    %2211 = vmatpush.msra.mxu0 %v2190
    %2212 = vmatpush.msra.mxu0 %v2189
    %2213 = vmatpush.msra.mxu0 %v2188
    %2214 = vmatpush.msra.mxu0 %v2187
    %2215 = vmatmul.f32.gmra.mxu0 %v2133
    %v2216 = vpop.f32.mrf.mxu0
    %v2217 = vadd.f32 %v2197, %v2216
    %2218 = vdwg.mxu0
    %v2219 = vadd.f32 %v2113, %v2153
    %v2220 = vxor.u32 %v2219, 2147483648
    %v2221 = vmul.f32 %v2220, 1.442695
    %v2222 = vpow.pop %v2221
    %v2223 = vadd.f32 %v2222, 1.0
    %v2224 = vrcp.pop %v2223
    %v2225 = vmul.f32 %v2223, %v2224
    %v2226 = vsub.f32 1.0, %v2225
    %v2227 = vmul.f32 %v2224, %v2226
    %v2228 = vadd.f32 %v2224, %v2227
    %vm2229 = vweird.f32 %v2223
    %vm2230 = vweird.f32 %v2224
    %vm2231 = vmor %vm2229, %vm2230
    %v2232 = vsel %vm2231, %v2224, %v2228
    %v2233 = vand.u32 2147483647, %v2223
    %vm2234 = vcmp.eq.f32.partialorder %v2233, 8.507059e+37
    %v2235 = vand.u32 %v2223, 2147483648
    %v2236 = vor.u32 1.1754944e-38, %v2235
    %v2237 = vsel %vm2234, %v2236, %v2232
    %v2238 = vmul.f32 1.0, %v2237
    %v2239 = vadd.f32 %v2116, %v2185
    %v2240 = vxor.u32 %v2239, 2147483648
    %v2241 = vmul.f32 %v2240, 1.442695
    %v2242 = vpow.pop %v2241
    %v2243 = vadd.f32 %v2242, 1.0
    %v2244 = vrcp.pop %v2243
    %v2245 = vmul.f32 %v2243, %v2244
    %v2246 = vsub.f32 1.0, %v2245
    %v2247 = vmul.f32 %v2244, %v2246
    %v2248 = vadd.f32 %v2244, %v2247
    %vm2249 = vweird.f32 %v2243
    %vm2250 = vweird.f32 %v2244
    %vm2251 = vmor %vm2249, %vm2250
    %v2252 = vsel %vm2251, %v2244, %v2248
    %v2253 = vand.u32 2147483647, %v2243
    %vm2254 = vcmp.eq.f32.partialorder %v2253, 8.507059e+37
    %v2255 = vand.u32 %v2243, 2147483648
    %v2256 = vor.u32 1.1754944e-38, %v2255
    %v2257 = vsel %vm2254, %v2256, %v2252
    %v2258 = vmul.f32 1.0, %v2257
    %v2259 = vmul.f32 %v2238, %v2217
    %v2260 = vadd.f32 %v2119, %v2259
    %v2261 = vtanh.pop %v2260
    %v2262 = vsub.f32 1.0, %v2258
    %v2263 = vmul.f32 %v2262, %v2261
    %v2264 = vmul.f32 %v2258, %v2108
    %v2265 = vadd.f32 %v2263, %v2264
    %2266 = vst.msk [vmem:[#allocation5 + $0x8] sm:$0xff] %vm347, %v2265
    %2267 = vst.msk [vmem:[#allocation6 + $0x30] sm:$0xff] %vm347, %v2265
    %v2268 = vld [vmem:[#allocation2 + $0x10] sm:$0xff]
    %v2269 = vld [vmem:[#allocation2 + $0x28] sm:$0xff]
    %v2270 = vsel %vm272, %v2268, %v2269
    %v2271 = vld [vmem:[#allocation3 + $0x10] sm:$0xff]
    %v2272 = vld [vmem:[#allocation3 + $0x28] sm:$0xff]
    %v2273 = vsel %vm272, %v2271, %v2272
    %v2274 = vld [vmem:[#allocation4 + $0x10] sm:$0xff]
    %v2275 = vld [vmem:[#allocation4 + $0x28] sm:$0xff]
    %v2276 = vsel %vm272, %v2274, %v2275
    %v2277 = vld [vmem:[%s39] sm:$0xff]
    %v2278 = vld [vmem:[%s39 + $0x8] sm:$0xff]
    %v2279 = vld [vmem:[%s39 + $0x10] sm:$0xff]
    %v2280 = vld [vmem:[%s39 + $0x18] sm:$0xff]
    %v2281 = vld [vmem:[%s39 + $0x20] sm:$0xff]
    %v2282 = vld [vmem:[%s39 + $0x28] sm:$0xff]
    %v2283 = vld [vmem:[%s39 + $0x30] sm:$0xff]
    %v2284 = vld [vmem:[%s39 + $0x38] sm:$0xff]
    %v2285 = vld [vmem:[%s51] sm:$0x1]
    %v2287 = vperm.slane %v2285, 0
    %v2290 = vsel %vm347, %v2265, 0
    %2292 = vmatpush.msra.mxu0 0.0
    %2293 = vmatpush.msra.mxu0 0.0
    %2294 = vmatpush.msra.mxu0 0.0
    %2295 = vmatpush.msra.mxu0 0.0
    %2296 = vmatpush.msra.mxu0 0.0
    %2297 = vmatpush.msra.mxu0 0.0
    %2298 = vmatpush.msra.mxu0 0.0
    %2299 = vmatpush.msra.mxu0 0.0
    %2300 = vmatpush.msra.mxu0 %v2284
    %2301 = vmatpush.msra.mxu0 %v2283
    %2302 = vmatpush.msra.mxu0 %v2282
    %2303 = vmatpush.msra.mxu0 %v2281
    %2304 = vmatpush.msra.mxu0 %v2280
    %2305 = vmatpush.msra.mxu0 %v2279
    %2306 = vmatpush.msra.mxu0 %v2278
    %2307 = vmatpush.msra.mxu0 %v2277
    %2308 = vmatmul.f32.gmra.mxu0 %v2290
    %v2309 = vpop.f32.mrf.mxu0
    %v2310 = vadd.f32 %v2287, %v2309
    %2311 = vdwg.mxu0
    %v2312 = vld [vmem:[%s41] sm:$0xff]
    %v2313 = vld [vmem:[%s41 + $0x8] sm:$0xff]
    %v2314 = vld [vmem:[%s41 + $0x10] sm:$0xff]
    %v2315 = vld [vmem:[%s41 + $0x18] sm:$0xff]
    %v2316 = vld [vmem:[%s41 + $0x20] sm:$0xff]
    %v2317 = vld [vmem:[%s41 + $0x28] sm:$0xff]
    %v2318 = vld [vmem:[%s41 + $0x30] sm:$0xff]
    %v2319 = vld [vmem:[%s41 + $0x38] sm:$0xff]
    %v2320 = vld [vmem:[%s53] sm:$0x1]
    %v2322 = vperm.slane %v2320, 0
    %2324 = vmatpush.msra.mxu0 0.0
    %2325 = vmatpush.msra.mxu0 0.0
    %2326 = vmatpush.msra.mxu0 0.0
    %2327 = vmatpush.msra.mxu0 0.0
    %2328 = vmatpush.msra.mxu0 0.0
    %2329 = vmatpush.msra.mxu0 0.0
    %2330 = vmatpush.msra.mxu0 0.0
    %2331 = vmatpush.msra.mxu0 0.0
    %2332 = vmatpush.msra.mxu0 %v2319
    %2333 = vmatpush.msra.mxu0 %v2318
    %2334 = vmatpush.msra.mxu0 %v2317
    %2335 = vmatpush.msra.mxu0 %v2316
    %2336 = vmatpush.msra.mxu0 %v2315
    %2337 = vmatpush.msra.mxu0 %v2314
    %2338 = vmatpush.msra.mxu0 %v2313
    %2339 = vmatpush.msra.mxu0 %v2312
    %2340 = vmatmul.f32.gmra.mxu0 %v2290
    %v2341 = vpop.f32.mrf.mxu0
    %v2342 = vadd.f32 %v2322, %v2341
    %2343 = vdwg.mxu0
    %v2344 = vld [vmem:[%s43] sm:$0xff]
    %v2345 = vld [vmem:[%s43 + $0x8] sm:$0xff]
    %v2346 = vld [vmem:[%s43 + $0x10] sm:$0xff]
    %v2347 = vld [vmem:[%s43 + $0x18] sm:$0xff]
    %v2348 = vld [vmem:[%s43 + $0x20] sm:$0xff]
    %v2349 = vld [vmem:[%s43 + $0x28] sm:$0xff]
    %v2350 = vld [vmem:[%s43 + $0x30] sm:$0xff]
    %v2351 = vld [vmem:[%s43 + $0x38] sm:$0xff]
    %v2352 = vld [vmem:[%s55] sm:$0x1]
    %v2354 = vperm.slane %v2352, 0
    %2356 = vmatpush.msra.mxu0 0.0
    %2357 = vmatpush.msra.mxu0 0.0
    %2358 = vmatpush.msra.mxu0 0.0
    %2359 = vmatpush.msra.mxu0 0.0
    %2360 = vmatpush.msra.mxu0 0.0
    %2361 = vmatpush.msra.mxu0 0.0
    %2362 = vmatpush.msra.mxu0 0.0
    %2363 = vmatpush.msra.mxu0 0.0
    %2364 = vmatpush.msra.mxu0 %v2351
    %2365 = vmatpush.msra.mxu0 %v2350
    %2366 = vmatpush.msra.mxu0 %v2349
    %2367 = vmatpush.msra.mxu0 %v2348
    %2368 = vmatpush.msra.mxu0 %v2347
    %2369 = vmatpush.msra.mxu0 %v2346
    %2370 = vmatpush.msra.mxu0 %v2345
    %2371 = vmatpush.msra.mxu0 %v2344
    %2372 = vmatmul.f32.gmra.mxu0 %v2290
    %v2373 = vpop.f32.mrf.mxu0
    %v2374 = vadd.f32 %v2354, %v2373
    %2375 = vdwg.mxu0
    %v2376 = vadd.f32 %v2270, %v2310
    %v2377 = vxor.u32 %v2376, 2147483648
    %v2378 = vmul.f32 %v2377, 1.442695
    %v2379 = vpow.pop %v2378
    %v2380 = vadd.f32 %v2379, 1.0
    %v2381 = vrcp.pop %v2380
    %v2382 = vmul.f32 %v2380, %v2381
    %v2383 = vsub.f32 1.0, %v2382
    %v2384 = vmul.f32 %v2381, %v2383
    %v2385 = vadd.f32 %v2381, %v2384
    %vm2386 = vweird.f32 %v2380
    %vm2387 = vweird.f32 %v2381
    %vm2388 = vmor %vm2386, %vm2387
    %v2389 = vsel %vm2388, %v2381, %v2385
    %v2390 = vand.u32 2147483647, %v2380
    %vm2391 = vcmp.eq.f32.partialorder %v2390, 8.507059e+37
    %v2392 = vand.u32 %v2380, 2147483648
    %v2393 = vor.u32 1.1754944e-38, %v2392
    %v2394 = vsel %vm2391, %v2393, %v2389
    %v2395 = vmul.f32 1.0, %v2394
    %v2396 = vadd.f32 %v2273, %v2342
    %v2397 = vxor.u32 %v2396, 2147483648
    %v2398 = vmul.f32 %v2397, 1.442695
    %v2399 = vpow.pop %v2398
    %v2400 = vadd.f32 %v2399, 1.0
    %v2401 = vrcp.pop %v2400
    %v2402 = vmul.f32 %v2400, %v2401
    %v2403 = vsub.f32 1.0, %v2402
    %v2404 = vmul.f32 %v2401, %v2403
    %v2405 = vadd.f32 %v2401, %v2404
    %vm2406 = vweird.f32 %v2400
    %vm2407 = vweird.f32 %v2401
    %vm2408 = vmor %vm2406, %vm2407
    %v2409 = vsel %vm2408, %v2401, %v2405
    %v2410 = vand.u32 2147483647, %v2400
    %vm2411 = vcmp.eq.f32.partialorder %v2410, 8.507059e+37
    %v2412 = vand.u32 %v2400, 2147483648
    %v2413 = vor.u32 1.1754944e-38, %v2412
    %v2414 = vsel %vm2411, %v2413, %v2409
    %v2415 = vmul.f32 1.0, %v2414
    %v2416 = vmul.f32 %v2395, %v2374
    %v2417 = vadd.f32 %v2276, %v2416
    %v2418 = vtanh.pop %v2417
    %v2419 = vsub.f32 1.0, %v2415
    %v2420 = vmul.f32 %v2419, %v2418
    %v2421 = vmul.f32 %v2415, %v2265
    %v2422 = vadd.f32 %v2420, %v2421
    %2423 = vst.msk [vmem:[#allocation5 + $0x10] sm:$0xff] %vm347, %v2422
    %2424 = vst.msk [vmem:[#allocation6 + $0x28] sm:$0xff] %vm347, %v2422
    %v2425 = vld [vmem:[#allocation2 + $0x18] sm:$0xff]
    %v2426 = vld [vmem:[#allocation2 + $0x20] sm:$0xff]
    %v2427 = vsel %vm272, %v2425, %v2426
    %v2428 = vld [vmem:[#allocation3 + $0x18] sm:$0xff]
    %v2429 = vld [vmem:[#allocation3 + $0x20] sm:$0xff]
    %v2430 = vsel %vm272, %v2428, %v2429
    %v2431 = vld [vmem:[#allocation4 + $0x18] sm:$0xff]
    %v2432 = vld [vmem:[#allocation4 + $0x20] sm:$0xff]
    %v2433 = vsel %vm272, %v2431, %v2432
    %v2434 = vld [vmem:[%s39] sm:$0xff]
    %v2435 = vld [vmem:[%s39 + $0x8] sm:$0xff]
    %v2436 = vld [vmem:[%s39 + $0x10] sm:$0xff]
    %v2437 = vld [vmem:[%s39 + $0x18] sm:$0xff]
    %v2438 = vld [vmem:[%s39 + $0x20] sm:$0xff]
    %v2439 = vld [vmem:[%s39 + $0x28] sm:$0xff]
    %v2440 = vld [vmem:[%s39 + $0x30] sm:$0xff]
    %v2441 = vld [vmem:[%s39 + $0x38] sm:$0xff]
    %v2442 = vld [vmem:[%s51] sm:$0x1]
    %v2444 = vperm.slane %v2442, 0
    %v2447 = vsel %vm347, %v2422, 0
    %2449 = vmatpush.msra.mxu0 0.0
    %2450 = vmatpush.msra.mxu0 0.0
    %2451 = vmatpush.msra.mxu0 0.0
    %2452 = vmatpush.msra.mxu0 0.0
    %2453 = vmatpush.msra.mxu0 0.0
    %2454 = vmatpush.msra.mxu0 0.0
    %2455 = vmatpush.msra.mxu0 0.0
    %2456 = vmatpush.msra.mxu0 0.0
    %2457 = vmatpush.msra.mxu0 %v2441
    %2458 = vmatpush.msra.mxu0 %v2440
    %2459 = vmatpush.msra.mxu0 %v2439
    %2460 = vmatpush.msra.mxu0 %v2438
    %2461 = vmatpush.msra.mxu0 %v2437
    %2462 = vmatpush.msra.mxu0 %v2436
    %2463 = vmatpush.msra.mxu0 %v2435
    %2464 = vmatpush.msra.mxu0 %v2434
    %2465 = vmatmul.f32.gmra.mxu0 %v2447
    %v2466 = vpop.f32.mrf.mxu0
    %v2467 = vadd.f32 %v2444, %v2466
    %2468 = vdwg.mxu0
    %v2469 = vld [vmem:[%s41] sm:$0xff]
    %v2470 = vld [vmem:[%s41 + $0x8] sm:$0xff]
    %v2471 = vld [vmem:[%s41 + $0x10] sm:$0xff]
    %v2472 = vld [vmem:[%s41 + $0x18] sm:$0xff]
    %v2473 = vld [vmem:[%s41 + $0x20] sm:$0xff]
    %v2474 = vld [vmem:[%s41 + $0x28] sm:$0xff]
    %v2475 = vld [vmem:[%s41 + $0x30] sm:$0xff]
    %v2476 = vld [vmem:[%s41 + $0x38] sm:$0xff]
    %v2477 = vld [vmem:[%s53] sm:$0x1]
    %v2479 = vperm.slane %v2477, 0
    %2481 = vmatpush.msra.mxu0 0.0
    %2482 = vmatpush.msra.mxu0 0.0
    %2483 = vmatpush.msra.mxu0 0.0
    %2484 = vmatpush.msra.mxu0 0.0
    %2485 = vmatpush.msra.mxu0 0.0
    %2486 = vmatpush.msra.mxu0 0.0
    %2487 = vmatpush.msra.mxu0 0.0
    %2488 = vmatpush.msra.mxu0 0.0
    %2489 = vmatpush.msra.mxu0 %v2476
    %2490 = vmatpush.msra.mxu0 %v2475
    %2491 = vmatpush.msra.mxu0 %v2474
    %2492 = vmatpush.msra.mxu0 %v2473
    %2493 = vmatpush.msra.mxu0 %v2472
    %2494 = vmatpush.msra.mxu0 %v2471
    %2495 = vmatpush.msra.mxu0 %v2470
    %2496 = vmatpush.msra.mxu0 %v2469
    %2497 = vmatmul.f32.gmra.mxu0 %v2447
    %v2498 = vpop.f32.mrf.mxu0
    %v2499 = vadd.f32 %v2479, %v2498
    %2500 = vdwg.mxu0
    %v2501 = vld [vmem:[%s43] sm:$0xff]
    %v2502 = vld [vmem:[%s43 + $0x8] sm:$0xff]
    %v2503 = vld [vmem:[%s43 + $0x10] sm:$0xff]
    %v2504 = vld [vmem:[%s43 + $0x18] sm:$0xff]
    %v2505 = vld [vmem:[%s43 + $0x20] sm:$0xff]
    %v2506 = vld [vmem:[%s43 + $0x28] sm:$0xff]
    %v2507 = vld [vmem:[%s43 + $0x30] sm:$0xff]
    %v2508 = vld [vmem:[%s43 + $0x38] sm:$0xff]
    %v2509 = vld [vmem:[%s55] sm:$0x1]
    %v2511 = vperm.slane %v2509, 0
    %2513 = vmatpush.msra.mxu0 0.0
    %2514 = vmatpush.msra.mxu0 0.0
    %2515 = vmatpush.msra.mxu0 0.0
    %2516 = vmatpush.msra.mxu0 0.0
    %2517 = vmatpush.msra.mxu0 0.0
    %2518 = vmatpush.msra.mxu0 0.0
    %2519 = vmatpush.msra.mxu0 0.0
    %2520 = vmatpush.msra.mxu0 0.0
    %2521 = vmatpush.msra.mxu0 %v2508
    %2522 = vmatpush.msra.mxu0 %v2507
    %2523 = vmatpush.msra.mxu0 %v2506
    %2524 = vmatpush.msra.mxu0 %v2505
    %2525 = vmatpush.msra.mxu0 %v2504
    %2526 = vmatpush.msra.mxu0 %v2503
    %2527 = vmatpush.msra.mxu0 %v2502
    %2528 = vmatpush.msra.mxu0 %v2501
    %2529 = vmatmul.f32.gmra.mxu0 %v2447
    %v2530 = vpop.f32.mrf.mxu0
    %v2531 = vadd.f32 %v2511, %v2530
    %2532 = vdwg.mxu0
    %v2533 = vadd.f32 %v2427, %v2467
    %v2534 = vxor.u32 %v2533, 2147483648
    %v2535 = vmul.f32 %v2534, 1.442695
    %v2536 = vpow.pop %v2535
    %v2537 = vadd.f32 %v2536, 1.0
    %v2538 = vrcp.pop %v2537
    %v2539 = vmul.f32 %v2537, %v2538
    %v2540 = vsub.f32 1.0, %v2539
    %v2541 = vmul.f32 %v2538, %v2540
    %v2542 = vadd.f32 %v2538, %v2541
    %vm2543 = vweird.f32 %v2537
    %vm2544 = vweird.f32 %v2538
    %vm2545 = vmor %vm2543, %vm2544
    %v2546 = vsel %vm2545, %v2538, %v2542
    %v2547 = vand.u32 2147483647, %v2537
    %vm2548 = vcmp.eq.f32.partialorder %v2547, 8.507059e+37
    %v2549 = vand.u32 %v2537, 2147483648
    %v2550 = vor.u32 1.1754944e-38, %v2549
    %v2551 = vsel %vm2548, %v2550, %v2546
    %v2552 = vmul.f32 1.0, %v2551
    %v2553 = vadd.f32 %v2430, %v2499
    %v2554 = vxor.u32 %v2553, 2147483648
    %v2555 = vmul.f32 %v2554, 1.442695
    %v2556 = vpow.pop %v2555
    %v2557 = vadd.f32 %v2556, 1.0
    %v2558 = vrcp.pop %v2557
    %v2559 = vmul.f32 %v2557, %v2558
    %v2560 = vsub.f32 1.0, %v2559
    %v2561 = vmul.f32 %v2558, %v2560
    %v2562 = vadd.f32 %v2558, %v2561
    %vm2563 = vweird.f32 %v2557
    %vm2564 = vweird.f32 %v2558
    %vm2565 = vmor %vm2563, %vm2564
    %v2566 = vsel %vm2565, %v2558, %v2562
    %v2567 = vand.u32 2147483647, %v2557
    %vm2568 = vcmp.eq.f32.partialorder %v2567, 8.507059e+37
    %v2569 = vand.u32 %v2557, 2147483648
    %v2570 = vor.u32 1.1754944e-38, %v2569
    %v2571 = vsel %vm2568, %v2570, %v2566
    %v2572 = vmul.f32 1.0, %v2571
    %v2573 = vmul.f32 %v2552, %v2531
    %v2574 = vadd.f32 %v2433, %v2573
    %v2575 = vtanh.pop %v2574
    %v2576 = vsub.f32 1.0, %v2572
    %v2577 = vmul.f32 %v2576, %v2575
    %v2578 = vmul.f32 %v2572, %v2422
    %v2579 = vadd.f32 %v2577, %v2578
    %2580 = vst.msk [vmem:[#allocation5 + $0x18] sm:$0xff] %vm347, %v2579
    %2581 = vst.msk [vmem:[#allocation6 + $0x20] sm:$0xff] %vm347, %v2579
    %v2582 = vld [vmem:[#allocation2 + $0x20] sm:$0xff]
    %v2583 = vld [vmem:[#allocation2 + $0x18] sm:$0xff]
    %v2584 = vsel %vm272, %v2582, %v2583
    %v2585 = vld [vmem:[#allocation3 + $0x20] sm:$0xff]
    %v2586 = vld [vmem:[#allocation3 + $0x18] sm:$0xff]
    %v2587 = vsel %vm272, %v2585, %v2586
    %v2588 = vld [vmem:[#allocation4 + $0x20] sm:$0xff]
    %v2589 = vld [vmem:[#allocation4 + $0x18] sm:$0xff]
    %v2590 = vsel %vm272, %v2588, %v2589
    %v2591 = vld [vmem:[%s39] sm:$0xff]
    %v2592 = vld [vmem:[%s39 + $0x8] sm:$0xff]
    %v2593 = vld [vmem:[%s39 + $0x10] sm:$0xff]
    %v2594 = vld [vmem:[%s39 + $0x18] sm:$0xff]
    %v2595 = vld [vmem:[%s39 + $0x20] sm:$0xff]
    %v2596 = vld [vmem:[%s39 + $0x28] sm:$0xff]
    %v2597 = vld [vmem:[%s39 + $0x30] sm:$0xff]
    %v2598 = vld [vmem:[%s39 + $0x38] sm:$0xff]
    %v2599 = vld [vmem:[%s51] sm:$0x1]
    %v2601 = vperm.slane %v2599, 0
    %v2604 = vsel %vm347, %v2579, 0
    %2606 = vmatpush.msra.mxu0 0.0
    %2607 = vmatpush.msra.mxu0 0.0
    %2608 = vmatpush.msra.mxu0 0.0
    %2609 = vmatpush.msra.mxu0 0.0
    %2610 = vmatpush.msra.mxu0 0.0
    %2611 = vmatpush.msra.mxu0 0.0
    %2612 = vmatpush.msra.mxu0 0.0
    %2613 = vmatpush.msra.mxu0 0.0
    %2614 = vmatpush.msra.mxu0 %v2598
    %2615 = vmatpush.msra.mxu0 %v2597
    %2616 = vmatpush.msra.mxu0 %v2596
    %2617 = vmatpush.msra.mxu0 %v2595
    %2618 = vmatpush.msra.mxu0 %v2594
    %2619 = vmatpush.msra.mxu0 %v2593
    %2620 = vmatpush.msra.mxu0 %v2592
    %2621 = vmatpush.msra.mxu0 %v2591
    %2622 = vmatmul.f32.gmra.mxu0 %v2604
    %v2623 = vpop.f32.mrf.mxu0
    %v2624 = vadd.f32 %v2601, %v2623
    %2625 = vdwg.mxu0
    %v2626 = vld [vmem:[%s41] sm:$0xff]
    %v2627 = vld [vmem:[%s41 + $0x8] sm:$0xff]
    %v2628 = vld [vmem:[%s41 + $0x10] sm:$0xff]
    %v2629 = vld [vmem:[%s41 + $0x18] sm:$0xff]
    %v2630 = vld [vmem:[%s41 + $0x20] sm:$0xff]
    %v2631 = vld [vmem:[%s41 + $0x28] sm:$0xff]
    %v2632 = vld [vmem:[%s41 + $0x30] sm:$0xff]
    %v2633 = vld [vmem:[%s41 + $0x38] sm:$0xff]
    %v2634 = vld [vmem:[%s53] sm:$0x1]
    %v2636 = vperm.slane %v2634, 0
    %2638 = vmatpush.msra.mxu0 0.0
    %2639 = vmatpush.msra.mxu0 0.0
    %2640 = vmatpush.msra.mxu0 0.0
    %2641 = vmatpush.msra.mxu0 0.0
    %2642 = vmatpush.msra.mxu0 0.0
    %2643 = vmatpush.msra.mxu0 0.0
    %2644 = vmatpush.msra.mxu0 0.0
    %2645 = vmatpush.msra.mxu0 0.0
    %2646 = vmatpush.msra.mxu0 %v2633
    %2647 = vmatpush.msra.mxu0 %v2632
    %2648 = vmatpush.msra.mxu0 %v2631
    %2649 = vmatpush.msra.mxu0 %v2630
    %2650 = vmatpush.msra.mxu0 %v2629
    %2651 = vmatpush.msra.mxu0 %v2628
    %2652 = vmatpush.msra.mxu0 %v2627
    %2653 = vmatpush.msra.mxu0 %v2626
    %2654 = vmatmul.f32.gmra.mxu0 %v2604
    %v2655 = vpop.f32.mrf.mxu0
    %v2656 = vadd.f32 %v2636, %v2655
    %2657 = vdwg.mxu0
    %v2658 = vld [vmem:[%s43] sm:$0xff]
    %v2659 = vld [vmem:[%s43 + $0x8] sm:$0xff]
    %v2660 = vld [vmem:[%s43 + $0x10] sm:$0xff]
    %v2661 = vld [vmem:[%s43 + $0x18] sm:$0xff]
    %v2662 = vld [vmem:[%s43 + $0x20] sm:$0xff]
    %v2663 = vld [vmem:[%s43 + $0x28] sm:$0xff]
    %v2664 = vld [vmem:[%s43 + $0x30] sm:$0xff]
    %v2665 = vld [vmem:[%s43 + $0x38] sm:$0xff]
    %v2666 = vld [vmem:[%s55] sm:$0x1]
    %v2668 = vperm.slane %v2666, 0
    %2670 = vmatpush.msra.mxu0 0.0
    %2671 = vmatpush.msra.mxu0 0.0
    %2672 = vmatpush.msra.mxu0 0.0
    %2673 = vmatpush.msra.mxu0 0.0
    %2674 = vmatpush.msra.mxu0 0.0
    %2675 = vmatpush.msra.mxu0 0.0
    %2676 = vmatpush.msra.mxu0 0.0
    %2677 = vmatpush.msra.mxu0 0.0
    %2678 = vmatpush.msra.mxu0 %v2665
    %2679 = vmatpush.msra.mxu0 %v2664
    %2680 = vmatpush.msra.mxu0 %v2663
    %2681 = vmatpush.msra.mxu0 %v2662
    %2682 = vmatpush.msra.mxu0 %v2661
    %2683 = vmatpush.msra.mxu0 %v2660
    %2684 = vmatpush.msra.mxu0 %v2659
    %2685 = vmatpush.msra.mxu0 %v2658
    %2686 = vmatmul.f32.gmra.mxu0 %v2604
    %v2687 = vpop.f32.mrf.mxu0
    %v2688 = vadd.f32 %v2668, %v2687
    %2689 = vdwg.mxu0
    %v2690 = vadd.f32 %v2584, %v2624
    %v2691 = vxor.u32 %v2690, 2147483648
    %v2692 = vmul.f32 %v2691, 1.442695
    %v2693 = vpow.pop %v2692
    %v2694 = vadd.f32 %v2693, 1.0
    %v2695 = vrcp.pop %v2694
    %v2696 = vmul.f32 %v2694, %v2695
    %v2697 = vsub.f32 1.0, %v2696
    %v2698 = vmul.f32 %v2695, %v2697
    %v2699 = vadd.f32 %v2695, %v2698
    %vm2700 = vweird.f32 %v2694
    %vm2701 = vweird.f32 %v2695
    %vm2702 = vmor %vm2700, %vm2701
    %v2703 = vsel %vm2702, %v2695, %v2699
    %v2704 = vand.u32 2147483647, %v2694
    %vm2705 = vcmp.eq.f32.partialorder %v2704, 8.507059e+37
    %v2706 = vand.u32 %v2694, 2147483648
    %v2707 = vor.u32 1.1754944e-38, %v2706
    %v2708 = vsel %vm2705, %v2707, %v2703
    %v2709 = vmul.f32 1.0, %v2708
    %v2710 = vadd.f32 %v2587, %v2656
    %v2711 = vxor.u32 %v2710, 2147483648
    %v2712 = vmul.f32 %v2711, 1.442695
    %v2713 = vpow.pop %v2712
    %v2714 = vadd.f32 %v2713, 1.0
    %v2715 = vrcp.pop %v2714
    %v2716 = vmul.f32 %v2714, %v2715
    %v2717 = vsub.f32 1.0, %v2716
    %v2718 = vmul.f32 %v2715, %v2717
    %v2719 = vadd.f32 %v2715, %v2718
    %vm2720 = vweird.f32 %v2714
    %vm2721 = vweird.f32 %v2715
    %vm2722 = vmor %vm2720, %vm2721
    %v2723 = vsel %vm2722, %v2715, %v2719
    %v2724 = vand.u32 2147483647, %v2714
    %vm2725 = vcmp.eq.f32.partialorder %v2724, 8.507059e+37
    %v2726 = vand.u32 %v2714, 2147483648
    %v2727 = vor.u32 1.1754944e-38, %v2726
    %v2728 = vsel %vm2725, %v2727, %v2723
    %v2729 = vmul.f32 1.0, %v2728
    %v2730 = vmul.f32 %v2709, %v2688
    %v2731 = vadd.f32 %v2590, %v2730
    %v2732 = vtanh.pop %v2731
    %v2733 = vsub.f32 1.0, %v2729
    %v2734 = vmul.f32 %v2733, %v2732
    %v2735 = vmul.f32 %v2729, %v2579
    %v2736 = vadd.f32 %v2734, %v2735
    %2737 = vst.msk [vmem:[#allocation5 + $0x20] sm:$0xff] %vm347, %v2736
    %2738 = vst.msk [vmem:[#allocation6 + $0x18] sm:$0xff] %vm347, %v2736
    %v2739 = vld [vmem:[#allocation2 + $0x28] sm:$0xff]
    %v2740 = vld [vmem:[#allocation2 + $0x10] sm:$0xff]
    %v2741 = vsel %vm272, %v2739, %v2740
    %v2742 = vld [vmem:[#allocation3 + $0x28] sm:$0xff]
    %v2743 = vld [vmem:[#allocation3 + $0x10] sm:$0xff]
    %v2744 = vsel %vm272, %v2742, %v2743
    %v2745 = vld [vmem:[#allocation4 + $0x28] sm:$0xff]
    %v2746 = vld [vmem:[#allocation4 + $0x10] sm:$0xff]
    %v2747 = vsel %vm272, %v2745, %v2746
    %v2748 = vld [vmem:[%s39] sm:$0xff]
    %v2749 = vld [vmem:[%s39 + $0x8] sm:$0xff]
    %v2750 = vld [vmem:[%s39 + $0x10] sm:$0xff]
    %v2751 = vld [vmem:[%s39 + $0x18] sm:$0xff]
    %v2752 = vld [vmem:[%s39 + $0x20] sm:$0xff]
    %v2753 = vld [vmem:[%s39 + $0x28] sm:$0xff]
    %v2754 = vld [vmem:[%s39 + $0x30] sm:$0xff]
    %v2755 = vld [vmem:[%s39 + $0x38] sm:$0xff]
    %v2756 = vld [vmem:[%s51] sm:$0x1]
    %v2758 = vperm.slane %v2756, 0
    %v2761 = vsel %vm347, %v2736, 0
    %2763 = vmatpush.msra.mxu0 0.0
    %2764 = vmatpush.msra.mxu0 0.0
    %2765 = vmatpush.msra.mxu0 0.0
    %2766 = vmatpush.msra.mxu0 0.0
    %2767 = vmatpush.msra.mxu0 0.0
    %2768 = vmatpush.msra.mxu0 0.0
    %2769 = vmatpush.msra.mxu0 0.0
    %2770 = vmatpush.msra.mxu0 0.0
    %2771 = vmatpush.msra.mxu0 %v2755
    %2772 = vmatpush.msra.mxu0 %v2754
    %2773 = vmatpush.msra.mxu0 %v2753
    %2774 = vmatpush.msra.mxu0 %v2752
    %2775 = vmatpush.msra.mxu0 %v2751
    %2776 = vmatpush.msra.mxu0 %v2750
    %2777 = vmatpush.msra.mxu0 %v2749
    %2778 = vmatpush.msra.mxu0 %v2748
    %2779 = vmatmul.f32.gmra.mxu0 %v2761
    %v2780 = vpop.f32.mrf.mxu0
    %v2781 = vadd.f32 %v2758, %v2780
    %2782 = vdwg.mxu0
    %v2783 = vld [vmem:[%s41] sm:$0xff]
    %v2784 = vld [vmem:[%s41 + $0x8] sm:$0xff]
    %v2785 = vld [vmem:[%s41 + $0x10] sm:$0xff]
    %v2786 = vld [vmem:[%s41 + $0x18] sm:$0xff]
    %v2787 = vld [vmem:[%s41 + $0x20] sm:$0xff]
    %v2788 = vld [vmem:[%s41 + $0x28] sm:$0xff]
    %v2789 = vld [vmem:[%s41 + $0x30] sm:$0xff]
    %v2790 = vld [vmem:[%s41 + $0x38] sm:$0xff]
    %v2791 = vld [vmem:[%s53] sm:$0x1]
    %v2793 = vperm.slane %v2791, 0
    %2795 = vmatpush.msra.mxu0 0.0
    %2796 = vmatpush.msra.mxu0 0.0
    %2797 = vmatpush.msra.mxu0 0.0
    %2798 = vmatpush.msra.mxu0 0.0
    %2799 = vmatpush.msra.mxu0 0.0
    %2800 = vmatpush.msra.mxu0 0.0
    %2801 = vmatpush.msra.mxu0 0.0
    %2802 = vmatpush.msra.mxu0 0.0
    %2803 = vmatpush.msra.mxu0 %v2790
    %2804 = vmatpush.msra.mxu0 %v2789
    %2805 = vmatpush.msra.mxu0 %v2788
    %2806 = vmatpush.msra.mxu0 %v2787
    %2807 = vmatpush.msra.mxu0 %v2786
    %2808 = vmatpush.msra.mxu0 %v2785
    %2809 = vmatpush.msra.mxu0 %v2784
    %2810 = vmatpush.msra.mxu0 %v2783
    %2811 = vmatmul.f32.gmra.mxu0 %v2761
    %v2812 = vpop.f32.mrf.mxu0
    %v2813 = vadd.f32 %v2793, %v2812
    %2814 = vdwg.mxu0
    %v2815 = vld [vmem:[%s43] sm:$0xff]
    %v2816 = vld [vmem:[%s43 + $0x8] sm:$0xff]
    %v2817 = vld [vmem:[%s43 + $0x10] sm:$0xff]
    %v2818 = vld [vmem:[%s43 + $0x18] sm:$0xff]
    %v2819 = vld [vmem:[%s43 + $0x20] sm:$0xff]
    %v2820 = vld [vmem:[%s43 + $0x28] sm:$0xff]
    %v2821 = vld [vmem:[%s43 + $0x30] sm:$0xff]
    %v2822 = vld [vmem:[%s43 + $0x38] sm:$0xff]
    %v2823 = vld [vmem:[%s55] sm:$0x1]
    %v2825 = vperm.slane %v2823, 0
    %2827 = vmatpush.msra.mxu0 0.0
    %2828 = vmatpush.msra.mxu0 0.0
    %2829 = vmatpush.msra.mxu0 0.0
    %2830 = vmatpush.msra.mxu0 0.0
    %2831 = vmatpush.msra.mxu0 0.0
    %2832 = vmatpush.msra.mxu0 0.0
    %2833 = vmatpush.msra.mxu0 0.0
    %2834 = vmatpush.msra.mxu0 0.0
    %2835 = vmatpush.msra.mxu0 %v2822
    %2836 = vmatpush.msra.mxu0 %v2821
    %2837 = vmatpush.msra.mxu0 %v2820
    %2838 = vmatpush.msra.mxu0 %v2819
    %2839 = vmatpush.msra.mxu0 %v2818
    %2840 = vmatpush.msra.mxu0 %v2817
    %2841 = vmatpush.msra.mxu0 %v2816
    %2842 = vmatpush.msra.mxu0 %v2815
    %2843 = vmatmul.f32.gmra.mxu0 %v2761
    %v2844 = vpop.f32.mrf.mxu0
    %v2845 = vadd.f32 %v2825, %v2844
    %2846 = vdwg.mxu0
    %v2847 = vadd.f32 %v2741, %v2781
    %v2848 = vxor.u32 %v2847, 2147483648
    %v2849 = vmul.f32 %v2848, 1.442695
    %v2850 = vpow.pop %v2849
    %v2851 = vadd.f32 %v2850, 1.0
    %v2852 = vrcp.pop %v2851
    %v2853 = vmul.f32 %v2851, %v2852
    %v2854 = vsub.f32 1.0, %v2853
    %v2855 = vmul.f32 %v2852, %v2854
    %v2856 = vadd.f32 %v2852, %v2855
    %vm2857 = vweird.f32 %v2851
    %vm2858 = vweird.f32 %v2852
    %vm2859 = vmor %vm2857, %vm2858
    %v2860 = vsel %vm2859, %v2852, %v2856
    %v2861 = vand.u32 2147483647, %v2851
    %vm2862 = vcmp.eq.f32.partialorder %v2861, 8.507059e+37
    %v2863 = vand.u32 %v2851, 2147483648
    %v2864 = vor.u32 1.1754944e-38, %v2863
    %v2865 = vsel %vm2862, %v2864, %v2860
    %v2866 = vmul.f32 1.0, %v2865
    %v2867 = vadd.f32 %v2744, %v2813
    %v2868 = vxor.u32 %v2867, 2147483648
    %v2869 = vmul.f32 %v2868, 1.442695
    %v2870 = vpow.pop %v2869
    %v2871 = vadd.f32 %v2870, 1.0
    %v2872 = vrcp.pop %v2871
    %v2873 = vmul.f32 %v2871, %v2872
    %v2874 = vsub.f32 1.0, %v2873
    %v2875 = vmul.f32 %v2872, %v2874
    %v2876 = vadd.f32 %v2872, %v2875
    %vm2877 = vweird.f32 %v2871
    %vm2878 = vweird.f32 %v2872
    %vm2879 = vmor %vm2877, %vm2878
    %v2880 = vsel %vm2879, %v2872, %v2876
    %v2881 = vand.u32 2147483647, %v2871
    %vm2882 = vcmp.eq.f32.partialorder %v2881, 8.507059e+37
    %v2883 = vand.u32 %v2871, 2147483648
    %v2884 = vor.u32 1.1754944e-38, %v2883
    %v2885 = vsel %vm2882, %v2884, %v2880
    %v2886 = vmul.f32 1.0, %v2885
    %v2887 = vmul.f32 %v2866, %v2845
    %v2888 = vadd.f32 %v2747, %v2887
    %v2889 = vtanh.pop %v2888
    %v2890 = vsub.f32 1.0, %v2886
    %v2891 = vmul.f32 %v2890, %v2889
    %v2892 = vmul.f32 %v2886, %v2736
    %v2893 = vadd.f32 %v2891, %v2892
    %2894 = vst.msk [vmem:[#allocation5 + $0x28] sm:$0xff] %vm347, %v2893
    %2895 = vst.msk [vmem:[#allocation6 + $0x10] sm:$0xff] %vm347, %v2893
    %v2896 = vld [vmem:[#allocation2 + $0x30] sm:$0xff]
    %v2897 = vld [vmem:[#allocation2 + $0x8] sm:$0xff]
    %v2898 = vsel %vm272, %v2896, %v2897
    %v2899 = vld [vmem:[#allocation3 + $0x30] sm:$0xff]
    %v2900 = vld [vmem:[#allocation3 + $0x8] sm:$0xff]
    %v2901 = vsel %vm272, %v2899, %v2900
    %v2902 = vld [vmem:[#allocation4 + $0x30] sm:$0xff]
    %v2903 = vld [vmem:[#allocation4 + $0x8] sm:$0xff]
    %v2904 = vsel %vm272, %v2902, %v2903
    %v2905 = vld [vmem:[%s39] sm:$0xff]
    %v2906 = vld [vmem:[%s39 + $0x8] sm:$0xff]
    %v2907 = vld [vmem:[%s39 + $0x10] sm:$0xff]
    %v2908 = vld [vmem:[%s39 + $0x18] sm:$0xff]
    %v2909 = vld [vmem:[%s39 + $0x20] sm:$0xff]
    %v2910 = vld [vmem:[%s39 + $0x28] sm:$0xff]
    %v2911 = vld [vmem:[%s39 + $0x30] sm:$0xff]
    %v2912 = vld [vmem:[%s39 + $0x38] sm:$0xff]
    %v2913 = vld [vmem:[%s51] sm:$0x1]
    %v2915 = vperm.slane %v2913, 0
    %v2918 = vsel %vm347, %v2893, 0
    %2920 = vmatpush.msra.mxu0 0.0
    %2921 = vmatpush.msra.mxu0 0.0
    %2922 = vmatpush.msra.mxu0 0.0
    %2923 = vmatpush.msra.mxu0 0.0
    %2924 = vmatpush.msra.mxu0 0.0
    %2925 = vmatpush.msra.mxu0 0.0
    %2926 = vmatpush.msra.mxu0 0.0
    %2927 = vmatpush.msra.mxu0 0.0
    %2928 = vmatpush.msra.mxu0 %v2912
    %2929 = vmatpush.msra.mxu0 %v2911
    %2930 = vmatpush.msra.mxu0 %v2910
    %2931 = vmatpush.msra.mxu0 %v2909
    %2932 = vmatpush.msra.mxu0 %v2908
    %2933 = vmatpush.msra.mxu0 %v2907
    %2934 = vmatpush.msra.mxu0 %v2906
    %2935 = vmatpush.msra.mxu0 %v2905
    %2936 = vmatmul.f32.gmra.mxu0 %v2918
    %v2937 = vpop.f32.mrf.mxu0
    %v2938 = vadd.f32 %v2915, %v2937
    %2939 = vdwg.mxu0
    %v2940 = vld [vmem:[%s41] sm:$0xff]
    %v2941 = vld [vmem:[%s41 + $0x8] sm:$0xff]
    %v2942 = vld [vmem:[%s41 + $0x10] sm:$0xff]
    %v2943 = vld [vmem:[%s41 + $0x18] sm:$0xff]
    %v2944 = vld [vmem:[%s41 + $0x20] sm:$0xff]
    %v2945 = vld [vmem:[%s41 + $0x28] sm:$0xff]
    %v2946 = vld [vmem:[%s41 + $0x30] sm:$0xff]
    %v2947 = vld [vmem:[%s41 + $0x38] sm:$0xff]
    %v2948 = vld [vmem:[%s53] sm:$0x1]
    %v2950 = vperm.slane %v2948, 0
    %2952 = vmatpush.msra.mxu0 0.0
    %2953 = vmatpush.msra.mxu0 0.0
    %2954 = vmatpush.msra.mxu0 0.0
    %2955 = vmatpush.msra.mxu0 0.0
    %2956 = vmatpush.msra.mxu0 0.0
    %2957 = vmatpush.msra.mxu0 0.0
    %2958 = vmatpush.msra.mxu0 0.0
    %2959 = vmatpush.msra.mxu0 0.0
    %2960 = vmatpush.msra.mxu0 %v2947
    %2961 = vmatpush.msra.mxu0 %v2946
    %2962 = vmatpush.msra.mxu0 %v2945
    %2963 = vmatpush.msra.mxu0 %v2944
    %2964 = vmatpush.msra.mxu0 %v2943
    %2965 = vmatpush.msra.mxu0 %v2942
    %2966 = vmatpush.msra.mxu0 %v2941
    %2967 = vmatpush.msra.mxu0 %v2940
    %2968 = vmatmul.f32.gmra.mxu0 %v2918
    %v2969 = vpop.f32.mrf.mxu0
    %v2970 = vadd.f32 %v2950, %v2969
    %2971 = vdwg.mxu0
    %v2972 = vld [vmem:[%s43] sm:$0xff]
    %v2973 = vld [vmem:[%s43 + $0x8] sm:$0xff]
    %v2974 = vld [vmem:[%s43 + $0x10] sm:$0xff]
    %v2975 = vld [vmem:[%s43 + $0x18] sm:$0xff]
    %v2976 = vld [vmem:[%s43 + $0x20] sm:$0xff]
    %v2977 = vld [vmem:[%s43 + $0x28] sm:$0xff]
    %v2978 = vld [vmem:[%s43 + $0x30] sm:$0xff]
    %v2979 = vld [vmem:[%s43 + $0x38] sm:$0xff]
    %v2980 = vld [vmem:[%s55] sm:$0x1]
    %v2982 = vperm.slane %v2980, 0
    %2984 = vmatpush.msra.mxu0 0.0
    %2985 = vmatpush.msra.mxu0 0.0
    %2986 = vmatpush.msra.mxu0 0.0
    %2987 = vmatpush.msra.mxu0 0.0
    %2988 = vmatpush.msra.mxu0 0.0
    %2989 = vmatpush.msra.mxu0 0.0
    %2990 = vmatpush.msra.mxu0 0.0
    %2991 = vmatpush.msra.mxu0 0.0
    %2992 = vmatpush.msra.mxu0 %v2979
    %2993 = vmatpush.msra.mxu0 %v2978
    %2994 = vmatpush.msra.mxu0 %v2977
    %2995 = vmatpush.msra.mxu0 %v2976
    %2996 = vmatpush.msra.mxu0 %v2975
    %2997 = vmatpush.msra.mxu0 %v2974
    %2998 = vmatpush.msra.mxu0 %v2973
    %2999 = vmatpush.msra.mxu0 %v2972
    %3000 = vmatmul.f32.gmra.mxu0 %v2918
    %v3001 = vpop.f32.mrf.mxu0
    %v3002 = vadd.f32 %v2982, %v3001
    %3003 = vdwg.mxu0
    %v3004 = vadd.f32 %v2898, %v2938
    %v3005 = vxor.u32 %v3004, 2147483648
    %v3006 = vmul.f32 %v3005, 1.442695
    %v3007 = vpow.pop %v3006
    %v3008 = vadd.f32 %v3007, 1.0
    %v3009 = vrcp.pop %v3008
    %v3010 = vmul.f32 %v3008, %v3009
    %v3011 = vsub.f32 1.0, %v3010
    %v3012 = vmul.f32 %v3009, %v3011
    %v3013 = vadd.f32 %v3009, %v3012
    %vm3014 = vweird.f32 %v3008
    %vm3015 = vweird.f32 %v3009
    %vm3016 = vmor %vm3014, %vm3015
    %v3017 = vsel %vm3016, %v3009, %v3013
    %v3018 = vand.u32 2147483647, %v3008
    %vm3019 = vcmp.eq.f32.partialorder %v3018, 8.507059e+37
    %v3020 = vand.u32 %v3008, 2147483648
    %v3021 = vor.u32 1.1754944e-38, %v3020
    %v3022 = vsel %vm3019, %v3021, %v3017
    %v3023 = vmul.f32 1.0, %v3022
    %v3024 = vadd.f32 %v2901, %v2970
    %v3025 = vxor.u32 %v3024, 2147483648
    %v3026 = vmul.f32 %v3025, 1.442695
    %v3027 = vpow.pop %v3026
    %v3028 = vadd.f32 %v3027, 1.0
    %v3029 = vrcp.pop %v3028
    %v3030 = vmul.f32 %v3028, %v3029
    %v3031 = vsub.f32 1.0, %v3030
    %v3032 = vmul.f32 %v3029, %v3031
    %v3033 = vadd.f32 %v3029, %v3032
    %vm3034 = vweird.f32 %v3028
    %vm3035 = vweird.f32 %v3029
    %vm3036 = vmor %vm3034, %vm3035
    %v3037 = vsel %vm3036, %v3029, %v3033
    %v3038 = vand.u32 2147483647, %v3028
    %vm3039 = vcmp.eq.f32.partialorder %v3038, 8.507059e+37
    %v3040 = vand.u32 %v3028, 2147483648
    %v3041 = vor.u32 1.1754944e-38, %v3040
    %v3042 = vsel %vm3039, %v3041, %v3037
    %v3043 = vmul.f32 1.0, %v3042
    %v3044 = vmul.f32 %v3023, %v3002
    %v3045 = vadd.f32 %v2904, %v3044
    %v3046 = vtanh.pop %v3045
    %v3047 = vsub.f32 1.0, %v3043
    %v3048 = vmul.f32 %v3047, %v3046
    %v3049 = vmul.f32 %v3043, %v2893
    %v3050 = vadd.f32 %v3048, %v3049
    %3051 = vst.msk [vmem:[#allocation5 + $0x30] sm:$0xff] %vm347, %v3050
    %3052 = vst.msk [vmem:[#allocation6 + $0x8] sm:$0xff] %vm347, %v3050
    %v3053 = vld [vmem:[#allocation2 + $0x38] sm:$0xff]
    %v3054 = vld [vmem:[#allocation2] sm:$0xff]
    %v3055 = vsel %vm272, %v3053, %v3054
    %v3056 = vld [vmem:[#allocation3 + $0x38] sm:$0xff]
    %v3057 = vld [vmem:[#allocation3] sm:$0xff]
    %v3058 = vsel %vm272, %v3056, %v3057
    %v3059 = vld [vmem:[#allocation4 + $0x38] sm:$0xff]
    %v3060 = vld [vmem:[#allocation4] sm:$0xff]
    %v3061 = vsel %vm272, %v3059, %v3060
    %v3062 = vld [vmem:[%s39] sm:$0xff]
    %v3063 = vld [vmem:[%s39 + $0x8] sm:$0xff]
    %v3064 = vld [vmem:[%s39 + $0x10] sm:$0xff]
    %v3065 = vld [vmem:[%s39 + $0x18] sm:$0xff]
    %v3066 = vld [vmem:[%s39 + $0x20] sm:$0xff]
    %v3067 = vld [vmem:[%s39 + $0x28] sm:$0xff]
    %v3068 = vld [vmem:[%s39 + $0x30] sm:$0xff]
    %v3069 = vld [vmem:[%s39 + $0x38] sm:$0xff]
    %v3070 = vld [vmem:[%s51] sm:$0x1]
    %v3072 = vperm.slane %v3070, 0
    %v3075 = vsel %vm347, %v3050, 0
    %3077 = vmatpush.msra.mxu0 0.0
    %3078 = vmatpush.msra.mxu0 0.0
    %3079 = vmatpush.msra.mxu0 0.0
    %3080 = vmatpush.msra.mxu0 0.0
    %3081 = vmatpush.msra.mxu0 0.0
    %3082 = vmatpush.msra.mxu0 0.0
    %3083 = vmatpush.msra.mxu0 0.0
    %3084 = vmatpush.msra.mxu0 0.0
    %3085 = vmatpush.msra.mxu0 %v3069
    %3086 = vmatpush.msra.mxu0 %v3068
    %3087 = vmatpush.msra.mxu0 %v3067
    %3088 = vmatpush.msra.mxu0 %v3066
    %3089 = vmatpush.msra.mxu0 %v3065
    %3090 = vmatpush.msra.mxu0 %v3064
    %3091 = vmatpush.msra.mxu0 %v3063
    %3092 = vmatpush.msra.mxu0 %v3062
    %3093 = vmatmul.f32.gmra.mxu0 %v3075
    %v3094 = vpop.f32.mrf.mxu0
    %v3095 = vadd.f32 %v3072, %v3094
    %3096 = vdwg.mxu0
    %v3097 = vld [vmem:[%s41] sm:$0xff]
    %v3098 = vld [vmem:[%s41 + $0x8] sm:$0xff]
    %v3099 = vld [vmem:[%s41 + $0x10] sm:$0xff]
    %v3100 = vld [vmem:[%s41 + $0x18] sm:$0xff]
    %v3101 = vld [vmem:[%s41 + $0x20] sm:$0xff]
    %v3102 = vld [vmem:[%s41 + $0x28] sm:$0xff]
    %v3103 = vld [vmem:[%s41 + $0x30] sm:$0xff]
    %v3104 = vld [vmem:[%s41 + $0x38] sm:$0xff]
    %v3105 = vld [vmem:[%s53] sm:$0x1]
    %v3107 = vperm.slane %v3105, 0
    %3109 = vmatpush.msra.mxu0 0.0
    %3110 = vmatpush.msra.mxu0 0.0
    %3111 = vmatpush.msra.mxu0 0.0
    %3112 = vmatpush.msra.mxu0 0.0
    %3113 = vmatpush.msra.mxu0 0.0
    %3114 = vmatpush.msra.mxu0 0.0
    %3115 = vmatpush.msra.mxu0 0.0
    %3116 = vmatpush.msra.mxu0 0.0
    %3117 = vmatpush.msra.mxu0 %v3104
    %3118 = vmatpush.msra.mxu0 %v3103
    %3119 = vmatpush.msra.mxu0 %v3102
    %3120 = vmatpush.msra.mxu0 %v3101
    %3121 = vmatpush.msra.mxu0 %v3100
    %3122 = vmatpush.msra.mxu0 %v3099
    %3123 = vmatpush.msra.mxu0 %v3098
    %3124 = vmatpush.msra.mxu0 %v3097
    %3125 = vmatmul.f32.gmra.mxu0 %v3075
    %v3126 = vpop.f32.mrf.mxu0
    %v3127 = vadd.f32 %v3107, %v3126
    %3128 = vdwg.mxu0
    %v3129 = vld [vmem:[%s43] sm:$0xff]
    %v3130 = vld [vmem:[%s43 + $0x8] sm:$0xff]
    %v3131 = vld [vmem:[%s43 + $0x10] sm:$0xff]
    %v3132 = vld [vmem:[%s43 + $0x18] sm:$0xff]
    %v3133 = vld [vmem:[%s43 + $0x20] sm:$0xff]
    %v3134 = vld [vmem:[%s43 + $0x28] sm:$0xff]
    %v3135 = vld [vmem:[%s43 + $0x30] sm:$0xff]
    %v3136 = vld [vmem:[%s43 + $0x38] sm:$0xff]
    %v3137 = vld [vmem:[%s55] sm:$0x1]
    %v3139 = vperm.slane %v3137, 0
    %3141 = vmatpush.msra.mxu0 0.0
    %3142 = vmatpush.msra.mxu0 0.0
    %3143 = vmatpush.msra.mxu0 0.0
    %3144 = vmatpush.msra.mxu0 0.0
    %3145 = vmatpush.msra.mxu0 0.0
    %3146 = vmatpush.msra.mxu0 0.0
    %3147 = vmatpush.msra.mxu0 0.0
    %3148 = vmatpush.msra.mxu0 0.0
    %3149 = vmatpush.msra.mxu0 %v3136
    %3150 = vmatpush.msra.mxu0 %v3135
    %3151 = vmatpush.msra.mxu0 %v3134
    %3152 = vmatpush.msra.mxu0 %v3133
    %3153 = vmatpush.msra.mxu0 %v3132
    %3154 = vmatpush.msra.mxu0 %v3131
    %3155 = vmatpush.msra.mxu0 %v3130
    %3156 = vmatpush.msra.mxu0 %v3129
    %3157 = vmatmul.f32.gmra.mxu0 %v3075
    %v3158 = vpop.f32.mrf.mxu0
    %v3159 = vadd.f32 %v3139, %v3158
    %3160 = vdwg.mxu0
    %v3161 = vadd.f32 %v3055, %v3095
    %v3162 = vxor.u32 %v3161, 2147483648
    %v3163 = vmul.f32 %v3162, 1.442695
    %v3164 = vpow.pop %v3163
    %v3165 = vadd.f32 %v3164, 1.0
    %v3166 = vrcp.pop %v3165
    %v3167 = vmul.f32 %v3165, %v3166
    %v3168 = vsub.f32 1.0, %v3167
    %v3169 = vmul.f32 %v3166, %v3168
    %v3170 = vadd.f32 %v3166, %v3169
    %vm3171 = vweird.f32 %v3165
    %vm3172 = vweird.f32 %v3166
    %vm3173 = vmor %vm3171, %vm3172
    %v3174 = vsel %vm3173, %v3166, %v3170
    %v3175 = vand.u32 2147483647, %v3165
    %vm3176 = vcmp.eq.f32.partialorder %v3175, 8.507059e+37
    %v3177 = vand.u32 %v3165, 2147483648
    %v3178 = vor.u32 1.1754944e-38, %v3177
    %v3179 = vsel %vm3176, %v3178, %v3174
    %v3180 = vmul.f32 1.0, %v3179
    %v3181 = vadd.f32 %v3058, %v3127
    %v3182 = vxor.u32 %v3181, 2147483648
    %v3183 = vmul.f32 %v3182, 1.442695
    %v3184 = vpow.pop %v3183
    %v3185 = vadd.f32 %v3184, 1.0
    %v3186 = vrcp.pop %v3185
    %v3187 = vmul.f32 %v3185, %v3186
    %v3188 = vsub.f32 1.0, %v3187
    %v3189 = vmul.f32 %v3186, %v3188
    %v3190 = vadd.f32 %v3186, %v3189
    %vm3191 = vweird.f32 %v3185
    %vm3192 = vweird.f32 %v3186
    %vm3193 = vmor %vm3191, %vm3192
    %v3194 = vsel %vm3193, %v3186, %v3190
    %v3195 = vand.u32 2147483647, %v3185
    %vm3196 = vcmp.eq.f32.partialorder %v3195, 8.507059e+37
    %v3197 = vand.u32 %v3185, 2147483648
    %v3198 = vor.u32 1.1754944e-38, %v3197
    %v3199 = vsel %vm3196, %v3198, %v3194
    %v3200 = vmul.f32 1.0, %v3199
    %v3201 = vmul.f32 %v3180, %v3159
    %v3202 = vadd.f32 %v3061, %v3201
    %v3203 = vtanh.pop %v3202
    %v3204 = vsub.f32 1.0, %v3200
    %v3205 = vmul.f32 %v3204, %v3203
    %v3206 = vmul.f32 %v3200, %v3050
    %v3207 = vadd.f32 %v3205, %v3206
    %3208 = vst.msk [vmem:[#allocation5 + $0x38] sm:$0xff] %vm347, %v3207
    %3209 = vst.msk [vmem:[#allocation6] sm:$0xff] %vm347, %v3207
    %v3210 = vld [vmem:[#allocation5] sm:$0xff]
    %v3211 = vld [vmem:[#allocation5 + $0x8] sm:$0xff]
    %v3212 = vld [vmem:[#allocation5 + $0x10] sm:$0xff]
    %v3213 = vld [vmem:[#allocation5 + $0x18] sm:$0xff]
    %v3214 = vld [vmem:[#allocation5 + $0x20] sm:$0xff]
    %v3215 = vld [vmem:[#allocation5 + $0x28] sm:$0xff]
    %v3216 = vld [vmem:[#allocation5 + $0x30] sm:$0xff]
    %v3217 = vld [vmem:[#allocation5 + $0x38] sm:$0xff]
    %v3218 = vld [vmem:[#allocation6] sm:$0xff]
    %v3219 = vld [vmem:[#allocation6 + $0x8] sm:$0xff]
    %v3220 = vld [vmem:[#allocation6 + $0x10] sm:$0xff]
    %v3221 = vld [vmem:[#allocation6 + $0x18] sm:$0xff]
    %v3222 = vld [vmem:[#allocation6 + $0x20] sm:$0xff]
    %v3223 = vld [vmem:[#allocation6 + $0x28] sm:$0xff]
    %v3224 = vld [vmem:[#allocation6 + $0x30] sm:$0xff]
    %v3225 = vld [vmem:[#allocation6 + $0x38] sm:$0xff]
    %v3226 = vsel %vm272, %v3210, %v3218
    %v3227 = vsel %vm272, %v3211, %v3219
    %v3228 = vsel %vm272, %v3212, %v3220
    %v3229 = vsel %vm272, %v3213, %v3221
    %v3230 = vsel %vm272, %v3214, %v3222
    %v3231 = vsel %vm272, %v3215, %v3223
    %v3232 = vsel %vm272, %v3216, %v3224
    %v3233 = vsel %vm272, %v3217, %v3225
    %v3234 = vld [vmem:[%s57] sm:$0xff]
    %v3235 = vld [vmem:[%s57 + $0x8] sm:$0xff]
    %v3236 = vld [vmem:[%s57 + $0x10] sm:$0xff]
    %v3237 = vld [vmem:[%s57 + $0x18] sm:$0xff]
    %v3238 = vld [vmem:[%s57 + $0x20] sm:$0xff]
    %v3239 = vld [vmem:[%s57 + $0x28] sm:$0xff]
    %v3240 = vld [vmem:[%s57 + $0x30] sm:$0xff]
    %v3241 = vld [vmem:[%s57 + $0x38] sm:$0xff]
    %v3242 = vld [vmem:[%s59] sm:$0x1]
    %v3244 = vperm.slane %v3242, 0
    %v3247 = vsel %vm347, %v3226, 0
    %v3250 = vsel %vm347, %v3227, 0
    %v3253 = vsel %vm347, %v3228, 0
    %v3256 = vsel %vm347, %v3229, 0
    %v3259 = vsel %vm347, %v3230, 0
    %v3262 = vsel %vm347, %v3231, 0
    %v3265 = vsel %vm347, %v3232, 0
    %v3268 = vsel %vm347, %v3233, 0
    %3270 = vmatpush.msra.mxu0 0.0
    %3271 = vmatpush.msra.mxu0 0.0
    %3272 = vmatpush.msra.mxu0 0.0
    %3273 = vmatpush.msra.mxu0 0.0
    %3274 = vmatpush.msra.mxu0 0.0
    %3275 = vmatpush.msra.mxu0 0.0
    %3276 = vmatpush.msra.mxu0 0.0
    %3277 = vmatpush.msra.mxu0 0.0
    %3278 = vmatpush.msra.mxu0 %v3241
    %3279 = vmatpush.msra.mxu0 %v3240
    %3280 = vmatpush.msra.mxu0 %v3239
    %3281 = vmatpush.msra.mxu0 %v3238
    %3282 = vmatpush.msra.mxu0 %v3237
    %3283 = vmatpush.msra.mxu0 %v3236
    %3284 = vmatpush.msra.mxu0 %v3235
    %3285 = vmatpush.msra.mxu0 %v3234
    %3286 = vmatmul.f32.gmra.mxu0 %v3247
    %v3287 = vpop.f32.mrf.mxu0
    %v3288 = vadd.f32 %v3244, %v3287
    %3289 = vmatmul.f32.gmra.mxu0 %v3250
    %v3290 = vpop.f32.mrf.mxu0
    %v3291 = vadd.f32 %v3244, %v3290
    %3292 = vmatmul.f32.gmra.mxu0 %v3253
    %v3293 = vpop.f32.mrf.mxu0
    %v3294 = vadd.f32 %v3244, %v3293
    %3295 = vmatmul.f32.gmra.mxu0 %v3256
    %v3296 = vpop.f32.mrf.mxu0
    %v3297 = vadd.f32 %v3244, %v3296
    %3298 = vmatmul.f32.gmra.mxu0 %v3259
    %v3299 = vpop.f32.mrf.mxu0
    %v3300 = vadd.f32 %v3244, %v3299
    %3301 = vmatmul.f32.gmra.mxu0 %v3262
    %v3302 = vpop.f32.mrf.mxu0
    %v3303 = vadd.f32 %v3244, %v3302
    %3304 = vmatmul.f32.gmra.mxu0 %v3265
    %v3305 = vpop.f32.mrf.mxu0
    %v3306 = vadd.f32 %v3244, %v3305
    %3307 = vmatmul.f32.gmra.mxu0 %v3268
    %v3308 = vpop.f32.mrf.mxu0
    %v3309 = vadd.f32 %v3244, %v3308
    %3310 = vdwg.mxu0
    %v3311 = vsub.f32 %v3288, %v127
    %v3312 = vsub.f32 %v3291, %v128
    %v3313 = vsub.f32 %v3294, %v129
    %v3314 = vsub.f32 %v3297, %v130
    %v3315 = vsub.f32 %v3300, %v131
    %v3316 = vsub.f32 %v3303, %v132
    %v3317 = vsub.f32 %v3306, %v133
    %v3318 = vsub.f32 %v3309, %v134
    %v3319 = vmul.f32 %v3311, %v3311
    %v3320 = vmul.f32 %v3312, %v3312
    %v3321 = vmul.f32 %v3313, %v3313
    %v3322 = vmul.f32 %v3314, %v3314
    %v3323 = vmul.f32 %v3315, %v3315
    %v3324 = vmul.f32 %v3316, %v3316
    %v3325 = vmul.f32 %v3317, %v3317
    %v3326 = vmul.f32 %v3318, %v3318
    %3328 = vset.pattern.permute.xlu0 0
    %3329 = vperm.xlu0 %3328, %v135
    %v3330 = vpop.permute.xlu0 %3329
    %3333 = vset.pattern.permute.xlu0 0
    %3334 = vperm.xlu0 %3333, %v136
    %v3335 = vpop.permute.xlu0 %3334
    %3338 = vset.pattern.permute.xlu0 0
    %3339 = vperm.xlu0 %3338, %v137
    %v3340 = vpop.permute.xlu0 %3339
    %3343 = vset.pattern.permute.xlu0 0
    %3344 = vperm.xlu0 %3343, %v138
    %v3345 = vpop.permute.xlu0 %3344
    %3348 = vset.pattern.permute.xlu0 0
    %3349 = vperm.xlu0 %3348, %v139
    %v3350 = vpop.permute.xlu0 %3349
    %3353 = vset.pattern.permute.xlu0 0
    %3354 = vperm.xlu0 %3353, %v140
    %v3355 = vpop.permute.xlu0 %3354
    %3358 = vset.pattern.permute.xlu0 0
    %3359 = vperm.xlu0 %3358, %v141
    %v3360 = vpop.permute.xlu0 %3359
    %3363 = vset.pattern.permute.xlu0 0
    %3364 = vperm.xlu0 %3363, %v142
    %v3365 = vpop.permute.xlu0 %3364
    %v3367 = vmul.f32 %v3319, %v3330
    %v3368 = vmul.f32 %v3320, %v3335
    %v3369 = vmul.f32 %v3321, %v3340
    %v3370 = vmul.f32 %v3322, %v3345
    %v3371 = vmul.f32 %v3323, %v3350
    %v3372 = vmul.f32 %v3324, %v3355
    %v3373 = vmul.f32 %v3325, %v3360
    %v3374 = vmul.f32 %v3326, %v3365
    %v3375 = vsel %vm204, %v3367, 0.0
    %v3376 = vsel %vm204, %v3368, 0.0
    %v3377 = vadd.f32 %v3375, %v3376
    %v3378 = vsel %vm204, %v3369, 0.0
    %v3379 = vadd.f32 %v3377, %v3378
    %v3380 = vsel %vm204, %v3370, 0.0
    %v3381 = vadd.f32 %v3379, %v3380
    %v3382 = vsel %vm204, %v3371, 0.0
    %v3383 = vadd.f32 %v3381, %v3382
    %v3384 = vsel %vm204, %v3372, 0.0
    %v3385 = vadd.f32 %v3383, %v3384
    %v3386 = vsel %vm204, %v3373, 0.0
    %v3387 = vadd.f32 %v3385, %v3386
    %v3388 = vsel %vm204, %v3374, 0.0
    %v3389 = vadd.f32 %v3387, %v3388
    %3390 = vadd.xlane.f32.xlu0 %v3389
    %v3391 = vpop.xlane.xlu0 %3390
    %v3392 = vrot.slane %v3391, 4
    %v3393 = vadd.f32 %v3391, %v3392
    %v3394 = vrot.slane %v3393, 2
    %v3395 = vadd.f32 %v3393, %v3394
    %v3396 = vrot.slane %v3395, 1
    %v3397 = vadd.f32 %v3395, %v3396
    %s3398 = vtos %v3397
    %v3399 = vstv %s3398
    %vm3400 = vcmask 0
    %3401 = vst.msk [vmem:[#allocation7] sm:$0x1] %vm3400, %v3399
    // Predicated region
    $region122: #{patch_detector_gru_forward.1} parent=1 // pred_check
      _
    $region123: #{patch_detector_gru_forward.1} parent=1 // pred_check_branch
      %3403 = sbr.rel (0) target = $region125
    $region124: #{patch_detector_gru_forward.1} parent=1 // pred_region
      %3405 = vsyncadd [#allocation8], 0
      %s3407 = sshll.u32 [#allocation7], 4
      %s3408 = int_to_ptr.vmem [resolvable:$true] %s3407
      %s3409 = sshll.u32 %s61, 4
      %s3410 = int_to_ptr.hbm [resolvable:$true] %s3409
      %3412 = dma.vmem_to_hbm [thread:$0]  %s3408, 16, %s3410, [#allocation8]
    $region125: #{patch_detector_gru_forward.1} parent=1 // pred_fallthru
      _
    // Predicated region
    $region126: #{patch_detector_gru_forward.1} parent=1 // pred_check
      _
    $region127: #{patch_detector_gru_forward.1} parent=1 // pred_check_branch
      %3414 = sbr.rel (0) target = $region129
    $region128: #{patch_detector_gru_forward.1} parent=1 // pred_region
      %3416 = dma.done [#allocation8], 16
    $region129: #{patch_detector_gru_forward.1} parent=1 // pred_fallthru
      _
    %3417 = vsyncpa [#allocation8], 1

</llo_original>
